<compile_context>
chip_gen: v6e
topology: v6e:2x2x1
jax: 0.10.0
libtpu: 0.0.40
codegen_flags: <defaults>
</compile_context>

<pallas_src>
import jax
import jax.numpy as jnp
from jax.experimental import pallas as pl
from jax.experimental.pallas import tpu as pltpu


def _plastic_rnn_kernel(
    x_ref, h_ref, et_ref, pw_ref,                        # batch-tiled blocks
    w_ref, alpha_ref, i2h_w_ref, i2h_b_ref, h2da_w_ref,  # shared weights (VMEM)
    h2da_b_ref, etaet_ref,                               # scalars (SMEM)
    hout_ref, etout_ref, pwout_ref,                      # batch-tiled outputs
):
    x = x_ref[...]                                   # (Bt, I)  f32
    hprev = h_ref[...]                               # (Bt, H)  f32
    et = et_ref[...].astype(jnp.float32)             # (Bt, H, H) f32 math
    pw = pw_ref[...].astype(jnp.float32)             # (Bt, H, H)
    w = w_ref[...]                                   # (H, H)
    alpha = alpha_ref[...]                           # (H, H)
    etaet = etaet_ref[0, 0]                          # scalar (SMEM)
    da_b = h2da_b_ref[0, 0]                          # scalar (SMEM)

    # i2h(inputs): a real (Bt x I) @ (I x H) matmul -> keep it on the MXU.
    i2h = (jnp.dot(x, i2h_w_ref[...], preferred_element_type=jnp.float32)
           + i2h_b_ref[...])                         # (Bt, H)

    # Recurrent term: rec[b,i] = sum_j (w + alpha*pw)[b,i,j] * h[b,j].
    # Degenerate batched mat-vec -> VPU multiply + lane reduce (no 1-row MXU).
    hprev_row = hprev[:, None, :]                                  # (Bt, 1, H)
    w_eff = w[None, :, :] + alpha[None, :, :] * pw                 # (Bt, H, H)
    rec = jnp.sum(w_eff * hprev_row, axis=-1)                      # (Bt, H)

    hact = jnp.tanh(i2h + rec)                                     # (Bt, H)

    # Neuromodulator gate (NBDA == 1): h2DA weight is passed lane-major (1,H),
    # so this is a VPU multiply + lane reduce, already shaped (Bt, 1, 1).
    da = jnp.tanh(jnp.sum(hact[:, None, :] * h2da_w_ref[...],
                          axis=-1, keepdims=True) + da_b)          # (Bt, 1, 1)

    # Hebbian outer product on the VPU (broadcast, not a K=1 MXU matmul).
    deltahebb = hact[:, :, None] * hprev_row                       # (Bt, H, H)

    # pw update uses the OLD eligibility trace (matches the PyTorch order).
    pw_new = jnp.clip(pw + da * et, -1.0, 1.0)                     # (Bt, H, H)
    et_new = (1.0 - etaet) * et + etaet * deltahebb                # (Bt, H, H)

    hout_ref[...] = hact.astype(hout_ref.dtype)
    etout_ref[...] = et_new.astype(etout_ref.dtype)
    pwout_ref[...] = pw_new.astype(pwout_ref.dtype)


def _pick_batch_tile(B, H):
    """Largest batch tile that (a) is a multiple of 8 (full vreg sublanes),
    (b) divides B, (c) keeps the in-kernel f32 working set (~8 live copies of
    the (Bt,H,H) state) under a conservative VMEM budget (v7x has only 64 MiB
    physical VMEM), and (d) leaves >= 2 grid steps when possible so v7x's two
    TensorCores both get a share of the batch."""
    budget = 24 * 1024 * 1024
    cap = max(1, budget // (8 * H * H * 4))
    for prefer_multi_step in (True, False):
        for cand in (128, 64, 32, 16, 8):
            if (cand <= cap and B % cand == 0
                    and (B // cand >= 2 or not prefer_multi_step)):
                return cand
    for cand in range(min(B, cap), 0, -1):
        if B % cand == 0:
            return cand
    return 1


def plastic_rnn_forward(inputs, cache, weights, *, batch_tile=None):
    """One forward step. Returns (activout, valueout, new_cache).

    cache   = (hidden (B,H) f32, hebb (B,H,H), et (B,H,H), pw (B,H,H)).
              et/pw (and hebb) may be bfloat16 in HBM to halve the dominant
              state traffic; all update math runs in f32 inside the kernel.
    weights = (w, alpha, i2h_w, i2h_b, h2o_w, h2o_b, h2v_w, h2v_b,
               h2da_w, h2da_b, etaet); Linear weights are (in, out).
    """
    hidden, hebb, et, pw = cache
    (w, alpha, i2h_w, i2h_b, h2o_w, h2o_b,
     h2v_w, h2v_b, h2da_w, h2da_b, etaet) = weights

    B, I = inputs.shape
    H = hidden.shape[1]
    NBDA = h2da_w.shape[1]
    assert NBDA == 1, "DAout.view(B,1,1) in the reference requires NBDA == 1"
    state_dtype = et.dtype

    Bt = _pick_batch_tile(B, H) if batch_tile is None else batch_tile
    assert B % Bt == 0, (B, Bt)
    grid = (B // Bt,)

    # DA readout weight presented lane-major (1, H); scalars as (1,1) SMEM.
    h2da_w_row = h2da_w.reshape(1, H)
    h2da_b_s = h2da_b.reshape(1, 1).astype(jnp.float32)
    etaet_s = etaet.reshape(1, 1).astype(jnp.float32)

    per_tile_2d = lambda n: pl.BlockSpec((Bt, n), lambda b: (b, 0))
    per_tile_3d = pl.BlockSpec((Bt, H, H), lambda b: (b, 0, 0))
    shared = lambda shape: pl.BlockSpec(shape, lambda b: (0,) * len(shape))
    smem_scalar = pl.BlockSpec(memory_space=pltpu.MemorySpace.SMEM)

    out_shapes = (
        jax.ShapeDtypeStruct((B, H), jnp.float32),      # hidden'
        jax.ShapeDtypeStruct((B, H, H), state_dtype),   # et'
        jax.ShapeDtypeStruct((B, H, H), state_dtype),   # pw'
    )

    hidden_new, et_new, pw_new = pl.pallas_call(
        _plastic_rnn_kernel,
        out_shape=out_shapes,
        grid=grid,
        in_specs=[
            per_tile_2d(I),        # inputs
            per_tile_2d(H),        # hidden
            per_tile_3d,           # et
            per_tile_3d,           # pw
            shared((H, H)),        # w
            shared((H, H)),        # alpha
            shared((I, H)),        # i2h weight
            shared((1, H)),        # i2h bias
            shared((1, H)),        # h2DA weight (lane-major)
            smem_scalar,           # h2DA bias  (1,1) in SMEM
            smem_scalar,           # etaet      (1,1) in SMEM
        ],
        out_specs=[per_tile_2d(H), per_tile_3d, per_tile_3d],
        compiler_params=pltpu.CompilerParams(
            dimension_semantics=("parallel",),
            vmem_limit_bytes=48 * 1024 * 1024),
    )(inputs, hidden, et, pw, w, alpha, i2h_w, i2h_b,
      h2da_w_row, h2da_b_s, etaet_s)

    # Tiny readouts (O and 1 output lanes) stay in plain XLA on the new hidden
    # state; in-kernel they would be sub-128-lane masked-store output streams.
    activout = hidden_new @ h2o_w + h2o_b
    valueout = hidden_new @ h2v_w + h2v_b

    new_cache = (hidden_new, hebb, et_new, pw_new)
    return activout, valueout, new_cache


def reference_forward(inputs, cache, weights):
    """Pure-JAX reference mirroring the PyTorch forward semantics (f32 math)."""
    hidden, hebb, et, pw = cache
    hidden = hidden.astype(jnp.float32)
    et = et.astype(jnp.float32)
    pw = pw.astype(jnp.float32)
    (w, alpha, i2h_w, i2h_b, h2o_w, h2o_b,
     h2v_w, h2v_b, h2da_w, h2da_b, etaet) = weights
    i2h = inputs @ i2h_w + i2h_b
    w_eff = w[None] + alpha[None] * pw
    rec = jnp.einsum("bij,bj->bi", w_eff, hidden)
    hact = jnp.tanh(i2h + rec)
    activout = hact @ h2o_w + h2o_b
    valueout = hact @ h2v_w + h2v_b
    da = jnp.tanh(hact @ h2da_w + h2da_b)
    deltahebb = jnp.einsum("bi,bj->bij", hact, hidden)
    pw_new = jnp.clip(pw + da[:, 0][:, None, None] * et, -1.0, 1.0)
    e = etaet[0, 0]
    et_new = (1.0 - e) * et + e * deltahebb
    return activout, valueout, (hact, hebb, et_new, pw_new)


def _linear_init(key, fan_in, fan_out):
    """PyTorch-style default Linear init: U(-1/sqrt(fan_in), 1/sqrt(fan_in))."""
    kw, kb = jax.random.split(key)
    bound = 1.0 / jnp.sqrt(fan_in)
    w = jax.random.uniform(kw, (fan_in, fan_out), jnp.float32, -bound, bound)
    b = jax.random.uniform(kb, (1, fan_out), jnp.float32, -bound, bound)
    return w, b


if __name__ == "__main__":
    # Small deterministic config.  H is a multiple of 128 so the dominant
    # (Bt, H, H) state blocks are lane-dense (full vregs, unmasked stores);
    # for the module default H=500, pad the plastic state to 512.
    B, I, H, O, NBDA = 16, 8, 128, 4, 1

    key = jax.random.PRNGKey(0)
    keys = jax.random.split(key, 12)

    # Module parameters (shapes match the PyTorch __init__).
    w_param = 0.01 * jax.random.uniform(keys[0], (H, H), jnp.float32).T
    alpha_param = 0.01 * jax.random.uniform(keys[1], (H, H), jnp.float32).T
    etaet = 0.1 * jnp.ones((1, 1), jnp.float32)   # self.etaet (self.eta unused in forward)
    i2h_w, i2h_b = _linear_init(keys[2], I, H)
    h2da_w, h2da_b = _linear_init(keys[3], H, NBDA)
    h2o_w, h2o_b = _linear_init(keys[4], H, O)
    h2v_w, h2v_b = _linear_init(keys[5], H, 1)
    weights = (w_param, alpha_param, i2h_w, i2h_b, h2o_w, h2o_b,
               h2v_w, h2v_b, h2da_w, h2da_b, etaet)

    # Example inputs and cache.  The plastic state lives in bfloat16 in HBM
    # (the kernel is HBM-bound on these streams); hidden stays float32.
    state_dtype = jnp.bfloat16
    inputs = jax.random.normal(keys[6], (B, I), jnp.float32)
    hidden0 = 0.5 * jax.random.normal(keys[7], (B, H), jnp.float32)
    hebb0 = jnp.zeros((B, H, H), state_dtype)
    et0 = (0.2 * jax.random.normal(keys[8], (B, H, H), jnp.float32)).astype(state_dtype)
    pw0 = (0.5 * jax.random.uniform(keys[9], (B, H, H), jnp.float32, -1.0, 1.0)
           ).astype(state_dtype)
    cache = (hidden0, hebb0, et0, pw0)

    activout, valueout, new_cache = plastic_rnn_forward(inputs, cache, weights)
    jax.block_until_ready((activout, valueout, new_cache))

    # Correctness check against the pure-JAX reference (f32 math on the same
    # bf16-stored state; the final bf16 rounding of et'/pw' is within 1e-2).
    r_act, r_val, r_cache = reference_forward(inputs, cache, weights)
    assert jnp.allclose(activout, r_act, rtol=1e-2, atol=1e-2)
    assert jnp.allclose(valueout, r_val, rtol=1e-2, atol=1e-2)
    assert jnp.allclose(new_cache[0], r_cache[0], rtol=1e-2, atol=1e-2)   # hidden
    assert jnp.allclose(new_cache[2].astype(jnp.float32), r_cache[2],
                        rtol=1e-2, atol=1e-2)                             # et
    assert jnp.allclose(new_cache[3].astype(jnp.float32), r_cache[3],
                        rtol=1e-2, atol=1e-2)                             # pw

    print("KERNEL_OK")
</pallas_src>

<mosaic_0001>
module attributes {stable_mosaic.version = 11 : i64} {
  func.func @_plastic_rnn_kernel(%arg0: i32, %arg1: memref<8x8xf32, #tpu.memory_space<vmem>>, %arg2: memref<8x128xf32, #tpu.memory_space<vmem>>, %arg3: memref<8x128x128xbf16, #tpu.memory_space<vmem>>, %arg4: memref<8x128x128xbf16, #tpu.memory_space<vmem>>, %arg5: memref<128x128xf32, #tpu.memory_space<vmem>>, %arg6: memref<128x128xf32, #tpu.memory_space<vmem>>, %arg7: memref<8x128xf32, #tpu.memory_space<vmem>>, %arg8: memref<1x128xf32, #tpu.memory_space<vmem>>, %arg9: memref<1x128xf32, #tpu.memory_space<vmem>>, %arg10: memref<1x1xf32, #tpu.memory_space<smem>>, %arg11: memref<1x1xf32, #tpu.memory_space<smem>>, %arg12: memref<8x128xf32, #tpu.memory_space<vmem>>, %arg13: memref<8x128x128xbf16, #tpu.memory_space<vmem>>, %arg14: memref<8x128x128xbf16, #tpu.memory_space<vmem>>) attributes {dimension_semantics = [#tpu.dimension_semantics<parallel>], iteration_bounds = array<i64: 2>, scalar_prefetch = 0 : i64, scratch_operands = 0 : i64, tpu.core_type = #tpu.core_type<tc>, window_params = [{transform_indices = @transform_0, window_bounds = array<i64: 8, 8>}, {transform_indices = @transform_1, window_bounds = array<i64: 8, 128>}, {transform_indices = @transform_2, window_bounds = array<i64: 8, 128, 128>}, {transform_indices = @transform_3, window_bounds = array<i64: 8, 128, 128>}, {pipeline_mode = #tpu.pipeline_mode<synchronous>, transform_indices = @transform_4, window_bounds = array<i64: 128, 128>}, {pipeline_mode = #tpu.pipeline_mode<synchronous>, transform_indices = @transform_5, window_bounds = array<i64: 128, 128>}, {pipeline_mode = #tpu.pipeline_mode<synchronous>, transform_indices = @transform_6, window_bounds = array<i64: 8, 128>}, {pipeline_mode = #tpu.pipeline_mode<synchronous>, transform_indices = @transform_7, window_bounds = array<i64: 1, 128>}, {pipeline_mode = #tpu.pipeline_mode<synchronous>, transform_indices = @transform_8, window_bounds = array<i64: 1, 128>}, {transform_indices = @transform_9, window_bounds = array<i64: 1, 1>}, {transform_indices = @transform_10, window_bounds = array<i64: 1, 1>}, {transform_indices = @transform_11, window_bounds = array<i64: 8, 128>}, {transform_indices = @transform_12, window_bounds = array<i64: 8, 128, 128>}, {transform_indices = @transform_13, window_bounds = array<i64: 8, 128, 128>}]} {
    %c0 = arith.constant 0 : index
    %c0_0 = arith.constant 0 : index
    %0 = vector.load %arg1[%c0, %c0_0] : memref<8x8xf32, #tpu.memory_space<vmem>>, vector<8x8xf32>
    %c0_1 = arith.constant 0 : index
    %c0_2 = arith.constant 0 : index
    %1 = vector.load %arg2[%c0_1, %c0_2] : memref<8x128xf32, #tpu.memory_space<vmem>>, vector<8x128xf32>
    %c0_3 = arith.constant 0 : index
    %c0_4 = arith.constant 0 : index
    %c0_5 = arith.constant 0 : index
    %2 = vector.load %arg3[%c0_3, %c0_4, %c0_5] : memref<8x128x128xbf16, #tpu.memory_space<vmem>>, vector<8x128x128xbf16>
    %3 = arith.extf %2 : vector<8x128x128xbf16> to vector<8x128x128xf32>
    %c0_6 = arith.constant 0 : index
    %c0_7 = arith.constant 0 : index
    %c0_8 = arith.constant 0 : index
    %4 = vector.load %arg4[%c0_6, %c0_7, %c0_8] : memref<8x128x128xbf16, #tpu.memory_space<vmem>>, vector<8x128x128xbf16>
    %5 = arith.extf %4 : vector<8x128x128xbf16> to vector<8x128x128xf32>
    %c0_9 = arith.constant 0 : index
    %c0_10 = arith.constant 0 : index
    %6 = vector.load %arg5[%c0_9, %c0_10] : memref<128x128xf32, #tpu.memory_space<vmem>>, vector<128x128xf32>
    %c0_11 = arith.constant 0 : index
    %c0_12 = arith.constant 0 : index
    %7 = vector.load %arg6[%c0_11, %c0_12] : memref<128x128xf32, #tpu.memory_space<vmem>>, vector<128x128xf32>
    %c0_13 = arith.constant 0 : index
    %c0_14 = arith.constant 0 : index
    %8 = memref.load %arg11[%c0_13, %c0_14] : memref<1x1xf32, #tpu.memory_space<smem>>
    %c0_15 = arith.constant 0 : index
    %c0_16 = arith.constant 0 : index
    %9 = memref.load %arg10[%c0_15, %c0_16] : memref<1x1xf32, #tpu.memory_space<smem>>
    %c0_17 = arith.constant 0 : index
    %c0_18 = arith.constant 0 : index
    %10 = vector.load %arg7[%c0_17, %c0_18] : memref<8x128xf32, #tpu.memory_space<vmem>>, vector<8x128xf32>
    %cst = arith.constant dense<0.000000e+00> : vector<8x128xf32>
    %11 = tpu.matmul %0, %10, %cst {dimension_numbers = #tpu.dot_dimension_numbers<[1], [0], [0], [1], [0, 0, 1, 1], [], []>} : vector<8x8xf32>, vector<8x128xf32>, vector<8x128xf32> -> vector<8x128xf32>
    %c0_19 = arith.constant 0 : index
    %c0_20 = arith.constant 0 : index
    %12 = vector.load %arg8[%c0_19, %c0_20] : memref<1x128xf32, #tpu.memory_space<vmem>>, vector<1x128xf32>
    %13 = vector.broadcast %12 : vector<1x128xf32> to vector<8x128xf32>
    %14 = arith.addf %11, %13 : vector<8x128xf32>
    %15 = vector.shape_cast %1 : vector<8x128xf32> to vector<8x1x128xf32>
    %16 = vector.shape_cast %6 : vector<128x128xf32> to vector<1x128x128xf32>
    %17 = vector.shape_cast %7 : vector<128x128xf32> to vector<1x128x128xf32>
    %18 = vector.broadcast %17 : vector<1x128x128xf32> to vector<8x128x128xf32>
    %19 = arith.mulf %18, %5 : vector<8x128x128xf32>
    %20 = vector.broadcast %16 : vector<1x128x128xf32> to vector<8x128x128xf32>
    %21 = arith.addf %20, %19 : vector<8x128x128xf32>
    %22 = vector.broadcast %15 : vector<8x1x128xf32> to vector<8x128x128xf32>
    %23 = arith.mulf %21, %22 : vector<8x128x128xf32>
    %cst_21 = arith.constant dense<0.000000e+00> : vector<8x128xf32>
    %24 = vector.multi_reduction <add>, %23, %cst_21 [2] : vector<8x128x128xf32> to vector<8x128xf32>
    %25 = arith.addf %14, %24 : vector<8x128xf32>
    %26 = math.tanh %25 : vector<8x128xf32>
    %27 = vector.shape_cast %26 : vector<8x128xf32> to vector<8x1x128xf32>
    %c0_22 = arith.constant 0 : index
    %c0_23 = arith.constant 0 : index
    %28 = vector.load %arg9[%c0_22, %c0_23] : memref<1x128xf32, #tpu.memory_space<vmem>>, vector<1x128xf32>
    %29 = vector.shape_cast %28 : vector<1x128xf32> to vector<1x1x128xf32>
    %30 = vector.broadcast %29 : vector<1x1x128xf32> to vector<8x1x128xf32>
    %31 = arith.mulf %27, %30 : vector<8x1x128xf32>
    %cst_24 = arith.constant dense<0.000000e+00> : vector<8x1xf32>
    %32 = vector.multi_reduction <add>, %31, %cst_24 [2] : vector<8x1x128xf32> to vector<8x1xf32>
    %33 = vector.shape_cast %32 : vector<8x1xf32> to vector<8x1x1xf32>
    %34 = vector.broadcast %9 : f32 to vector<8x1x1xf32>
    %35 = arith.addf %33, %34 : vector<8x1x1xf32>
    %36 = math.tanh %35 : vector<8x1x1xf32>
    %37 = vector.shape_cast %26 : vector<8x128xf32> to vector<8x128x1xf32>
    %38 = vector.broadcast %37 : vector<8x128x1xf32> to vector<8x128x128xf32>
    %39 = vector.broadcast %15 : vector<8x1x128xf32> to vector<8x128x128xf32>
    %40 = arith.mulf %38, %39 : vector<8x128x128xf32>
    %41 = vector.broadcast %36 : vector<8x1x1xf32> to vector<8x128x128xf32>
    %42 = arith.mulf %41, %3 : vector<8x128x128xf32>
    %43 = arith.addf %5, %42 : vector<8x128x128xf32>
    %cst_25 = arith.constant -1.000000e+00 : f32
    %cst_26 = arith.constant 1.000000e+00 : f32
    %44 = vector.broadcast %cst_25 : f32 to vector<8x128x128xf32>
    %45 = arith.maximumf %44, %43 : vector<8x128x128xf32>
    %46 = vector.broadcast %cst_26 : f32 to vector<8x128x128xf32>
    %47 = arith.minimumf %46, %45 : vector<8x128x128xf32>
    %cst_27 = arith.constant 1.000000e+00 : f32
    %48 = arith.subf %cst_27, %8 : f32
    %49 = vector.broadcast %48 : f32 to vector<8x128x128xf32>
    %50 = arith.mulf %49, %3 : vector<8x128x128xf32>
    %51 = vector.broadcast %8 : f32 to vector<8x128x128xf32>
    %52 = arith.mulf %51, %40 : vector<8x128x128xf32>
    %53 = arith.addf %50, %52 : vector<8x128x128xf32>
    %c0_28 = arith.constant 0 : index
    %c0_29 = arith.constant 0 : index
    %54 = vector.load %arg12[%c0_28, %c0_29] : memref<8x128xf32, #tpu.memory_space<vmem>>, vector<8x128xf32>
    tpu.vector_store %arg12[%c0_28, %c0_29], %26 {strides = array<i32>} : memref<8x128xf32, #tpu.memory_space<vmem>>, vector<8x128xf32>,
    %55 = arith.truncf %53 : vector<8x128x128xf32> to vector<8x128x128xbf16>
    %c0_30 = arith.constant 0 : index
    %c0_31 = arith.constant 0 : index
    %c0_32 = arith.constant 0 : index
    %56 = vector.load %arg13[%c0_30, %c0_31, %c0_32] : memref<8x128x128xbf16, #tpu.memory_space<vmem>>, vector<8x128x128xbf16>
    tpu.vector_store %arg13[%c0_30, %c0_31, %c0_32], %55 {strides = array<i32>} : memref<8x128x128xbf16, #tpu.memory_space<vmem>>, vector<8x128x128xbf16>,
    %57 = arith.truncf %47 : vector<8x128x128xf32> to vector<8x128x128xbf16>
    %c0_33 = arith.constant 0 : index
    %c0_34 = arith.constant 0 : index
    %c0_35 = arith.constant 0 : index
    %58 = vector.load %arg14[%c0_33, %c0_34, %c0_35] : memref<8x128x128xbf16, #tpu.memory_space<vmem>>, vector<8x128x128xbf16>
    tpu.vector_store %arg14[%c0_33, %c0_34, %c0_35], %57 {strides = array<i32>} : memref<8x128x128xbf16, #tpu.memory_space<vmem>>, vector<8x128x128xbf16>,
    return
  }
  func.func @transform_0(%arg0: i32) -> (i32, i32) {
    %c0_i32 = arith.constant 0 : i32
    %c0_i32_0 = arith.constant 0 : i32
    return %arg0, %c0_i32 : i32, i32
  }
  func.func @transform_1(%arg0: i32) -> (i32, i32) {
    %c0_i32 = arith.constant 0 : i32
    %c0_i32_0 = arith.constant 0 : i32
    return %arg0, %c0_i32 : i32, i32
  }
  func.func @transform_2(%arg0: i32) -> (i32, i32, i32) {
    %c0_i32 = arith.constant 0 : i32
    %c0_i32_0 = arith.constant 0 : i32
    %c0_i32_1 = arith.constant 0 : i32
    return %arg0, %c0_i32, %c0_i32_0 : i32, i32, i32
  }
  func.func @transform_3(%arg0: i32) -> (i32, i32, i32) {
    %c0_i32 = arith.constant 0 : i32
    %c0_i32_0 = arith.constant 0 : i32
    %c0_i32_1 = arith.constant 0 : i32
    return %arg0, %c0_i32, %c0_i32_0 : i32, i32, i32
  }
  func.func @transform_4(%arg0: i32) -> (i32, i32) {
    %c0_i32 = arith.constant 0 : i32
    %c0_i32_0 = arith.constant 0 : i32
    %c0_i32_1 = arith.constant 0 : i32
    return %c0_i32, %c0_i32_0 : i32, i32
  }
  func.func @transform_5(%arg0: i32) -> (i32, i32) {
    %c0_i32 = arith.constant 0 : i32
    %c0_i32_0 = arith.constant 0 : i32
    %c0_i32_1 = arith.constant 0 : i32
    return %c0_i32, %c0_i32_0 : i32, i32
  }
  func.func @transform_6(%arg0: i32) -> (i32, i32) {
    %c0_i32 = arith.constant 0 : i32
    %c0_i32_0 = arith.constant 0 : i32
    %c0_i32_1 = arith.constant 0 : i32
    return %c0_i32, %c0_i32_0 : i32, i32
  }
  func.func @transform_7(%arg0: i32) -> (i32, i32) {
    %c0_i32 = arith.constant 0 : i32
    %c0_i32_0 = arith.constant 0 : i32
    %c0_i32_1 = arith.constant 0 : i32
    return %c0_i32, %c0_i32_0 : i32, i32
  }
  func.func @transform_8(%arg0: i32) -> (i32, i32) {
    %c0_i32 = arith.constant 0 : i32
    %c0_i32_0 = arith.constant 0 : i32
    %c0_i32_1 = arith.constant 0 : i32
    return %c0_i32, %c0_i32_0 : i32, i32
  }
  func.func @transform_9(%arg0: i32) -> (i32, i32) {
    %c0_i32 = arith.constant 0 : i32
    %c0_i32_0 = arith.constant 0 : i32
    %c0_i32_1 = arith.constant 0 : i32
    return %c0_i32, %c0_i32_0 : i32, i32
  }
  func.func @transform_10(%arg0: i32) -> (i32, i32) {
    %c0_i32 = arith.constant 0 : i32
    %c0_i32_0 = arith.constant 0 : i32
    %c0_i32_1 = arith.constant 0 : i32
    return %c0_i32, %c0_i32_0 : i32, i32
  }
  func.func @transform_11(%arg0: i32) -> (i32, i32) {
    %c0_i32 = arith.constant 0 : i32
    %c0_i32_0 = arith.constant 0 : i32
    return %arg0, %c0_i32 : i32, i32
  }
  func.func @transform_12(%arg0: i32) -> (i32, i32, i32) {
    %c0_i32 = arith.constant 0 : i32
    %c0_i32_0 = arith.constant 0 : i32
    %c0_i32_1 = arith.constant 0 : i32
    return %arg0, %c0_i32, %c0_i32_0 : i32, i32, i32
  }
  func.func @transform_13(%arg0: i32) -> (i32, i32, i32) {
    %c0_i32 = arith.constant 0 : i32
    %c0_i32_0 = arith.constant 0 : i32
    %c0_i32_1 = arith.constant 0 : i32
    return %arg0, %c0_i32, %c0_i32_0 : i32, i32, i32
  }
}

</mosaic_0001>

<llo_original>
// kernel: tpu_custom_call.1
$region0: #{tpu_custom_call.1}
  #allocation0 [shape = 'u32[]', space=smem, size = 0x4, offset = 0x4, fixed_abs, tag = 'smem constant byte address 0x4 - core index']
  #allocation1 [shape = 'u32[144,128]{1,0:T(1,128)}', space=vmem, size = 0x12000, scoped, tag = 'internal scratch']
  #allocation2 [shape = 'f32[1,1]{1,0:T(1,128)S(6)}', space=smem, size = 0x200, scoped, tag = 'scoped memory for tpu_custom_call.1']
  #allocation3 [shape = 'f32[1,1]{1,0:T(1,128)S(6)}', space=smem, size = 0x200, scoped, tag = 'scoped memory for tpu_custom_call.1']
  %s0 = inlined_call_operand.vmem [shape: f32[16,8], index: 0, kind: input, shape index: {}]
  %s1 = inlined_call_operand.vmem [shape: f32[16,128], index: 1, kind: input, shape index: {}]
  %s2 = inlined_call_operand.hbm [shape: bf16[16,128,128], index: 2, kind: input, shape index: {}]
  %s3 = inlined_call_operand.hbm [shape: bf16[16,128,128], index: 3, kind: input, shape index: {}]
  %s4 = inlined_call_operand.hbm [shape: f32[128,128], index: 4, kind: input, shape index: {}]
  %s5 = inlined_call_operand.hbm [shape: f32[128,128], index: 5, kind: input, shape index: {}]
  %s6 = inlined_call_operand.vmem [shape: f32[8,128], index: 6, kind: input, shape index: {}]
  %s7 = inlined_call_operand.vmem [shape: f32[1,128], index: 7, kind: input, shape index: {}]
  %s8 = inlined_call_operand.vmem [shape: f32[1,128], index: 8, kind: input, shape index: {}]
  %s9 = inlined_call_operand.<no memory space> [shape: f32[1,1], index: 9, kind: input, shape index: {}]
  %s10 = inlined_call_operand.<no memory space> [shape: f32[1,1], index: 10, kind: input, shape index: {}]
  %s11 = inlined_call_operand.hbm [shape: f32[16,128], index: 11, kind: output, shape index: {0}]
  %s12 = inlined_call_operand.hbm [shape: bf16[16,128,128], index: 12, kind: output, shape index: {1}]
  %s13 = inlined_call_operand.hbm [shape: bf16[16,128,128], index: 13, kind: output, shape index: {2}]
  %14 = xla_tuple %s11, %s12, %s13
  %s15 = sld [smem:[#allocation0]]
  $region109: #{tpu_custom_call.1} parent=0
    _
  %s17 = ssub.s32 1, %s15
  %s18 = scalar_select 0, %s17, %s15
  %19 = sst [smem:[#allocation2]] %s9
  %20 = sst [smem:[#allocation3]] %s10
  $region1: #{tpu_custom_call.1} parent=0
    #allocation4 [shape = 'u8[524288]{0}', space=vmem, size = 0x80000, scoped, tag = 'input window, operand 2']
    #allocation5 [shape = 's32[2]{0}', space=sflag, size = 0x8, scoped, tag = 'scoped memory for tpu_custom_call.1']
    #allocation6 [shape = 's32[2]{0}', space=sflag, size = 0x8, scoped, tag = 'scoped memory for tpu_custom_call.1']
    #allocation7 [shape = 'u8[524288]{0}', space=vmem, size = 0x80000, scoped, tag = 'input window, operand 3']
    #allocation8 [shape = 's32[2]{0}', space=sflag, size = 0x8, scoped, tag = 'scoped memory for tpu_custom_call.1']
    #allocation9 [shape = 'u8[65536]{0}', space=vmem, size = 0x10000, scoped, tag = 'input window, operand 4, single buffered']
    #allocation10 [shape = 'u8[65536]{0}', space=vmem, size = 0x10000, scoped, tag = 'input window, operand 5, single buffered']
    #allocation11 [shape = 's32[1]{0}', space=sflag, size = 0x4, scoped, tag = 'scoped memory for tpu_custom_call.1']
    #allocation12 [shape = 'u8[8192]{0}', space=vmem, size = 0x2000, scoped, tag = 'output window, operand 0']
    #allocation13 [shape = 'u8[524288]{0}', space=vmem, size = 0x80000, scoped, tag = 'output window, operand 1']
    #allocation14 [shape = 's32[2]{0}', space=sflag, size = 0x8, scoped, tag = 'scoped memory for tpu_custom_call.1']
    #allocation15 [shape = 'u8[524288]{0}', space=vmem, size = 0x80000, scoped, tag = 'output window, operand 2']
    %21 = vsyncpa [#allocation5], 0
    %s22 = scalar_lea.sflag [#allocation5], 1
    %23 = vsyncpa %s22, 0
    %24 = vsyncpa [#allocation8], 0
    %s25 = scalar_lea.sflag [#allocation8], 1
    %26 = vsyncpa %s25, 0
    %27 = vsyncpa [#allocation11], 0
    %28 = vsyncpa [#allocation6], 0
    %s29 = scalar_lea.sflag [#allocation6], 1
    %30 = vsyncpa %s29, 0
    %31 = vsyncpa [#allocation14], 0
    %s32 = scalar_lea.sflag [#allocation14], 1
    %33 = vsyncpa %s32, 0
    loop: start=0, step=1, limit=4
    $region2: #{tpu_custom_call.1} parent=1 // loop_pre_header
      _
    $region3: #{tpu_custom_call.1} parent=1 // loop_header
      %s35 = sphi 0, %s39
      %p36 = scmp.ge.s32.totalorder %s35, 4
      %s45 = sphi 0, %s47
      %s48 = sphi 0, %s45
      %s49 = sphi 0, %s48
      %s65 = sphi 0, %s49
      %s71 = sphi 0, %s73
      %s74 = sphi 0, %s71
      %s75 = sphi 0, %s74
      %s91 = sphi 0, %s75
      %s97 = sphi 0, %s99
      %s100 = sphi 0, %s97
      %s101 = sphi 0, %s100
      %s117 = sphi 0, %s101
      %s123 = sphi 0, %s125
      %s126 = sphi 0, %s123
      %s127 = sphi 0, %s126
      %s143 = sphi 0, %s127
      %s147 = sphi 0, %s147
      %s149 = sphi 0, %s147
      %s150 = sphi 0, %s149
      %s164 = sphi 0, %s150
      %s168 = sphi 0, %s168
      %s170 = sphi 0, %s168
      %s171 = sphi 0, %s170
      %s185 = sphi 0, %s171
      %s189 = sphi 0, %s189
      %s191 = sphi 0, %s189
      %s192 = sphi 0, %s191
      %s206 = sphi 0, %s192
      %s210 = sphi 0, %s210
      %s212 = sphi 0, %s210
      %s213 = sphi 0, %s212
      %s227 = sphi 0, %s213
      %s231 = sphi 0, %s231
      %s233 = sphi 0, %s231
      %s234 = sphi 0, %s233
      %s248 = sphi 0, %s234
      %s252 = sphi 0, %s252
      %s254 = sphi 0, %s252
      %s255 = sphi 0, %s254
      %s269 = sphi 0, %s255
      %s273 = sphi 0, %s273
      %s275 = sphi 0, %s273
      %s276 = sphi 0, %s275
      %s290 = sphi 0, %s276
      %s296 = sphi 0, %s298
      %s299 = sphi 0, %s296
      %s300 = sphi 0, %s299
      %s316 = sphi 0, %s300
      %s322 = sphi 0, %s324
      %s325 = sphi 0, %s322
      %s326 = sphi 0, %s325
      %s342 = sphi 0, %s326
      %s348 = sphi 0, %s350
      %s351 = sphi 0, %s348
      %s352 = sphi 0, %s351
      %s368 = sphi 0, %s352
    $region4: #{tpu_custom_call.1} parent=1 // loop_header_branch
      %38 = sbr.rel (%p36) target = $region8
    $region5: #{tpu_custom_call.1} parent=1 // loop_body
      %s40 = ssub.s32 %s35, 1
      %s41 = ssub.s32 %s35, 2
      %s42 = sadd.s32 %s35, 1
      %s43 = ssub.s32 %s35, %s42
      %p44 = scmp.eq.s32.totalorder %s43, 0
      %s46 = sadd.s32 %s45, 1
      %s47 = scalar_select %p44, %s45, %s46
      %p50 = pneg %p44
      %p51 = scmp.eq.s32.totalorder %s35, 1
      %p52 = por %p50, %p51
      %p53 = scmp.ne.s32.totalorder %s45, %s48
      %p54 = scmp.eq.s32.totalorder %s35, 0
      %p55 = por %p53, %p54
      %p56 = scmp.ne.s32.totalorder %s45, %s48
      %p57 = scmp.eq.s32.totalorder %s40, 1
      %p58 = por %p56, %p57
      %p59 = scmp.ne.s32.totalorder %s48, %s49
      %p60 = scmp.eq.s32.totalorder %s40, 0
      %p61 = por %p59, %p60
      %p62 = scmp.ne.s32.totalorder %s48, %s49
      %p63 = scmp.eq.s32.totalorder %s41, 1
      %p64 = por %p62, %p63
      %p66 = scmp.ne.s32.totalorder %s49, %s65
      %p67 = scmp.eq.s32.totalorder %s41, 0
      %p68 = por %p66, %p67
      %s69 = ssub.s32 %s35, %s42
      %p70 = scmp.eq.s32.totalorder %s69, 0
      %s72 = sadd.s32 %s71, 1
      %s73 = scalar_select %p70, %s71, %s72
      %p76 = pneg %p70
      %p77 = scmp.eq.s32.totalorder %s35, 1
      %p78 = por %p76, %p77
      %p79 = scmp.ne.s32.totalorder %s71, %s74
      %p80 = scmp.eq.s32.totalorder %s35, 0
      %p81 = por %p79, %p80
      %p82 = scmp.ne.s32.totalorder %s71, %s74
      %p83 = scmp.eq.s32.totalorder %s40, 1
      %p84 = por %p82, %p83
      %p85 = scmp.ne.s32.totalorder %s74, %s75
      %p86 = scmp.eq.s32.totalorder %s40, 0
      %p87 = por %p85, %p86
      %p88 = scmp.ne.s32.totalorder %s74, %s75
      %p89 = scmp.eq.s32.totalorder %s41, 1
      %p90 = por %p88, %p89
      %p92 = scmp.ne.s32.totalorder %s75, %s91
      %p93 = scmp.eq.s32.totalorder %s41, 0
      %p94 = por %p92, %p93
      %s95 = ssub.s32 %s35, %s42
      %p96 = scmp.eq.s32.totalorder %s95, 0
      %s98 = sadd.s32 %s97, 1
      %s99 = scalar_select %p96, %s97, %s98
      %p102 = pneg %p96
      %p103 = scmp.eq.s32.totalorder %s35, 1
      %p104 = por %p102, %p103
      %p105 = scmp.ne.s32.totalorder %s97, %s100
      %p106 = scmp.eq.s32.totalorder %s35, 0
      %p107 = por %p105, %p106
      %p108 = scmp.ne.s32.totalorder %s97, %s100
      %p109 = scmp.eq.s32.totalorder %s40, 1
      %p110 = por %p108, %p109
      %p111 = scmp.ne.s32.totalorder %s100, %s101
      %p112 = scmp.eq.s32.totalorder %s40, 0
      %p113 = por %p111, %p112
      %p114 = scmp.ne.s32.totalorder %s100, %s101
      %p115 = scmp.eq.s32.totalorder %s41, 1
      %p116 = por %p114, %p115
      %p118 = scmp.ne.s32.totalorder %s101, %s117
      %p119 = scmp.eq.s32.totalorder %s41, 0
      %p120 = por %p118, %p119
      %s121 = ssub.s32 %s35, %s42
      %p122 = scmp.eq.s32.totalorder %s121, 0
      %s124 = sadd.s32 %s123, 1
      %s125 = scalar_select %p122, %s123, %s124
      %p128 = pneg %p122
      %p129 = scmp.eq.s32.totalorder %s35, 1
      %p130 = por %p128, %p129
      %p131 = scmp.ne.s32.totalorder %s123, %s126
      %p132 = scmp.eq.s32.totalorder %s35, 0
      %p133 = por %p131, %p132
      %p134 = scmp.ne.s32.totalorder %s123, %s126
      %p135 = scmp.eq.s32.totalorder %s40, 1
      %p136 = por %p134, %p135
      %p137 = scmp.ne.s32.totalorder %s126, %s127
      %p138 = scmp.eq.s32.totalorder %s40, 0
      %p139 = por %p137, %p138
      %p140 = scmp.ne.s32.totalorder %s126, %s127
      %p141 = scmp.eq.s32.totalorder %s41, 1
      %p142 = por %p140, %p141
      %p144 = scmp.ne.s32.totalorder %s127, %s143
      %p145 = scmp.eq.s32.totalorder %s41, 0
      %p146 = por %p144, %p145
      %s148 = sadd.s32 %s147, 1
      %p151 = scmp.eq.s32.totalorder %s35, 1
      %p152 = scmp.ne.s32.totalorder %s147, %s149
      %p153 = scmp.eq.s32.totalorder %s35, 0
      %p154 = por %p152, %p153
      %p155 = scmp.ne.s32.totalorder %s147, %s149
      %p156 = scmp.eq.s32.totalorder %s40, 1
      %p157 = por %p155, %p156
      %p158 = scmp.ne.s32.totalorder %s149, %s150
      %p159 = scmp.eq.s32.totalorder %s40, 0
      %p160 = por %p158, %p159
      %p161 = scmp.ne.s32.totalorder %s149, %s150
      %p162 = scmp.eq.s32.totalorder %s41, 1
      %p163 = por %p161, %p162
      %p165 = scmp.ne.s32.totalorder %s150, %s164
      %p166 = scmp.eq.s32.totalorder %s41, 0
      %p167 = por %p165, %p166
      %s169 = sadd.s32 %s168, 1
      %p172 = scmp.eq.s32.totalorder %s35, 1
      %p173 = scmp.ne.s32.totalorder %s168, %s170
      %p174 = scmp.eq.s32.totalorder %s35, 0
      %p175 = por %p173, %p174
      %p176 = scmp.ne.s32.totalorder %s168, %s170
      %p177 = scmp.eq.s32.totalorder %s40, 1
      %p178 = por %p176, %p177
      %p179 = scmp.ne.s32.totalorder %s170, %s171
      %p180 = scmp.eq.s32.totalorder %s40, 0
      %p181 = por %p179, %p180
      %p182 = scmp.ne.s32.totalorder %s170, %s171
      %p183 = scmp.eq.s32.totalorder %s41, 1
      %p184 = por %p182, %p183
      %p186 = scmp.ne.s32.totalorder %s171, %s185
      %p187 = scmp.eq.s32.totalorder %s41, 0
      %p188 = por %p186, %p187
      %s190 = sadd.s32 %s189, 1
      %p193 = scmp.eq.s32.totalorder %s35, 1
      %p194 = scmp.ne.s32.totalorder %s189, %s191
      %p195 = scmp.eq.s32.totalorder %s35, 0
      %p196 = por %p194, %p195
      %p197 = scmp.ne.s32.totalorder %s189, %s191
      %p198 = scmp.eq.s32.totalorder %s40, 1
      %p199 = por %p197, %p198
      %p200 = scmp.ne.s32.totalorder %s191, %s192
      %p201 = scmp.eq.s32.totalorder %s40, 0
      %p202 = por %p200, %p201
      %p203 = scmp.ne.s32.totalorder %s191, %s192
      %p204 = scmp.eq.s32.totalorder %s41, 1
      %p205 = por %p203, %p204
      %p207 = scmp.ne.s32.totalorder %s192, %s206
      %p208 = scmp.eq.s32.totalorder %s41, 0
      %p209 = por %p207, %p208
      %s211 = sadd.s32 %s210, 1
      %p214 = scmp.eq.s32.totalorder %s35, 1
      %p215 = scmp.ne.s32.totalorder %s210, %s212
      %p216 = scmp.eq.s32.totalorder %s35, 0
      %p217 = por %p215, %p216
      %p218 = scmp.ne.s32.totalorder %s210, %s212
      %p219 = scmp.eq.s32.totalorder %s40, 1
      %p220 = por %p218, %p219
      %p221 = scmp.ne.s32.totalorder %s212, %s213
      %p222 = scmp.eq.s32.totalorder %s40, 0
      %p223 = por %p221, %p222
      %p224 = scmp.ne.s32.totalorder %s212, %s213
      %p225 = scmp.eq.s32.totalorder %s41, 1
      %p226 = por %p224, %p225
      %p228 = scmp.ne.s32.totalorder %s213, %s227
      %p229 = scmp.eq.s32.totalorder %s41, 0
      %p230 = por %p228, %p229
      %s232 = sadd.s32 %s231, 1
      %p235 = scmp.eq.s32.totalorder %s35, 1
      %p236 = scmp.ne.s32.totalorder %s231, %s233
      %p237 = scmp.eq.s32.totalorder %s35, 0
      %p238 = por %p236, %p237
      %p239 = scmp.ne.s32.totalorder %s231, %s233
      %p240 = scmp.eq.s32.totalorder %s40, 1
      %p241 = por %p239, %p240
      %p242 = scmp.ne.s32.totalorder %s233, %s234
      %p243 = scmp.eq.s32.totalorder %s40, 0
      %p244 = por %p242, %p243
      %p245 = scmp.ne.s32.totalorder %s233, %s234
      %p246 = scmp.eq.s32.totalorder %s41, 1
      %p247 = por %p245, %p246
      %p249 = scmp.ne.s32.totalorder %s234, %s248
      %p250 = scmp.eq.s32.totalorder %s41, 0
      %p251 = por %p249, %p250
      %s253 = sadd.s32 %s252, 1
      %p256 = scmp.eq.s32.totalorder %s35, 1
      %p257 = scmp.ne.s32.totalorder %s252, %s254
      %p258 = scmp.eq.s32.totalorder %s35, 0
      %p259 = por %p257, %p258
      %p260 = scmp.ne.s32.totalorder %s252, %s254
      %p261 = scmp.eq.s32.totalorder %s40, 1
      %p262 = por %p260, %p261
      %p263 = scmp.ne.s32.totalorder %s254, %s255
      %p264 = scmp.eq.s32.totalorder %s40, 0
      %p265 = por %p263, %p264
      %p266 = scmp.ne.s32.totalorder %s254, %s255
      %p267 = scmp.eq.s32.totalorder %s41, 1
      %p268 = por %p266, %p267
      %p270 = scmp.ne.s32.totalorder %s255, %s269
      %p271 = scmp.eq.s32.totalorder %s41, 0
      %p272 = por %p270, %p271
      %s274 = sadd.s32 %s273, 1
      %p277 = scmp.eq.s32.totalorder %s35, 1
      %p278 = scmp.ne.s32.totalorder %s273, %s275
      %p279 = scmp.eq.s32.totalorder %s35, 0
      %p280 = por %p278, %p279
      %p281 = scmp.ne.s32.totalorder %s273, %s275
      %p282 = scmp.eq.s32.totalorder %s40, 1
      %p283 = por %p281, %p282
      %p284 = scmp.ne.s32.totalorder %s275, %s276
      %p285 = scmp.eq.s32.totalorder %s40, 0
      %p286 = por %p284, %p285
      %p287 = scmp.ne.s32.totalorder %s275, %s276
      %p288 = scmp.eq.s32.totalorder %s41, 1
      %p289 = por %p287, %p288
      %p291 = scmp.ne.s32.totalorder %s276, %s290
      %p292 = scmp.eq.s32.totalorder %s41, 0
      %p293 = por %p291, %p292
      %s294 = ssub.s32 %s35, %s42
      %p295 = scmp.eq.s32.totalorder %s294, 0
      %s297 = sadd.s32 %s296, 1
      %s298 = scalar_select %p295, %s296, %s297
      %p301 = pneg %p295
      %p302 = scmp.eq.s32.totalorder %s35, 1
      %p303 = por %p301, %p302
      %p304 = scmp.ne.s32.totalorder %s296, %s299
      %p305 = scmp.eq.s32.totalorder %s35, 0
      %p306 = por %p304, %p305
      %p307 = scmp.ne.s32.totalorder %s296, %s299
      %p308 = scmp.eq.s32.totalorder %s40, 1
      %p309 = por %p307, %p308
      %p310 = scmp.ne.s32.totalorder %s299, %s300
      %p311 = scmp.eq.s32.totalorder %s40, 0
      %p312 = por %p310, %p311
      %p313 = scmp.ne.s32.totalorder %s299, %s300
      %p314 = scmp.eq.s32.totalorder %s41, 1
      %p315 = por %p313, %p314
      %p317 = scmp.ne.s32.totalorder %s300, %s316
      %p318 = scmp.eq.s32.totalorder %s41, 0
      %p319 = por %p317, %p318
      %s320 = ssub.s32 %s35, %s42
      %p321 = scmp.eq.s32.totalorder %s320, 0
      %s323 = sadd.s32 %s322, 1
      %s324 = scalar_select %p321, %s322, %s323
      %p327 = pneg %p321
      %p328 = scmp.eq.s32.totalorder %s35, 1
      %p329 = por %p327, %p328
      %p330 = scmp.ne.s32.totalorder %s322, %s325
      %p331 = scmp.eq.s32.totalorder %s35, 0
      %p332 = por %p330, %p331
      %p333 = scmp.ne.s32.totalorder %s322, %s325
      %p334 = scmp.eq.s32.totalorder %s40, 1
      %p335 = por %p333, %p334
      %p336 = scmp.ne.s32.totalorder %s325, %s326
      %p337 = scmp.eq.s32.totalorder %s40, 0
      %p338 = por %p336, %p337
      %p339 = scmp.ne.s32.totalorder %s325, %s326
      %p340 = scmp.eq.s32.totalorder %s41, 1
      %p341 = por %p339, %p340
      %p343 = scmp.ne.s32.totalorder %s326, %s342
      %p344 = scmp.eq.s32.totalorder %s41, 0
      %p345 = por %p343, %p344
      %s346 = ssub.s32 %s35, %s42
      %p347 = scmp.eq.s32.totalorder %s346, 0
      %s349 = sadd.s32 %s348, 1
      %s350 = scalar_select %p347, %s348, %s349
      %p353 = pneg %p347
      %p354 = scmp.eq.s32.totalorder %s35, 1
      %p355 = por %p353, %p354
      %p356 = scmp.ne.s32.totalorder %s348, %s351
      %p357 = scmp.eq.s32.totalorder %s35, 0
      %p358 = por %p356, %p357
      %p359 = scmp.ne.s32.totalorder %s348, %s351
      %p360 = scmp.eq.s32.totalorder %s40, 1
      %p361 = por %p359, %p360
      %p362 = scmp.ne.s32.totalorder %s351, %s352
      %p363 = scmp.eq.s32.totalorder %s40, 0
      %p364 = por %p362, %p363
      %p365 = scmp.ne.s32.totalorder %s351, %s352
      %p366 = scmp.eq.s32.totalorder %s41, 1
      %p367 = por %p365, %p366
      %p369 = scmp.ne.s32.totalorder %s352, %s368
      %p370 = scmp.eq.s32.totalorder %s41, 0
      %p371 = por %p369, %p370
      %p372 = scmp.le.s32.totalorder 1, %s35
      %p373 = scmp.lt.s32.totalorder %s35, 3
      %p374 = pnand %p372, %p373
      %p375 = pneg %p374
      // Predicated region
      $region9: #{tpu_custom_call.1} parent=5 // pred_check
        _
      $region10: #{tpu_custom_call.1} parent=5 // pred_check_branch
        %377 = sbr.rel (%p374) target = $region12
      $region11: #{tpu_custom_call.1} parent=5 // pred_region
        %s378 = ssub.s32 %s35, 1
        // Predicated region
        $region13: #{tpu_custom_call.1} parent=11 // pred_check
          %p379 = pneg %p160
        $region14: #{tpu_custom_call.1} parent=11 // pred_check_branch
          %381 = sbr.rel (%p379) target = $region16
        $region15: #{tpu_custom_call.1} parent=11 // pred_region
          %s383 = ssub.s32 2048, 2048
          %384 = vsyncadd [#allocation8], %s383
          %s385 = sshll.u32 [#allocation9], 4
          %s386 = int_to_ptr.vmem [resolvable:$true] %s385
          %391 = dma.hbm_to_vmem [thread:$0]  %s4, 2048, %s386, [#allocation8], 128, 128, 8
        $region16: #{tpu_custom_call.1} parent=11 // pred_fallthru
          _
        // Predicated region
        $region17: #{tpu_custom_call.1} parent=11 // pred_check
          %p392 = pneg %p181
        $region18: #{tpu_custom_call.1} parent=11 // pred_check_branch
          %394 = sbr.rel (%p392) target = $region20
        $region19: #{tpu_custom_call.1} parent=11 // pred_region
          %s396 = ssub.s32 2048, 2048
          %397 = vsyncadd [#allocation11], %s396
          %s398 = sshll.u32 [#allocation10], 4
          %s399 = int_to_ptr.vmem [resolvable:$true] %s398
          %404 = dma.hbm_to_vmem [thread:$0]  %s5, 2048, %s399, [#allocation11], 128, 128, 8
        $region20: #{tpu_custom_call.1} parent=11 // pred_fallthru
          _
        // Predicated region
        $region21: #{tpu_custom_call.1} parent=11 // pred_check
          %p405 = pneg %p202
        $region22: #{tpu_custom_call.1} parent=11 // pred_check_branch
          %407 = sbr.rel (%p405) target = $region24
        $region23: #{tpu_custom_call.1} parent=11 // pred_region
          _
        $region24: #{tpu_custom_call.1} parent=11 // pred_fallthru
          _
        // Predicated region
        $region25: #{tpu_custom_call.1} parent=11 // pred_check
          %p408 = pneg %p223
        $region26: #{tpu_custom_call.1} parent=11 // pred_check_branch
          %410 = sbr.rel (%p408) target = $region28
        $region27: #{tpu_custom_call.1} parent=11 // pred_region
          _
        $region28: #{tpu_custom_call.1} parent=11 // pred_fallthru
          _
        // Predicated region
        $region29: #{tpu_custom_call.1} parent=11 // pred_check
          %p411 = pneg %p244
        $region30: #{tpu_custom_call.1} parent=11 // pred_check_branch
          %413 = sbr.rel (%p411) target = $region32
        $region31: #{tpu_custom_call.1} parent=11 // pred_region
          _
        $region32: #{tpu_custom_call.1} parent=11 // pred_fallthru
          _
        // Predicated region
        $region33: #{tpu_custom_call.1} parent=11 // pred_check
          %p414 = pneg %p265
        $region34: #{tpu_custom_call.1} parent=11 // pred_check_branch
          %416 = sbr.rel (%p414) target = $region36
        $region35: #{tpu_custom_call.1} parent=11 // pred_region
          _
        $region36: #{tpu_custom_call.1} parent=11 // pred_fallthru
          _
        // Predicated region
        $region37: #{tpu_custom_call.1} parent=11 // pred_check
          %p417 = pneg %p286
        $region38: #{tpu_custom_call.1} parent=11 // pred_check_branch
          %419 = sbr.rel (%p417) target = $region40
        $region39: #{tpu_custom_call.1} parent=11 // pred_region
          _
        $region40: #{tpu_custom_call.1} parent=11 // pred_fallthru
          _
      $region12: #{tpu_custom_call.1} parent=5 // pred_fallthru
        _
      %p420 = scmp.lt.s32.totalorder %s35, 2
      // Predicated region
      $region41: #{tpu_custom_call.1} parent=5 // pred_check
        %p421 = pneg %p420
      $region42: #{tpu_custom_call.1} parent=5 // pred_check_branch
        %423 = sbr.rel (%p421) target = $region44
      $region43: #{tpu_custom_call.1} parent=5 // pred_region
        // Predicated region
        $region45: #{tpu_custom_call.1} parent=43 // pred_check
          %p424 = pneg %p55
        $region46: #{tpu_custom_call.1} parent=43 // pred_check_branch
          %426 = sbr.rel (%p424) target = $region48
        $region47: #{tpu_custom_call.1} parent=43 // pred_region
          %p427 = scmp.lt.s32.totalorder %s35, 1
          %s428 = scalar_select %p427, %s35, 1
          %s429 = smul.addr %s428, 8
          %s430 = scalar_lea.vmem %s0, %s429
        $region48: #{tpu_custom_call.1} parent=43 // pred_fallthru
          _
        // Predicated region
        $region49: #{tpu_custom_call.1} parent=43 // pred_check
          %p431 = pneg %p81
        $region50: #{tpu_custom_call.1} parent=43 // pred_check_branch
          %433 = sbr.rel (%p431) target = $region52
        $region51: #{tpu_custom_call.1} parent=43 // pred_region
          %p434 = scmp.lt.s32.totalorder %s35, 1
          %s435 = scalar_select %p434, %s35, 1
          %s436 = smul.addr %s435, 8
          %s437 = scalar_lea.vmem %s1, %s436
        $region52: #{tpu_custom_call.1} parent=43 // pred_fallthru
          _
        // Predicated region
        $region53: #{tpu_custom_call.1} parent=43 // pred_check
          %p438 = pneg %p107
        $region54: #{tpu_custom_call.1} parent=43 // pred_check_branch
          %440 = sbr.rel (%p438) target = $region56
        $region55: #{tpu_custom_call.1} parent=43 // pred_region
          %s441 = sand.u32 %s97, 1
          %s442 = scalar_lea.sflag [#allocation5], %s441
          %s443 = sand.u32 %s97, 1
          %s444 = smul.addr %s443, 512
          %s445 = scalar_lea.vmem [#allocation4], %s444
          %s446 = smul.u32 8, %s35
          %s448 = ssub.s32 8192, 8192
          %449 = vsyncadd %s442, %s448
          %s450 = smul.addr %s446, 16
          %s451 = smul.addr %s450, 64
          %s452 = scalar_lea.hbm %s2, %s451
          %s453 = sshll.u32 %s445, 4
          %s454 = int_to_ptr.vmem [resolvable:$true] %s453
          %459 = dma.hbm_to_vmem [thread:$0]  %s452, 8192, %s454, %s442, 64, 64, 4
        $region56: #{tpu_custom_call.1} parent=43 // pred_fallthru
          _
        // Predicated region
        $region57: #{tpu_custom_call.1} parent=43 // pred_check
          %p460 = pneg %p133
        $region58: #{tpu_custom_call.1} parent=43 // pred_check_branch
          %462 = sbr.rel (%p460) target = $region60
        $region59: #{tpu_custom_call.1} parent=43 // pred_region
          %s463 = sand.u32 %s35, 1
          %s464 = scalar_lea.sflag [#allocation8], %s463
          %s465 = sand.u32 %s123, 1
          %s466 = smul.addr %s465, 512
          %s467 = scalar_lea.vmem [#allocation7], %s466
          %s468 = smul.u32 8, %s35
          %s470 = ssub.s32 8192, 8192
          %471 = vsyncadd %s464, %s470
          %s472 = smul.addr %s468, 16
          %s473 = smul.addr %s472, 64
          %s474 = scalar_lea.hbm %s3, %s473
          %s475 = sshll.u32 %s467, 4
          %s476 = int_to_ptr.vmem [resolvable:$true] %s475
          %481 = dma.hbm_to_vmem [thread:$0]  %s474, 8192, %s476, %s464, 64, 64, 4
        $region60: #{tpu_custom_call.1} parent=43 // pred_fallthru
          _
      $region44: #{tpu_custom_call.1} parent=5 // pred_fallthru
        _
      %p482 = scmp.le.s32.totalorder 1, %s35
      %p483 = scmp.lt.s32.totalorder %s35, 3
      %p484 = pnand %p482, %p483
      %p485 = pneg %p484
      // Predicated region
      $region61: #{tpu_custom_call.1} parent=5 // pred_check
        _
      $region62: #{tpu_custom_call.1} parent=5 // pred_check_branch
        %487 = sbr.rel (%p484) target = $region64
      $region63: #{tpu_custom_call.1} parent=5 // pred_region
        %s488 = ssub.s32 %s35, 1
        %s489 = sand.u32 %s100, 1
        %s490 = scalar_lea.sflag [#allocation5], %s489
        %s491 = sand.u32 %s100, 1
        %s492 = smul.addr %s491, 512
        %s493 = scalar_lea.vmem [#allocation4], %s492
        // Predicated region
        $region65: #{tpu_custom_call.1} parent=63 // pred_check
          %p494 = pneg %p113
        $region66: #{tpu_custom_call.1} parent=63 // pred_check_branch
          %496 = sbr.rel (%p494) target = $region68
        $region67: #{tpu_custom_call.1} parent=63 // pred_region
          %497 = dma.done %s490, 8192
        $region68: #{tpu_custom_call.1} parent=63 // pred_fallthru
          _
        %s498 = sand.u32 %s40, 1
        %s499 = scalar_lea.sflag [#allocation8], %s498
        %s500 = sand.u32 %s126, 1
        %s501 = smul.addr %s500, 512
        %s502 = scalar_lea.vmem [#allocation7], %s501
        // Predicated region
        $region69: #{tpu_custom_call.1} parent=63 // pred_check
          %p503 = pneg %p139
        $region70: #{tpu_custom_call.1} parent=63 // pred_check_branch
          %505 = sbr.rel (%p503) target = $region72
        $region71: #{tpu_custom_call.1} parent=63 // pred_region
          %506 = dma.done %s499, 8192
        $region72: #{tpu_custom_call.1} parent=63 // pred_fallthru
          _
        // Predicated region
        $region73: #{tpu_custom_call.1} parent=63 // pred_check
          %p507 = pneg %p160
        $region74: #{tpu_custom_call.1} parent=63 // pred_check_branch
          %509 = sbr.rel (%p507) target = $region76
        $region75: #{tpu_custom_call.1} parent=63 // pred_region
          %510 = dma.done [#allocation8], 2048
        $region76: #{tpu_custom_call.1} parent=63 // pred_fallthru
          _
        // Predicated region
        $region77: #{tpu_custom_call.1} parent=63 // pred_check
          %p511 = pneg %p181
        $region78: #{tpu_custom_call.1} parent=63 // pred_check_branch
          %513 = sbr.rel (%p511) target = $region80
        $region79: #{tpu_custom_call.1} parent=63 // pred_region
          %514 = dma.done [#allocation11], 2048
        $region80: #{tpu_custom_call.1} parent=63 // pred_fallthru
          _
        %p515 = scmp.lt.s32.totalorder %s40, 1
        %s516 = scalar_select %p515, %s40, 1
        %s517 = smul.addr %s516, 8
        %s518 = scalar_lea.vmem %s0, %s517
        %p519 = pneg %p61
        %p520 = pneg %p58
        %p521 = scmp.lt.s32.totalorder %s40, 1
        %s522 = scalar_select %p521, %s40, 1
        %s523 = smul.addr %s522, 8
        %s524 = scalar_lea.vmem %s1, %s523
        %p525 = pneg %p87
        %p526 = pneg %p84
        %s527 = sand.u32 %s100, 1
        %s528 = scalar_lea.sflag [#allocation5], %s527
        %s529 = sand.u32 %s100, 1
        %s530 = smul.addr %s529, 512
        %s531 = scalar_lea.vmem [#allocation4], %s530
        %p532 = pneg %p113
        %p533 = pneg %p110
        %s534 = sand.u32 %s40, 1
        %s535 = scalar_lea.sflag [#allocation8], %s534
        %s536 = sand.u32 %s126, 1
        %s537 = smul.addr %s536, 512
        %s538 = scalar_lea.vmem [#allocation7], %s537
        %p539 = pneg %p139
        %p540 = pneg %p136
        %p541 = pneg %p160
        %p542 = pneg %p157
        %p543 = pneg %p181
        %p544 = pneg %p178
        %p545 = pneg %p202
        %p546 = pneg %p199
        %p547 = pneg %p223
        %p548 = pneg %p220
        %p549 = pneg %p244
        %p550 = pneg %p241
        %p551 = pneg %p265
        %p552 = pneg %p262
        %p553 = pneg %p286
        %p554 = pneg %p283
        %p555 = pneg %p312
        %p556 = pneg %p309
        %s557 = sand.u32 %s299, 1
        %s558 = scalar_lea.sflag [#allocation6], %s557
        %s559 = sand.u32 %s299, 1
        %s560 = smul.addr %s559, 8
        %s561 = scalar_lea.vmem [#allocation12], %s560
        %p562 = pneg %p338
        %p563 = pneg %p335
        %s564 = sand.u32 %s40, 1
        %s565 = scalar_lea.sflag [#allocation14], %s564
        %s566 = sand.u32 %s325, 1
        %s567 = smul.addr %s566, 512
        %s568 = scalar_lea.vmem [#allocation13], %s567
        %p569 = pneg %p364
        %p570 = pneg %p361
        %s571 = sand.u32 %s40, 1
        %s572 = scalar_lea.sflag [#allocation14], %s571
        %s573 = sand.u32 %s351, 1
        %s574 = smul.addr %s573, 512
        %s575 = scalar_lea.vmem [#allocation15], %s574
        %p576 = scmp.lt.s32.totalorder %s40, 1
        %s577 = scalar_select %p576, %s40, 1
        %s578 = smul.addr %s577, 8
        %s579 = scalar_lea.vmem %s0, %s578
        %p580 = scmp.lt.s32.totalorder %s40, 1
        %s581 = scalar_select %p580, %s40, 1
        %s582 = smul.addr %s581, 8
        %s583 = scalar_lea.vmem %s1, %s582
        %s584 = smul.u32 8, %s40
        %s585 = smul.u32 8, %s40
        %s586 = smul.u32 8, %s40
        %s587 = smul.u32 8, %s40
        %v588 = vld [vmem:[%s579] sm:$0xff]
        %v589 = vld [vmem:[%s583] sm:$0xff]
        %v590 = vld [vmem:[%s493] sm:$0xf]
        %v591 = vld [vmem:[%s493 + $0x4] sm:$0xf]
        %v592 = vld [vmem:[%s493 + $0x8] sm:$0xf]
        %v593 = vld [vmem:[%s493 + $0xc] sm:$0xf]
        %v594 = vld [vmem:[%s493 + $0x10] sm:$0xf]
        %v595 = vld [vmem:[%s493 + $0x14] sm:$0xf]
        %v596 = vld [vmem:[%s493 + $0x18] sm:$0xf]
        %v597 = vld [vmem:[%s493 + $0x1c] sm:$0xf]
        %v598 = vld [vmem:[%s493 + $0x20] sm:$0xf]
        %v599 = vld [vmem:[%s493 + $0x24] sm:$0xf]
        %v600 = vld [vmem:[%s493 + $0x28] sm:$0xf]
        %v601 = vld [vmem:[%s493 + $0x2c] sm:$0xf]
        %v602 = vld [vmem:[%s493 + $0x30] sm:$0xf]
        %v603 = vld [vmem:[%s493 + $0x34] sm:$0xf]
        %v604 = vld [vmem:[%s493 + $0x38] sm:$0xf]
        %v605 = vld [vmem:[%s493 + $0x3c] sm:$0xf]
        %v606 = vld [vmem:[%s493 + $0x40] sm:$0xf]
        %v607 = vld [vmem:[%s493 + $0x44] sm:$0xf]
        %v608 = vld [vmem:[%s493 + $0x48] sm:$0xf]
        %v609 = vld [vmem:[%s493 + $0x4c] sm:$0xf]
        %v610 = vld [vmem:[%s493 + $0x50] sm:$0xf]
        %v611 = vld [vmem:[%s493 + $0x54] sm:$0xf]
        %v612 = vld [vmem:[%s493 + $0x58] sm:$0xf]
        %v613 = vld [vmem:[%s493 + $0x5c] sm:$0xf]
        %v614 = vld [vmem:[%s493 + $0x60] sm:$0xf]
        %v615 = vld [vmem:[%s493 + $0x64] sm:$0xf]
        %v616 = vld [vmem:[%s493 + $0x68] sm:$0xf]
        %v617 = vld [vmem:[%s493 + $0x6c] sm:$0xf]
        %v618 = vld [vmem:[%s493 + $0x70] sm:$0xf]
        %v619 = vld [vmem:[%s493 + $0x74] sm:$0xf]
        %v620 = vld [vmem:[%s493 + $0x78] sm:$0xf]
        %v621 = vld [vmem:[%s493 + $0x7c] sm:$0xf]
        %v622 = vld [vmem:[%s493 + $0x80] sm:$0xf]
        %v623 = vld [vmem:[%s493 + $0x84] sm:$0xf]
        %v624 = vld [vmem:[%s493 + $0x88] sm:$0xf]
        %v625 = vld [vmem:[%s493 + $0x8c] sm:$0xf]
        %v626 = vld [vmem:[%s493 + $0x90] sm:$0xf]
        %v627 = vld [vmem:[%s493 + $0x94] sm:$0xf]
        %v628 = vld [vmem:[%s493 + $0x98] sm:$0xf]
        %v629 = vld [vmem:[%s493 + $0x9c] sm:$0xf]
        %v630 = vld [vmem:[%s493 + $0xa0] sm:$0xf]
        %v631 = vld [vmem:[%s493 + $0xa4] sm:$0xf]
        %v632 = vld [vmem:[%s493 + $0xa8] sm:$0xf]
        %v633 = vld [vmem:[%s493 + $0xac] sm:$0xf]
        %v634 = vld [vmem:[%s493 + $0xb0] sm:$0xf]
        %v635 = vld [vmem:[%s493 + $0xb4] sm:$0xf]
        %v636 = vld [vmem:[%s493 + $0xb8] sm:$0xf]
        %v637 = vld [vmem:[%s493 + $0xbc] sm:$0xf]
        %v638 = vld [vmem:[%s493 + $0xc0] sm:$0xf]
        %v639 = vld [vmem:[%s493 + $0xc4] sm:$0xf]
        %v640 = vld [vmem:[%s493 + $0xc8] sm:$0xf]
        %v641 = vld [vmem:[%s493 + $0xcc] sm:$0xf]
        %v642 = vld [vmem:[%s493 + $0xd0] sm:$0xf]
        %v643 = vld [vmem:[%s493 + $0xd4] sm:$0xf]
        %v644 = vld [vmem:[%s493 + $0xd8] sm:$0xf]
        %v645 = vld [vmem:[%s493 + $0xdc] sm:$0xf]
        %v646 = vld [vmem:[%s493 + $0xe0] sm:$0xf]
        %v647 = vld [vmem:[%s493 + $0xe4] sm:$0xf]
        %v648 = vld [vmem:[%s493 + $0xe8] sm:$0xf]
        %v649 = vld [vmem:[%s493 + $0xec] sm:$0xf]
        %v650 = vld [vmem:[%s493 + $0xf0] sm:$0xf]
        %v651 = vld [vmem:[%s493 + $0xf4] sm:$0xf]
        %v652 = vld [vmem:[%s493 + $0xf8] sm:$0xf]
        %v653 = vld [vmem:[%s493 + $0xfc] sm:$0xf]
        %v654 = vld [vmem:[%s493 + $0x100] sm:$0xf]
        %v655 = vld [vmem:[%s493 + $0x104] sm:$0xf]
        %v656 = vld [vmem:[%s493 + $0x108] sm:$0xf]
        %v657 = vld [vmem:[%s493 + $0x10c] sm:$0xf]
        %v658 = vld [vmem:[%s493 + $0x110] sm:$0xf]
        %v659 = vld [vmem:[%s493 + $0x114] sm:$0xf]
        %v660 = vld [vmem:[%s493 + $0x118] sm:$0xf]
        %v661 = vld [vmem:[%s493 + $0x11c] sm:$0xf]
        %v662 = vld [vmem:[%s493 + $0x120] sm:$0xf]
        %v663 = vld [vmem:[%s493 + $0x124] sm:$0xf]
        %v664 = vld [vmem:[%s493 + $0x128] sm:$0xf]
        %v665 = vld [vmem:[%s493 + $0x12c] sm:$0xf]
        %v666 = vld [vmem:[%s493 + $0x130] sm:$0xf]
        %v667 = vld [vmem:[%s493 + $0x134] sm:$0xf]
        %v668 = vld [vmem:[%s493 + $0x138] sm:$0xf]
        %v669 = vld [vmem:[%s493 + $0x13c] sm:$0xf]
        %v670 = vld [vmem:[%s493 + $0x140] sm:$0xf]
        %v671 = vld [vmem:[%s493 + $0x144] sm:$0xf]
        %v672 = vld [vmem:[%s493 + $0x148] sm:$0xf]
        %v673 = vld [vmem:[%s493 + $0x14c] sm:$0xf]
        %v674 = vld [vmem:[%s493 + $0x150] sm:$0xf]
        %v675 = vld [vmem:[%s493 + $0x154] sm:$0xf]
        %v676 = vld [vmem:[%s493 + $0x158] sm:$0xf]
        %v677 = vld [vmem:[%s493 + $0x15c] sm:$0xf]
        %v678 = vld [vmem:[%s493 + $0x160] sm:$0xf]
        %v679 = vld [vmem:[%s493 + $0x164] sm:$0xf]
        %v680 = vld [vmem:[%s493 + $0x168] sm:$0xf]
        %v681 = vld [vmem:[%s493 + $0x16c] sm:$0xf]
        %v682 = vld [vmem:[%s493 + $0x170] sm:$0xf]
        %v683 = vld [vmem:[%s493 + $0x174] sm:$0xf]
        %v684 = vld [vmem:[%s493 + $0x178] sm:$0xf]
        %v685 = vld [vmem:[%s493 + $0x17c] sm:$0xf]
        %v686 = vld [vmem:[%s493 + $0x180] sm:$0xf]
        %v687 = vld [vmem:[%s493 + $0x184] sm:$0xf]
        %v688 = vld [vmem:[%s493 + $0x188] sm:$0xf]
        %v689 = vld [vmem:[%s493 + $0x18c] sm:$0xf]
        %v690 = vld [vmem:[%s493 + $0x190] sm:$0xf]
        %v691 = vld [vmem:[%s493 + $0x194] sm:$0xf]
        %v692 = vld [vmem:[%s493 + $0x198] sm:$0xf]
        %v693 = vld [vmem:[%s493 + $0x19c] sm:$0xf]
        %v694 = vld [vmem:[%s493 + $0x1a0] sm:$0xf]
        %v695 = vld [vmem:[%s493 + $0x1a4] sm:$0xf]
        %v696 = vld [vmem:[%s493 + $0x1a8] sm:$0xf]
        %v697 = vld [vmem:[%s493 + $0x1ac] sm:$0xf]
        %v698 = vld [vmem:[%s493 + $0x1b0] sm:$0xf]
        %v699 = vld [vmem:[%s493 + $0x1b4] sm:$0xf]
        %v700 = vld [vmem:[%s493 + $0x1b8] sm:$0xf]
        %v701 = vld [vmem:[%s493 + $0x1bc] sm:$0xf]
        %v702 = vld [vmem:[%s493 + $0x1c0] sm:$0xf]
        %v703 = vld [vmem:[%s493 + $0x1c4] sm:$0xf]
        %v704 = vld [vmem:[%s493 + $0x1c8] sm:$0xf]
        %v705 = vld [vmem:[%s493 + $0x1cc] sm:$0xf]
        %v706 = vld [vmem:[%s493 + $0x1d0] sm:$0xf]
        %v707 = vld [vmem:[%s493 + $0x1d4] sm:$0xf]
        %v708 = vld [vmem:[%s493 + $0x1d8] sm:$0xf]
        %v709 = vld [vmem:[%s493 + $0x1dc] sm:$0xf]
        %v710 = vld [vmem:[%s493 + $0x1e0] sm:$0xf]
        %v711 = vld [vmem:[%s493 + $0x1e4] sm:$0xf]
        %v712 = vld [vmem:[%s493 + $0x1e8] sm:$0xf]
        %v713 = vld [vmem:[%s493 + $0x1ec] sm:$0xf]
        %v714 = vld [vmem:[%s493 + $0x1f0] sm:$0xf]
        %v715 = vld [vmem:[%s493 + $0x1f4] sm:$0xf]
        %v716 = vld [vmem:[%s493 + $0x1f8] sm:$0xf]
        %v717 = vld [vmem:[%s493 + $0x1fc] sm:$0xf]
        %v718 = vunpack.c.l.bf16 %v590
        %v719 = vunpack.c.l.bf16 %v591
        %v720 = vunpack.c.l.bf16 %v592
        %v721 = vunpack.c.l.bf16 %v593
        %v722 = vunpack.c.l.bf16 %v594
        %v723 = vunpack.c.l.bf16 %v595
        %v724 = vunpack.c.l.bf16 %v596
        %v725 = vunpack.c.l.bf16 %v597
        %v726 = vunpack.c.l.bf16 %v598
        %v727 = vunpack.c.l.bf16 %v599
        %v728 = vunpack.c.l.bf16 %v600
        %v729 = vunpack.c.l.bf16 %v601
        %v730 = vunpack.c.l.bf16 %v602
        %v731 = vunpack.c.l.bf16 %v603
        %v732 = vunpack.c.l.bf16 %v604
        %v733 = vunpack.c.l.bf16 %v605
        %v734 = vunpack.c.l.bf16 %v606
        %v735 = vunpack.c.l.bf16 %v607
        %v736 = vunpack.c.l.bf16 %v608
        %v737 = vunpack.c.l.bf16 %v609
        %v738 = vunpack.c.l.bf16 %v610
        %v739 = vunpack.c.l.bf16 %v611
        %v740 = vunpack.c.l.bf16 %v612
        %v741 = vunpack.c.l.bf16 %v613
        %v742 = vunpack.c.l.bf16 %v614
        %v743 = vunpack.c.l.bf16 %v615
        %v744 = vunpack.c.l.bf16 %v616
        %v745 = vunpack.c.l.bf16 %v617
        %v746 = vunpack.c.l.bf16 %v618
        %v747 = vunpack.c.l.bf16 %v619
        %v748 = vunpack.c.l.bf16 %v620
        %v749 = vunpack.c.l.bf16 %v621
        %v750 = vunpack.c.l.bf16 %v622
        %v751 = vunpack.c.l.bf16 %v623
        %v752 = vunpack.c.l.bf16 %v624
        %v753 = vunpack.c.l.bf16 %v625
        %v754 = vunpack.c.l.bf16 %v626
        %v755 = vunpack.c.l.bf16 %v627
        %v756 = vunpack.c.l.bf16 %v628
        %v757 = vunpack.c.l.bf16 %v629
        %v758 = vunpack.c.l.bf16 %v630
        %v759 = vunpack.c.l.bf16 %v631
        %v760 = vunpack.c.l.bf16 %v632
        %v761 = vunpack.c.l.bf16 %v633
        %v762 = vunpack.c.l.bf16 %v634
        %v763 = vunpack.c.l.bf16 %v635
        %v764 = vunpack.c.l.bf16 %v636
        %v765 = vunpack.c.l.bf16 %v637
        %v766 = vunpack.c.l.bf16 %v638
        %v767 = vunpack.c.l.bf16 %v639
        %v768 = vunpack.c.l.bf16 %v640
        %v769 = vunpack.c.l.bf16 %v641
        %v770 = vunpack.c.l.bf16 %v642
        %v771 = vunpack.c.l.bf16 %v643
        %v772 = vunpack.c.l.bf16 %v644
        %v773 = vunpack.c.l.bf16 %v645
        %v774 = vunpack.c.l.bf16 %v646
        %v775 = vunpack.c.l.bf16 %v647
        %v776 = vunpack.c.l.bf16 %v648
        %v777 = vunpack.c.l.bf16 %v649
        %v778 = vunpack.c.l.bf16 %v650
        %v779 = vunpack.c.l.bf16 %v651
        %v780 = vunpack.c.l.bf16 %v652
        %v781 = vunpack.c.l.bf16 %v653
        %v782 = vunpack.c.l.bf16 %v654
        %v783 = vunpack.c.l.bf16 %v655
        %v784 = vunpack.c.l.bf16 %v656
        %v785 = vunpack.c.l.bf16 %v657
        %v786 = vunpack.c.l.bf16 %v658
        %v787 = vunpack.c.l.bf16 %v659
        %v788 = vunpack.c.l.bf16 %v660
        %v789 = vunpack.c.l.bf16 %v661
        %v790 = vunpack.c.l.bf16 %v662
        %v791 = vunpack.c.l.bf16 %v663
        %v792 = vunpack.c.l.bf16 %v664
        %v793 = vunpack.c.l.bf16 %v665
        %v794 = vunpack.c.l.bf16 %v666
        %v795 = vunpack.c.l.bf16 %v667
        %v796 = vunpack.c.l.bf16 %v668
        %v797 = vunpack.c.l.bf16 %v669
        %v798 = vunpack.c.l.bf16 %v670
        %v799 = vunpack.c.l.bf16 %v671
        %v800 = vunpack.c.l.bf16 %v672
        %v801 = vunpack.c.l.bf16 %v673
        %v802 = vunpack.c.l.bf16 %v674
        %v803 = vunpack.c.l.bf16 %v675
        %v804 = vunpack.c.l.bf16 %v676
        %v805 = vunpack.c.l.bf16 %v677
        %v806 = vunpack.c.l.bf16 %v678
        %v807 = vunpack.c.l.bf16 %v679
        %v808 = vunpack.c.l.bf16 %v680
        %v809 = vunpack.c.l.bf16 %v681
        %v810 = vunpack.c.l.bf16 %v682
        %v811 = vunpack.c.l.bf16 %v683
        %v812 = vunpack.c.l.bf16 %v684
        %v813 = vunpack.c.l.bf16 %v685
        %v814 = vunpack.c.l.bf16 %v686
        %v815 = vunpack.c.l.bf16 %v687
        %v816 = vunpack.c.l.bf16 %v688
        %v817 = vunpack.c.l.bf16 %v689
        %v818 = vunpack.c.l.bf16 %v690
        %v819 = vunpack.c.l.bf16 %v691
        %v820 = vunpack.c.l.bf16 %v692
        %v821 = vunpack.c.l.bf16 %v693
        %v822 = vunpack.c.l.bf16 %v694
        %v823 = vunpack.c.l.bf16 %v695
        %v824 = vunpack.c.l.bf16 %v696
        %v825 = vunpack.c.l.bf16 %v697
        %v826 = vunpack.c.l.bf16 %v698
        %v827 = vunpack.c.l.bf16 %v699
        %v828 = vunpack.c.l.bf16 %v700
        %v829 = vunpack.c.l.bf16 %v701
        %v830 = vunpack.c.l.bf16 %v702
        %v831 = vunpack.c.l.bf16 %v703
        %v832 = vunpack.c.l.bf16 %v704
        %v833 = vunpack.c.l.bf16 %v705
        %v834 = vunpack.c.l.bf16 %v706
        %v835 = vunpack.c.l.bf16 %v707
        %v836 = vunpack.c.l.bf16 %v708
        %v837 = vunpack.c.l.bf16 %v709
        %v838 = vunpack.c.l.bf16 %v710
        %v839 = vunpack.c.l.bf16 %v711
        %v840 = vunpack.c.l.bf16 %v712
        %v841 = vunpack.c.l.bf16 %v713
        %v842 = vunpack.c.l.bf16 %v714
        %v843 = vunpack.c.l.bf16 %v715
        %v844 = vunpack.c.l.bf16 %v716
        %v845 = vunpack.c.l.bf16 %v717
        %v846 = vld [vmem:[%s502] sm:$0xf]
        %v847 = vld [vmem:[%s502 + $0x4] sm:$0xf]
        %v848 = vld [vmem:[%s502 + $0x8] sm:$0xf]
        %v849 = vld [vmem:[%s502 + $0xc] sm:$0xf]
        %v850 = vld [vmem:[%s502 + $0x10] sm:$0xf]
        %v851 = vld [vmem:[%s502 + $0x14] sm:$0xf]
        %v852 = vld [vmem:[%s502 + $0x18] sm:$0xf]
        %v853 = vld [vmem:[%s502 + $0x1c] sm:$0xf]
        %v854 = vld [vmem:[%s502 + $0x20] sm:$0xf]
        %v855 = vld [vmem:[%s502 + $0x24] sm:$0xf]
        %v856 = vld [vmem:[%s502 + $0x28] sm:$0xf]
        %v857 = vld [vmem:[%s502 + $0x2c] sm:$0xf]
        %v858 = vld [vmem:[%s502 + $0x30] sm:$0xf]
        %v859 = vld [vmem:[%s502 + $0x34] sm:$0xf]
        %v860 = vld [vmem:[%s502 + $0x38] sm:$0xf]
        %v861 = vld [vmem:[%s502 + $0x3c] sm:$0xf]
        %v862 = vld [vmem:[%s502 + $0x40] sm:$0xf]
        %v863 = vld [vmem:[%s502 + $0x44] sm:$0xf]
        %v864 = vld [vmem:[%s502 + $0x48] sm:$0xf]
        %v865 = vld [vmem:[%s502 + $0x4c] sm:$0xf]
        %v866 = vld [vmem:[%s502 + $0x50] sm:$0xf]
        %v867 = vld [vmem:[%s502 + $0x54] sm:$0xf]
        %v868 = vld [vmem:[%s502 + $0x58] sm:$0xf]
        %v869 = vld [vmem:[%s502 + $0x5c] sm:$0xf]
        %v870 = vld [vmem:[%s502 + $0x60] sm:$0xf]
        %v871 = vld [vmem:[%s502 + $0x64] sm:$0xf]
        %v872 = vld [vmem:[%s502 + $0x68] sm:$0xf]
        %v873 = vld [vmem:[%s502 + $0x6c] sm:$0xf]
        %v874 = vld [vmem:[%s502 + $0x70] sm:$0xf]
        %v875 = vld [vmem:[%s502 + $0x74] sm:$0xf]
        %v876 = vld [vmem:[%s502 + $0x78] sm:$0xf]
        %v877 = vld [vmem:[%s502 + $0x7c] sm:$0xf]
        %v878 = vld [vmem:[%s502 + $0x80] sm:$0xf]
        %v879 = vld [vmem:[%s502 + $0x84] sm:$0xf]
        %v880 = vld [vmem:[%s502 + $0x88] sm:$0xf]
        %v881 = vld [vmem:[%s502 + $0x8c] sm:$0xf]
        %v882 = vld [vmem:[%s502 + $0x90] sm:$0xf]
        %v883 = vld [vmem:[%s502 + $0x94] sm:$0xf]
        %v884 = vld [vmem:[%s502 + $0x98] sm:$0xf]
        %v885 = vld [vmem:[%s502 + $0x9c] sm:$0xf]
        %v886 = vld [vmem:[%s502 + $0xa0] sm:$0xf]
        %v887 = vld [vmem:[%s502 + $0xa4] sm:$0xf]
        %v888 = vld [vmem:[%s502 + $0xa8] sm:$0xf]
        %v889 = vld [vmem:[%s502 + $0xac] sm:$0xf]
        %v890 = vld [vmem:[%s502 + $0xb0] sm:$0xf]
        %v891 = vld [vmem:[%s502 + $0xb4] sm:$0xf]
        %v892 = vld [vmem:[%s502 + $0xb8] sm:$0xf]
        %v893 = vld [vmem:[%s502 + $0xbc] sm:$0xf]
        %v894 = vld [vmem:[%s502 + $0xc0] sm:$0xf]
        %v895 = vld [vmem:[%s502 + $0xc4] sm:$0xf]
        %v896 = vld [vmem:[%s502 + $0xc8] sm:$0xf]
        %v897 = vld [vmem:[%s502 + $0xcc] sm:$0xf]
        %v898 = vld [vmem:[%s502 + $0xd0] sm:$0xf]
        %v899 = vld [vmem:[%s502 + $0xd4] sm:$0xf]
        %v900 = vld [vmem:[%s502 + $0xd8] sm:$0xf]
        %v901 = vld [vmem:[%s502 + $0xdc] sm:$0xf]
        %v902 = vld [vmem:[%s502 + $0xe0] sm:$0xf]
        %v903 = vld [vmem:[%s502 + $0xe4] sm:$0xf]
        %v904 = vld [vmem:[%s502 + $0xe8] sm:$0xf]
        %v905 = vld [vmem:[%s502 + $0xec] sm:$0xf]
        %v906 = vld [vmem:[%s502 + $0xf0] sm:$0xf]
        %v907 = vld [vmem:[%s502 + $0xf4] sm:$0xf]
        %v908 = vld [vmem:[%s502 + $0xf8] sm:$0xf]
        %v909 = vld [vmem:[%s502 + $0xfc] sm:$0xf]
        %v910 = vld [vmem:[%s502 + $0x100] sm:$0xf]
        %v911 = vld [vmem:[%s502 + $0x104] sm:$0xf]
        %v912 = vld [vmem:[%s502 + $0x108] sm:$0xf]
        %v913 = vld [vmem:[%s502 + $0x10c] sm:$0xf]
        %v914 = vld [vmem:[%s502 + $0x110] sm:$0xf]
        %v915 = vld [vmem:[%s502 + $0x114] sm:$0xf]
        %v916 = vld [vmem:[%s502 + $0x118] sm:$0xf]
        %v917 = vld [vmem:[%s502 + $0x11c] sm:$0xf]
        %v918 = vld [vmem:[%s502 + $0x120] sm:$0xf]
        %v919 = vld [vmem:[%s502 + $0x124] sm:$0xf]
        %v920 = vld [vmem:[%s502 + $0x128] sm:$0xf]
        %v921 = vld [vmem:[%s502 + $0x12c] sm:$0xf]
        %v922 = vld [vmem:[%s502 + $0x130] sm:$0xf]
        %v923 = vld [vmem:[%s502 + $0x134] sm:$0xf]
        %v924 = vld [vmem:[%s502 + $0x138] sm:$0xf]
        %v925 = vld [vmem:[%s502 + $0x13c] sm:$0xf]
        %v926 = vld [vmem:[%s502 + $0x140] sm:$0xf]
        %v927 = vld [vmem:[%s502 + $0x144] sm:$0xf]
        %v928 = vld [vmem:[%s502 + $0x148] sm:$0xf]
        %v929 = vld [vmem:[%s502 + $0x14c] sm:$0xf]
        %v930 = vld [vmem:[%s502 + $0x150] sm:$0xf]
        %v931 = vld [vmem:[%s502 + $0x154] sm:$0xf]
        %v932 = vld [vmem:[%s502 + $0x158] sm:$0xf]
        %v933 = vld [vmem:[%s502 + $0x15c] sm:$0xf]
        %v934 = vld [vmem:[%s502 + $0x160] sm:$0xf]
        %v935 = vld [vmem:[%s502 + $0x164] sm:$0xf]
        %v936 = vld [vmem:[%s502 + $0x168] sm:$0xf]
        %v937 = vld [vmem:[%s502 + $0x16c] sm:$0xf]
        %v938 = vld [vmem:[%s502 + $0x170] sm:$0xf]
        %v939 = vld [vmem:[%s502 + $0x174] sm:$0xf]
        %v940 = vld [vmem:[%s502 + $0x178] sm:$0xf]
        %v941 = vld [vmem:[%s502 + $0x17c] sm:$0xf]
        %v942 = vld [vmem:[%s502 + $0x180] sm:$0xf]
        %v943 = vld [vmem:[%s502 + $0x184] sm:$0xf]
        %v944 = vld [vmem:[%s502 + $0x188] sm:$0xf]
        %v945 = vld [vmem:[%s502 + $0x18c] sm:$0xf]
        %v946 = vld [vmem:[%s502 + $0x190] sm:$0xf]
        %v947 = vld [vmem:[%s502 + $0x194] sm:$0xf]
        %v948 = vld [vmem:[%s502 + $0x198] sm:$0xf]
        %v949 = vld [vmem:[%s502 + $0x19c] sm:$0xf]
        %v950 = vld [vmem:[%s502 + $0x1a0] sm:$0xf]
        %v951 = vld [vmem:[%s502 + $0x1a4] sm:$0xf]
        %v952 = vld [vmem:[%s502 + $0x1a8] sm:$0xf]
        %v953 = vld [vmem:[%s502 + $0x1ac] sm:$0xf]
        %v954 = vld [vmem:[%s502 + $0x1b0] sm:$0xf]
        %v955 = vld [vmem:[%s502 + $0x1b4] sm:$0xf]
        %v956 = vld [vmem:[%s502 + $0x1b8] sm:$0xf]
        %v957 = vld [vmem:[%s502 + $0x1bc] sm:$0xf]
        %v958 = vld [vmem:[%s502 + $0x1c0] sm:$0xf]
        %v959 = vld [vmem:[%s502 + $0x1c4] sm:$0xf]
        %v960 = vld [vmem:[%s502 + $0x1c8] sm:$0xf]
        %v961 = vld [vmem:[%s502 + $0x1cc] sm:$0xf]
        %v962 = vld [vmem:[%s502 + $0x1d0] sm:$0xf]
        %v963 = vld [vmem:[%s502 + $0x1d4] sm:$0xf]
        %v964 = vld [vmem:[%s502 + $0x1d8] sm:$0xf]
        %v965 = vld [vmem:[%s502 + $0x1dc] sm:$0xf]
        %v966 = vld [vmem:[%s502 + $0x1e0] sm:$0xf]
        %v967 = vld [vmem:[%s502 + $0x1e4] sm:$0xf]
        %v968 = vld [vmem:[%s502 + $0x1e8] sm:$0xf]
        %v969 = vld [vmem:[%s502 + $0x1ec] sm:$0xf]
        %v970 = vld [vmem:[%s502 + $0x1f0] sm:$0xf]
        %v971 = vld [vmem:[%s502 + $0x1f4] sm:$0xf]
        %v972 = vld [vmem:[%s502 + $0x1f8] sm:$0xf]
        %v973 = vld [vmem:[%s502 + $0x1fc] sm:$0xf]
        %v974 = vunpack.c.l.bf16 %v846
        %v975 = vunpack.c.l.bf16 %v847
        %v976 = vunpack.c.l.bf16 %v848
        %v977 = vunpack.c.l.bf16 %v849
        %v978 = vunpack.c.l.bf16 %v850
        %v979 = vunpack.c.l.bf16 %v851
        %v980 = vunpack.c.l.bf16 %v852
        %v981 = vunpack.c.l.bf16 %v853
        %v982 = vunpack.c.l.bf16 %v854
        %v983 = vunpack.c.l.bf16 %v855
        %v984 = vunpack.c.l.bf16 %v856
        %v985 = vunpack.c.l.bf16 %v857
        %v986 = vunpack.c.l.bf16 %v858
        %v987 = vunpack.c.l.bf16 %v859
        %v988 = vunpack.c.l.bf16 %v860
        %v989 = vunpack.c.l.bf16 %v861
        %v990 = vunpack.c.l.bf16 %v862
        %v991 = vunpack.c.l.bf16 %v863
        %v992 = vunpack.c.l.bf16 %v864
        %v993 = vunpack.c.l.bf16 %v865
        %v994 = vunpack.c.l.bf16 %v866
        %v995 = vunpack.c.l.bf16 %v867
        %v996 = vunpack.c.l.bf16 %v868
        %v997 = vunpack.c.l.bf16 %v869
        %v998 = vunpack.c.l.bf16 %v870
        %v999 = vunpack.c.l.bf16 %v871
        %v1000 = vunpack.c.l.bf16 %v872
        %v1001 = vunpack.c.l.bf16 %v873
        %v1002 = vunpack.c.l.bf16 %v874
        %v1003 = vunpack.c.l.bf16 %v875
        %v1004 = vunpack.c.l.bf16 %v876
        %v1005 = vunpack.c.l.bf16 %v877
        %v1006 = vunpack.c.l.bf16 %v878
        %v1007 = vunpack.c.l.bf16 %v879
        %v1008 = vunpack.c.l.bf16 %v880
        %v1009 = vunpack.c.l.bf16 %v881
        %v1010 = vunpack.c.l.bf16 %v882
        %v1011 = vunpack.c.l.bf16 %v883
        %v1012 = vunpack.c.l.bf16 %v884
        %v1013 = vunpack.c.l.bf16 %v885
        %v1014 = vunpack.c.l.bf16 %v886
        %v1015 = vunpack.c.l.bf16 %v887
        %v1016 = vunpack.c.l.bf16 %v888
        %v1017 = vunpack.c.l.bf16 %v889
        %v1018 = vunpack.c.l.bf16 %v890
        %v1019 = vunpack.c.l.bf16 %v891
        %v1020 = vunpack.c.l.bf16 %v892
        %v1021 = vunpack.c.l.bf16 %v893
        %v1022 = vunpack.c.l.bf16 %v894
        %v1023 = vunpack.c.l.bf16 %v895
        %v1024 = vunpack.c.l.bf16 %v896
        %v1025 = vunpack.c.l.bf16 %v897
        %v1026 = vunpack.c.l.bf16 %v898
        %v1027 = vunpack.c.l.bf16 %v899
        %v1028 = vunpack.c.l.bf16 %v900
        %v1029 = vunpack.c.l.bf16 %v901
        %v1030 = vunpack.c.l.bf16 %v902
        %v1031 = vunpack.c.l.bf16 %v903
        %v1032 = vunpack.c.l.bf16 %v904
        %v1033 = vunpack.c.l.bf16 %v905
        %v1034 = vunpack.c.l.bf16 %v906
        %v1035 = vunpack.c.l.bf16 %v907
        %v1036 = vunpack.c.l.bf16 %v908
        %v1037 = vunpack.c.l.bf16 %v909
        %v1038 = vunpack.c.l.bf16 %v910
        %v1039 = vunpack.c.l.bf16 %v911
        %v1040 = vunpack.c.l.bf16 %v912
        %v1041 = vunpack.c.l.bf16 %v913
        %v1042 = vunpack.c.l.bf16 %v914
        %v1043 = vunpack.c.l.bf16 %v915
        %v1044 = vunpack.c.l.bf16 %v916
        %v1045 = vunpack.c.l.bf16 %v917
        %v1046 = vunpack.c.l.bf16 %v918
        %v1047 = vunpack.c.l.bf16 %v919
        %v1048 = vunpack.c.l.bf16 %v920
        %v1049 = vunpack.c.l.bf16 %v921
        %v1050 = vunpack.c.l.bf16 %v922
        %v1051 = vunpack.c.l.bf16 %v923
        %v1052 = vunpack.c.l.bf16 %v924
        %v1053 = vunpack.c.l.bf16 %v925
        %v1054 = vunpack.c.l.bf16 %v926
        %v1055 = vunpack.c.l.bf16 %v927
        %v1056 = vunpack.c.l.bf16 %v928
        %v1057 = vunpack.c.l.bf16 %v929
        %v1058 = vunpack.c.l.bf16 %v930
        %v1059 = vunpack.c.l.bf16 %v931
        %v1060 = vunpack.c.l.bf16 %v932
        %v1061 = vunpack.c.l.bf16 %v933
        %v1062 = vunpack.c.l.bf16 %v934
        %v1063 = vunpack.c.l.bf16 %v935
        %v1064 = vunpack.c.l.bf16 %v936
        %v1065 = vunpack.c.l.bf16 %v937
        %v1066 = vunpack.c.l.bf16 %v938
        %v1067 = vunpack.c.l.bf16 %v939
        %v1068 = vunpack.c.l.bf16 %v940
        %v1069 = vunpack.c.l.bf16 %v941
        %v1070 = vunpack.c.l.bf16 %v942
        %v1071 = vunpack.c.l.bf16 %v943
        %v1072 = vunpack.c.l.bf16 %v944
        %v1073 = vunpack.c.l.bf16 %v945
        %v1074 = vunpack.c.l.bf16 %v946
        %v1075 = vunpack.c.l.bf16 %v947
        %v1076 = vunpack.c.l.bf16 %v948
        %v1077 = vunpack.c.l.bf16 %v949
        %v1078 = vunpack.c.l.bf16 %v950
        %v1079 = vunpack.c.l.bf16 %v951
        %v1080 = vunpack.c.l.bf16 %v952
        %v1081 = vunpack.c.l.bf16 %v953
        %v1082 = vunpack.c.l.bf16 %v954
        %v1083 = vunpack.c.l.bf16 %v955
        %v1084 = vunpack.c.l.bf16 %v956
        %v1085 = vunpack.c.l.bf16 %v957
        %v1086 = vunpack.c.l.bf16 %v958
        %v1087 = vunpack.c.l.bf16 %v959
        %v1088 = vunpack.c.l.bf16 %v960
        %v1089 = vunpack.c.l.bf16 %v961
        %v1090 = vunpack.c.l.bf16 %v962
        %v1091 = vunpack.c.l.bf16 %v963
        %v1092 = vunpack.c.l.bf16 %v964
        %v1093 = vunpack.c.l.bf16 %v965
        %v1094 = vunpack.c.l.bf16 %v966
        %v1095 = vunpack.c.l.bf16 %v967
        %v1096 = vunpack.c.l.bf16 %v968
        %v1097 = vunpack.c.l.bf16 %v969
        %v1098 = vunpack.c.l.bf16 %v970
        %v1099 = vunpack.c.l.bf16 %v971
        %v1100 = vunpack.c.l.bf16 %v972
        %v1101 = vunpack.c.l.bf16 %v973
        %v1102 = vld [vmem:[#allocation9] sm:$0xff]
        %v1103 = vld [vmem:[#allocation9 + $0x8] sm:$0xff]
        %v1104 = vld [vmem:[#allocation9 + $0x10] sm:$0xff]
        %v1105 = vld [vmem:[#allocation9 + $0x18] sm:$0xff]
        %v1106 = vld [vmem:[#allocation9 + $0x20] sm:$0xff]
        %v1107 = vld [vmem:[#allocation9 + $0x28] sm:$0xff]
        %v1108 = vld [vmem:[#allocation9 + $0x30] sm:$0xff]
        %v1109 = vld [vmem:[#allocation9 + $0x38] sm:$0xff]
        %v1110 = vld [vmem:[#allocation9 + $0x40] sm:$0xff]
        %v1111 = vld [vmem:[#allocation9 + $0x48] sm:$0xff]
        %v1112 = vld [vmem:[#allocation9 + $0x50] sm:$0xff]
        %v1113 = vld [vmem:[#allocation9 + $0x58] sm:$0xff]
        %v1114 = vld [vmem:[#allocation9 + $0x60] sm:$0xff]
        %v1115 = vld [vmem:[#allocation9 + $0x68] sm:$0xff]
        %v1116 = vld [vmem:[#allocation9 + $0x70] sm:$0xff]
        %v1117 = vld [vmem:[#allocation9 + $0x78] sm:$0xff]
        %v1118 = vld [vmem:[#allocation10] sm:$0xff]
        %v1119 = vld [vmem:[#allocation10 + $0x8] sm:$0xff]
        %v1120 = vld [vmem:[#allocation10 + $0x10] sm:$0xff]
        %v1121 = vld [vmem:[#allocation10 + $0x18] sm:$0xff]
        %v1122 = vld [vmem:[#allocation10 + $0x20] sm:$0xff]
        %v1123 = vld [vmem:[#allocation10 + $0x28] sm:$0xff]
        %v1124 = vld [vmem:[#allocation10 + $0x30] sm:$0xff]
        %v1125 = vld [vmem:[#allocation10 + $0x38] sm:$0xff]
        %v1126 = vld [vmem:[#allocation10 + $0x40] sm:$0xff]
        %v1127 = vld [vmem:[#allocation10 + $0x48] sm:$0xff]
        %v1128 = vld [vmem:[#allocation10 + $0x50] sm:$0xff]
        %v1129 = vld [vmem:[#allocation10 + $0x58] sm:$0xff]
        %v1130 = vld [vmem:[#allocation10 + $0x60] sm:$0xff]
        %v1131 = vld [vmem:[#allocation10 + $0x68] sm:$0xff]
        %v1132 = vld [vmem:[#allocation10 + $0x70] sm:$0xff]
        %v1133 = vld [vmem:[#allocation10 + $0x78] sm:$0xff]
        %s1134 = sld [smem:[#allocation3]]
        %s1135 = sld [smem:[#allocation2]]
        %v1136 = vld [vmem:[%s6] sm:$0xff]
        %v1137 = vld [vmem:[%s7] sm:$0x1]
        %v1139 = vlaneseq
        %v1140 = vshrl.u32 %v1139, 7
        %v1141 = vsub.s32 0, %v1140
        %v1142 = vrot.slane %v1137, %v1141
        %vm1144 = vcmask 64512
        %v1146 = vsel %vm1144, %v588, 0
        %1148 = vmatprep.subr.mxu0 0.0
        %1149 = vmatpush1.msra.mxu0 0.0
        %1150 = vmatprep.subr.mxu0 0.0
        %1151 = vmatpush1.msra.mxu0 0.0
        %1152 = vmatprep.subr.mxu0 0.0
        %1153 = vmatpush1.msra.mxu0 0.0
        %1154 = vmatprep.subr.mxu0 0.0
        %1155 = vmatpush1.msra.mxu0 0.0
        %1156 = vmatprep.subr.mxu0 0.0
        %1157 = vmatpush1.msra.mxu0 0.0
        %1158 = vmatprep.subr.mxu0 0.0
        %1159 = vmatpush1.msra.mxu0 0.0
        %1160 = vmatprep.subr.mxu0 0.0
        %1161 = vmatpush1.msra.mxu0 0.0
        %1162 = vmatprep.subr.mxu0 0.0
        %1163 = vmatpush1.msra.mxu0 0.0
        %1164 = vmatprep.subr.mxu0 0.0
        %1165 = vmatpush1.msra.mxu0 0.0
        %1166 = vmatprep.subr.mxu0 0.0
        %1167 = vmatpush1.msra.mxu0 0.0
        %1168 = vmatprep.subr.mxu0 0.0
        %1169 = vmatpush1.msra.mxu0 0.0
        %1170 = vmatprep.subr.mxu0 0.0
        %1171 = vmatpush1.msra.mxu0 0.0
        %1172 = vmatprep.subr.mxu0 0.0
        %1173 = vmatpush1.msra.mxu0 0.0
        %1174 = vmatprep.subr.mxu0 0.0
        %1175 = vmatpush1.msra.mxu0 0.0
        %1176 = vmatprep.subr.mxu0 0.0
        %1177 = vmatpush1.msra.mxu0 0.0
        %1178 = vmatprep.subr.mxu0 0.0
        %1179 = vmatpush1.msra.mxu0 %v1136
        %1180 = vmatprep.subr.mxu0 0.0
        %1181 = vmatpush2.msra.mxu0 0.0
        %1182 = vmatprep.subr.mxu0 0.0
        %1183 = vmatpush2.msra.mxu0 0.0
        %1184 = vmatprep.subr.mxu0 0.0
        %1185 = vmatpush2.msra.mxu0 0.0
        %1186 = vmatprep.subr.mxu0 0.0
        %1187 = vmatpush2.msra.mxu0 0.0
        %1188 = vmatprep.subr.mxu0 0.0
        %1189 = vmatpush2.msra.mxu0 0.0
        %1190 = vmatprep.subr.mxu0 0.0
        %1191 = vmatpush2.msra.mxu0 0.0
        %1192 = vmatprep.subr.mxu0 0.0
        %1193 = vmatpush2.msra.mxu0 0.0
        %1194 = vmatprep.subr.mxu0 0.0
        %1195 = vmatpush2.msra.mxu0 0.0
        %1196 = vmatprep.subr.mxu0 0.0
        %1197 = vmatpush2.msra.mxu0 0.0
        %1198 = vmatprep.subr.mxu0 0.0
        %1199 = vmatpush2.msra.mxu0 0.0
        %1200 = vmatprep.subr.mxu0 0.0
        %1201 = vmatpush2.msra.mxu0 0.0
        %1202 = vmatprep.subr.mxu0 0.0
        %1203 = vmatpush2.msra.mxu0 0.0
        %1204 = vmatprep.subr.mxu0 0.0
        %1205 = vmatpush2.msra.mxu0 0.0
        %1206 = vmatprep.subr.mxu0 0.0
        %1207 = vmatpush2.msra.mxu0 0.0
        %1208 = vmatprep.subr.mxu0 0.0
        %1209 = vmatpush2.msra.mxu0 0.0
        %1210 = vmatprep.subr.mxu0 0.0
        %1211 = vmatpush2.msra.mxu0 0.0
        %1212 = vmatprep.mubr.f32.mxu0 0.0
        %1213 = vmatmul.mubr.f32.gmra.mxu0 %v1146
        %v1214 = vpop.f32.mrf.mxu0
        %v1215 = vadd.f32 %v1142, %v1214
        %v1216 = vpop.f32.mrf.mxu0
        %1217 = vdwg.mxu0
        %v1219 = vcombine.high %v589, %v589
        %v1221 = vunpack.c.l.s4 1966171168
        %v1222 = vunpack.c.0.s8 %v1221
        %v1223 = vlaneseq
        %v1224 = vshrl.u32 %v1223, 7
        %v1225 = vsub.s32 %v1222, %v1224
        %v1226 = vrot.slane %v589, %v1225
        %v1228 = vunpack.c.l.s4 1966171168
        %v1229 = vunpack.c.0.s8 %v1228
        %v1230 = vlaneseq
        %v1231 = vshrl.u32 %v1230, 7
        %v1232 = vsub.s32 %v1229, %v1231
        %v1233 = vrot.slane %v1219, %v1232
        %v1234 = vcombine.high %v1226, %v1226
        %v1235 = vcombine.high %v1233, %v1233
        %v1237 = vunpack.c.l.s4 1966171168
        %v1238 = vunpack.c.0.s8 %v1237
        %v1239 = vlaneseq
        %v1240 = vshrl.u32 %v1239, 7
        %v1241 = vsub.s32 %v1238, %v1240
        %v1242 = vrot.slane %v1226, %v1241
        %v1244 = vunpack.c.l.s4 1966171168
        %v1245 = vunpack.c.0.s8 %v1244
        %v1246 = vlaneseq
        %v1247 = vshrl.u32 %v1246, 7
        %v1248 = vsub.s32 %v1245, %v1247
        %v1249 = vrot.slane %v1233, %v1248
        %v1251 = vunpack.c.l.s4 1966171168
        %v1252 = vunpack.c.0.s8 %v1251
        %v1253 = vlaneseq
        %v1254 = vshrl.u32 %v1253, 7
        %v1255 = vsub.s32 %v1252, %v1254
        %v1256 = vrot.slane %v1234, %v1255
        %v1258 = vunpack.c.l.s4 1966171168
        %v1259 = vunpack.c.0.s8 %v1258
        %v1260 = vlaneseq
        %v1261 = vshrl.u32 %v1260, 7
        %v1262 = vsub.s32 %v1259, %v1261
        %v1263 = vrot.slane %v1235, %v1262
        %v1264 = vcombine.high %v1242, %v1242
        %v1265 = vcombine.high %v1249, %v1249
        %v1266 = vcombine.high %v1256, %v1256
        %v1267 = vcombine.high %v1263, %v1263
        %v1268 = vmul.f32 %v1118, %v974
        %v1269 = vmul.f32 %v1119, %v975
        %v1270 = vmul.f32 %v1120, %v976
        %v1271 = vmul.f32 %v1121, %v977
        %v1272 = vmul.f32 %v1122, %v978
        %v1273 = vmul.f32 %v1123, %v979
        %v1274 = vmul.f32 %v1124, %v980
        %v1275 = vmul.f32 %v1125, %v981
        %v1276 = vmul.f32 %v1126, %v982
        %v1277 = vmul.f32 %v1127, %v983
        %v1278 = vmul.f32 %v1128, %v984
        %v1279 = vmul.f32 %v1129, %v985
        %v1280 = vmul.f32 %v1130, %v986
        %v1281 = vmul.f32 %v1131, %v987
        %v1282 = vmul.f32 %v1132, %v988
        %v1283 = vmul.f32 %v1133, %v989
        %v1284 = vmul.f32 %v1118, %v990
        %v1285 = vmul.f32 %v1119, %v991
        %v1286 = vmul.f32 %v1120, %v992
        %v1287 = vmul.f32 %v1121, %v993
        %v1288 = vmul.f32 %v1122, %v994
        %v1289 = vmul.f32 %v1123, %v995
        %v1290 = vmul.f32 %v1124, %v996
        %v1291 = vmul.f32 %v1125, %v997
        %v1292 = vmul.f32 %v1126, %v998
        %v1293 = vmul.f32 %v1127, %v999
        %v1294 = vmul.f32 %v1128, %v1000
        %v1295 = vmul.f32 %v1129, %v1001
        %v1296 = vmul.f32 %v1130, %v1002
        %v1297 = vmul.f32 %v1131, %v1003
        %v1298 = vmul.f32 %v1132, %v1004
        %v1299 = vmul.f32 %v1133, %v1005
        %v1300 = vmul.f32 %v1118, %v1006
        %v1301 = vmul.f32 %v1119, %v1007
        %v1302 = vmul.f32 %v1120, %v1008
        %v1303 = vmul.f32 %v1121, %v1009
        %v1304 = vmul.f32 %v1122, %v1010
        %v1305 = vmul.f32 %v1123, %v1011
        %v1306 = vmul.f32 %v1124, %v1012
        %v1307 = vmul.f32 %v1125, %v1013
        %v1308 = vmul.f32 %v1126, %v1014
        %v1309 = vmul.f32 %v1127, %v1015
        %v1310 = vmul.f32 %v1128, %v1016
        %v1311 = vmul.f32 %v1129, %v1017
        %v1312 = vmul.f32 %v1130, %v1018
        %v1313 = vmul.f32 %v1131, %v1019
        %v1314 = vmul.f32 %v1132, %v1020
        %v1315 = vmul.f32 %v1133, %v1021
        %v1316 = vmul.f32 %v1118, %v1022
        %v1317 = vmul.f32 %v1119, %v1023
        %v1318 = vmul.f32 %v1120, %v1024
        %v1319 = vmul.f32 %v1121, %v1025
        %v1320 = vmul.f32 %v1122, %v1026
        %v1321 = vmul.f32 %v1123, %v1027
        %v1322 = vmul.f32 %v1124, %v1028
        %v1323 = vmul.f32 %v1125, %v1029
        %v1324 = vmul.f32 %v1126, %v1030
        %v1325 = vmul.f32 %v1127, %v1031
        %v1326 = vmul.f32 %v1128, %v1032
        %v1327 = vmul.f32 %v1129, %v1033
        %v1328 = vmul.f32 %v1130, %v1034
        %v1329 = vmul.f32 %v1131, %v1035
        %v1330 = vmul.f32 %v1132, %v1036
        %v1331 = vmul.f32 %v1133, %v1037
        %v1332 = vmul.f32 %v1118, %v1038
        %v1333 = vmul.f32 %v1119, %v1039
        %v1334 = vmul.f32 %v1120, %v1040
        %v1335 = vmul.f32 %v1121, %v1041
        %v1336 = vmul.f32 %v1122, %v1042
        %v1337 = vmul.f32 %v1123, %v1043
        %v1338 = vmul.f32 %v1124, %v1044
        %v1339 = vmul.f32 %v1125, %v1045
        %v1340 = vmul.f32 %v1126, %v1046
        %v1341 = vmul.f32 %v1127, %v1047
        %v1342 = vmul.f32 %v1128, %v1048
        %v1343 = vmul.f32 %v1129, %v1049
        %v1344 = vmul.f32 %v1130, %v1050
        %v1345 = vmul.f32 %v1131, %v1051
        %v1346 = vmul.f32 %v1132, %v1052
        %v1347 = vmul.f32 %v1133, %v1053
        %v1348 = vmul.f32 %v1118, %v1054
        %v1349 = vmul.f32 %v1119, %v1055
        %v1350 = vmul.f32 %v1120, %v1056
        %v1351 = vmul.f32 %v1121, %v1057
        %v1352 = vmul.f32 %v1122, %v1058
        %v1353 = vmul.f32 %v1123, %v1059
        %v1354 = vmul.f32 %v1124, %v1060
        %v1355 = vmul.f32 %v1125, %v1061
        %v1356 = vmul.f32 %v1126, %v1062
        %v1357 = vmul.f32 %v1127, %v1063
        %v1358 = vmul.f32 %v1128, %v1064
        %v1359 = vmul.f32 %v1129, %v1065
        %v1360 = vmul.f32 %v1130, %v1066
        %v1361 = vmul.f32 %v1131, %v1067
        %v1362 = vmul.f32 %v1132, %v1068
        %v1363 = vmul.f32 %v1133, %v1069
        %v1364 = vmul.f32 %v1118, %v1070
        %v1365 = vmul.f32 %v1119, %v1071
        %v1366 = vmul.f32 %v1120, %v1072
        %v1367 = vmul.f32 %v1121, %v1073
        %v1368 = vmul.f32 %v1122, %v1074
        %v1369 = vmul.f32 %v1123, %v1075
        %v1370 = vmul.f32 %v1124, %v1076
        %v1371 = vmul.f32 %v1125, %v1077
        %v1372 = vmul.f32 %v1126, %v1078
        %v1373 = vmul.f32 %v1127, %v1079
        %v1374 = vmul.f32 %v1128, %v1080
        %v1375 = vmul.f32 %v1129, %v1081
        %v1376 = vmul.f32 %v1130, %v1082
        %v1377 = vmul.f32 %v1131, %v1083
        %v1378 = vmul.f32 %v1132, %v1084
        %v1379 = vmul.f32 %v1133, %v1085
        %v1380 = vmul.f32 %v1118, %v1086
        %v1381 = vmul.f32 %v1119, %v1087
        %v1382 = vmul.f32 %v1120, %v1088
        %v1383 = vmul.f32 %v1121, %v1089
        %v1384 = vmul.f32 %v1122, %v1090
        %v1385 = vmul.f32 %v1123, %v1091
        %v1386 = vmul.f32 %v1124, %v1092
        %v1387 = vmul.f32 %v1125, %v1093
        %v1388 = vmul.f32 %v1126, %v1094
        %v1389 = vmul.f32 %v1127, %v1095
        %v1390 = vmul.f32 %v1128, %v1096
        %v1391 = vmul.f32 %v1129, %v1097
        %v1392 = vmul.f32 %v1130, %v1098
        %v1393 = vmul.f32 %v1131, %v1099
        %v1394 = vmul.f32 %v1132, %v1100
        %v1395 = vmul.f32 %v1133, %v1101
        %v1396 = vadd.f32 %v1102, %v1268
        %v1397 = vadd.f32 %v1103, %v1269
        %v1398 = vadd.f32 %v1104, %v1270
        %v1399 = vadd.f32 %v1105, %v1271
        %v1400 = vadd.f32 %v1106, %v1272
        %v1401 = vadd.f32 %v1107, %v1273
        %v1402 = vadd.f32 %v1108, %v1274
        %v1403 = vadd.f32 %v1109, %v1275
        %v1404 = vadd.f32 %v1110, %v1276
        %v1405 = vadd.f32 %v1111, %v1277
        %v1406 = vadd.f32 %v1112, %v1278
        %v1407 = vadd.f32 %v1113, %v1279
        %v1408 = vadd.f32 %v1114, %v1280
        %v1409 = vadd.f32 %v1115, %v1281
        %v1410 = vadd.f32 %v1116, %v1282
        %v1411 = vadd.f32 %v1117, %v1283
        %v1412 = vadd.f32 %v1102, %v1284
        %v1413 = vadd.f32 %v1103, %v1285
        %v1414 = vadd.f32 %v1104, %v1286
        %v1415 = vadd.f32 %v1105, %v1287
        %v1416 = vadd.f32 %v1106, %v1288
        %v1417 = vadd.f32 %v1107, %v1289
        %v1418 = vadd.f32 %v1108, %v1290
        %v1419 = vadd.f32 %v1109, %v1291
        %v1420 = vadd.f32 %v1110, %v1292
        %v1421 = vadd.f32 %v1111, %v1293
        %v1422 = vadd.f32 %v1112, %v1294
        %v1423 = vadd.f32 %v1113, %v1295
        %v1424 = vadd.f32 %v1114, %v1296
        %v1425 = vadd.f32 %v1115, %v1297
        %v1426 = vadd.f32 %v1116, %v1298
        %v1427 = vadd.f32 %v1117, %v1299
        %v1428 = vadd.f32 %v1102, %v1300
        %v1429 = vadd.f32 %v1103, %v1301
        %v1430 = vadd.f32 %v1104, %v1302
        %v1431 = vadd.f32 %v1105, %v1303
        %v1432 = vadd.f32 %v1106, %v1304
        %v1433 = vadd.f32 %v1107, %v1305
        %v1434 = vadd.f32 %v1108, %v1306
        %v1435 = vadd.f32 %v1109, %v1307
        %v1436 = vadd.f32 %v1110, %v1308
        %v1437 = vadd.f32 %v1111, %v1309
        %v1438 = vadd.f32 %v1112, %v1310
        %v1439 = vadd.f32 %v1113, %v1311
        %v1440 = vadd.f32 %v1114, %v1312
        %v1441 = vadd.f32 %v1115, %v1313
        %v1442 = vadd.f32 %v1116, %v1314
        %v1443 = vadd.f32 %v1117, %v1315
        %v1444 = vadd.f32 %v1102, %v1316
        %v1445 = vadd.f32 %v1103, %v1317
        %v1446 = vadd.f32 %v1104, %v1318
        %v1447 = vadd.f32 %v1105, %v1319
        %v1448 = vadd.f32 %v1106, %v1320
        %v1449 = vadd.f32 %v1107, %v1321
        %v1450 = vadd.f32 %v1108, %v1322
        %v1451 = vadd.f32 %v1109, %v1323
        %v1452 = vadd.f32 %v1110, %v1324
        %v1453 = vadd.f32 %v1111, %v1325
        %v1454 = vadd.f32 %v1112, %v1326
        %v1455 = vadd.f32 %v1113, %v1327
        %v1456 = vadd.f32 %v1114, %v1328
        %v1457 = vadd.f32 %v1115, %v1329
        %v1458 = vadd.f32 %v1116, %v1330
        %v1459 = vadd.f32 %v1117, %v1331
        %v1460 = vadd.f32 %v1102, %v1332
        %v1461 = vadd.f32 %v1103, %v1333
        %v1462 = vadd.f32 %v1104, %v1334
        %v1463 = vadd.f32 %v1105, %v1335
        %v1464 = vadd.f32 %v1106, %v1336
        %v1465 = vadd.f32 %v1107, %v1337
        %v1466 = vadd.f32 %v1108, %v1338
        %v1467 = vadd.f32 %v1109, %v1339
        %v1468 = vadd.f32 %v1110, %v1340
        %v1469 = vadd.f32 %v1111, %v1341
        %v1470 = vadd.f32 %v1112, %v1342
        %v1471 = vadd.f32 %v1113, %v1343
        %v1472 = vadd.f32 %v1114, %v1344
        %v1473 = vadd.f32 %v1115, %v1345
        %v1474 = vadd.f32 %v1116, %v1346
        %v1475 = vadd.f32 %v1117, %v1347
        %v1476 = vadd.f32 %v1102, %v1348
        %v1477 = vadd.f32 %v1103, %v1349
        %v1478 = vadd.f32 %v1104, %v1350
        %v1479 = vadd.f32 %v1105, %v1351
        %v1480 = vadd.f32 %v1106, %v1352
        %v1481 = vadd.f32 %v1107, %v1353
        %v1482 = vadd.f32 %v1108, %v1354
        %v1483 = vadd.f32 %v1109, %v1355
        %v1484 = vadd.f32 %v1110, %v1356
        %v1485 = vadd.f32 %v1111, %v1357
        %v1486 = vadd.f32 %v1112, %v1358
        %v1487 = vadd.f32 %v1113, %v1359
        %v1488 = vadd.f32 %v1114, %v1360
        %v1489 = vadd.f32 %v1115, %v1361
        %v1490 = vadd.f32 %v1116, %v1362
        %v1491 = vadd.f32 %v1117, %v1363
        %v1492 = vadd.f32 %v1102, %v1364
        %v1493 = vadd.f32 %v1103, %v1365
        %v1494 = vadd.f32 %v1104, %v1366
        %v1495 = vadd.f32 %v1105, %v1367
        %v1496 = vadd.f32 %v1106, %v1368
        %v1497 = vadd.f32 %v1107, %v1369
        %v1498 = vadd.f32 %v1108, %v1370
        %v1499 = vadd.f32 %v1109, %v1371
        %v1500 = vadd.f32 %v1110, %v1372
        %v1501 = vadd.f32 %v1111, %v1373
        %v1502 = vadd.f32 %v1112, %v1374
        %v1503 = vadd.f32 %v1113, %v1375
        %v1504 = vadd.f32 %v1114, %v1376
        %v1505 = vadd.f32 %v1115, %v1377
        %v1506 = vadd.f32 %v1116, %v1378
        %v1507 = vadd.f32 %v1117, %v1379
        %v1508 = vadd.f32 %v1102, %v1380
        %v1509 = vadd.f32 %v1103, %v1381
        %v1510 = vadd.f32 %v1104, %v1382
        %v1511 = vadd.f32 %v1105, %v1383
        %v1512 = vadd.f32 %v1106, %v1384
        %v1513 = vadd.f32 %v1107, %v1385
        %v1514 = vadd.f32 %v1108, %v1386
        %v1515 = vadd.f32 %v1109, %v1387
        %v1516 = vadd.f32 %v1110, %v1388
        %v1517 = vadd.f32 %v1111, %v1389
        %v1518 = vadd.f32 %v1112, %v1390
        %v1519 = vadd.f32 %v1113, %v1391
        %v1520 = vadd.f32 %v1114, %v1392
        %v1521 = vadd.f32 %v1115, %v1393
        %v1522 = vadd.f32 %v1116, %v1394
        %v1523 = vadd.f32 %v1117, %v1395
        %v1524 = vlaneseq
        %v1525 = vshrl.u32 %v1524, 7
        %v1526 = vsub.s32 0, %v1525
        %v1527 = vrot.slane %v1242, %v1526
        %v1528 = vlaneseq
        %v1529 = vshrl.u32 %v1528, 7
        %v1530 = vsub.s32 0, %v1529
        %v1531 = vrot.slane %v1256, %v1530
        %v1532 = vlaneseq
        %v1533 = vshrl.u32 %v1532, 7
        %v1534 = vsub.s32 0, %v1533
        %v1535 = vrot.slane %v1264, %v1534
        %v1536 = vlaneseq
        %v1537 = vshrl.u32 %v1536, 7
        %v1538 = vsub.s32 0, %v1537
        %v1539 = vrot.slane %v1266, %v1538
        %v1540 = vlaneseq
        %v1541 = vshrl.u32 %v1540, 7
        %v1542 = vsub.s32 0, %v1541
        %v1543 = vrot.slane %v1249, %v1542
        %v1544 = vlaneseq
        %v1545 = vshrl.u32 %v1544, 7
        %v1546 = vsub.s32 0, %v1545
        %v1547 = vrot.slane %v1263, %v1546
        %v1548 = vlaneseq
        %v1549 = vshrl.u32 %v1548, 7
        %v1550 = vsub.s32 0, %v1549
        %v1551 = vrot.slane %v1265, %v1550
        %v1552 = vlaneseq
        %v1553 = vshrl.u32 %v1552, 7
        %v1554 = vsub.s32 0, %v1553
        %v1555 = vrot.slane %v1267, %v1554
        %v1564 = vmul.f32 %v1396, %v1527
        %v1565 = vmul.f32 %v1397, %v1527
        %v1566 = vmul.f32 %v1398, %v1527
        %v1567 = vmul.f32 %v1399, %v1527
        %v1568 = vmul.f32 %v1400, %v1527
        %v1569 = vmul.f32 %v1401, %v1527
        %v1570 = vmul.f32 %v1402, %v1527
        %v1571 = vmul.f32 %v1403, %v1527
        %v1572 = vmul.f32 %v1404, %v1527
        %v1573 = vmul.f32 %v1405, %v1527
        %v1574 = vmul.f32 %v1406, %v1527
        %v1575 = vmul.f32 %v1407, %v1527
        %v1576 = vmul.f32 %v1408, %v1527
        %v1577 = vmul.f32 %v1409, %v1527
        %v1578 = vmul.f32 %v1410, %v1527
        %v1579 = vmul.f32 %v1411, %v1527
        %v1580 = vmul.f32 %v1412, %v1531
        %v1581 = vmul.f32 %v1413, %v1531
        %v1582 = vmul.f32 %v1414, %v1531
        %v1583 = vmul.f32 %v1415, %v1531
        %v1584 = vmul.f32 %v1416, %v1531
        %v1585 = vmul.f32 %v1417, %v1531
        %v1586 = vmul.f32 %v1418, %v1531
        %v1587 = vmul.f32 %v1419, %v1531
        %v1588 = vmul.f32 %v1420, %v1531
        %v1589 = vmul.f32 %v1421, %v1531
        %v1590 = vmul.f32 %v1422, %v1531
        %v1591 = vmul.f32 %v1423, %v1531
        %v1592 = vmul.f32 %v1424, %v1531
        %v1593 = vmul.f32 %v1425, %v1531
        %v1594 = vmul.f32 %v1426, %v1531
        %v1595 = vmul.f32 %v1427, %v1531
        %v1596 = vmul.f32 %v1428, %v1535
        %v1597 = vmul.f32 %v1429, %v1535
        %v1598 = vmul.f32 %v1430, %v1535
        %v1599 = vmul.f32 %v1431, %v1535
        %v1600 = vmul.f32 %v1432, %v1535
        %v1601 = vmul.f32 %v1433, %v1535
        %v1602 = vmul.f32 %v1434, %v1535
        %v1603 = vmul.f32 %v1435, %v1535
        %v1604 = vmul.f32 %v1436, %v1535
        %v1605 = vmul.f32 %v1437, %v1535
        %v1606 = vmul.f32 %v1438, %v1535
        %v1607 = vmul.f32 %v1439, %v1535
        %v1608 = vmul.f32 %v1440, %v1535
        %v1609 = vmul.f32 %v1441, %v1535
        %v1610 = vmul.f32 %v1442, %v1535
        %v1611 = vmul.f32 %v1443, %v1535
        %v1612 = vmul.f32 %v1444, %v1539
        %v1613 = vmul.f32 %v1445, %v1539
        %v1614 = vmul.f32 %v1446, %v1539
        %v1615 = vmul.f32 %v1447, %v1539
        %v1616 = vmul.f32 %v1448, %v1539
        %v1617 = vmul.f32 %v1449, %v1539
        %v1618 = vmul.f32 %v1450, %v1539
        %v1619 = vmul.f32 %v1451, %v1539
        %v1620 = vmul.f32 %v1452, %v1539
        %v1621 = vmul.f32 %v1453, %v1539
        %v1622 = vmul.f32 %v1454, %v1539
        %v1623 = vmul.f32 %v1455, %v1539
        %v1624 = vmul.f32 %v1456, %v1539
        %v1625 = vmul.f32 %v1457, %v1539
        %v1626 = vmul.f32 %v1458, %v1539
        %v1627 = vmul.f32 %v1459, %v1539
        %v1628 = vmul.f32 %v1460, %v1543
        %v1629 = vmul.f32 %v1461, %v1543
        %v1630 = vmul.f32 %v1462, %v1543
        %v1631 = vmul.f32 %v1463, %v1543
        %v1632 = vmul.f32 %v1464, %v1543
        %v1633 = vmul.f32 %v1465, %v1543
        %v1634 = vmul.f32 %v1466, %v1543
        %v1635 = vmul.f32 %v1467, %v1543
        %v1636 = vmul.f32 %v1468, %v1543
        %v1637 = vmul.f32 %v1469, %v1543
        %v1638 = vmul.f32 %v1470, %v1543
        %v1639 = vmul.f32 %v1471, %v1543
        %v1640 = vmul.f32 %v1472, %v1543
        %v1641 = vmul.f32 %v1473, %v1543
        %v1642 = vmul.f32 %v1474, %v1543
        %v1643 = vmul.f32 %v1475, %v1543
        %v1644 = vmul.f32 %v1476, %v1547
        %v1645 = vmul.f32 %v1477, %v1547
        %v1646 = vmul.f32 %v1478, %v1547
        %v1647 = vmul.f32 %v1479, %v1547
        %v1648 = vmul.f32 %v1480, %v1547
        %v1649 = vmul.f32 %v1481, %v1547
        %v1650 = vmul.f32 %v1482, %v1547
        %v1651 = vmul.f32 %v1483, %v1547
        %v1652 = vmul.f32 %v1484, %v1547
        %v1653 = vmul.f32 %v1485, %v1547
        %v1654 = vmul.f32 %v1486, %v1547
        %v1655 = vmul.f32 %v1487, %v1547
        %v1656 = vmul.f32 %v1488, %v1547
        %v1657 = vmul.f32 %v1489, %v1547
        %v1658 = vmul.f32 %v1490, %v1547
        %v1659 = vmul.f32 %v1491, %v1547
        %v1660 = vmul.f32 %v1492, %v1551
        %v1661 = vmul.f32 %v1493, %v1551
        %v1662 = vmul.f32 %v1494, %v1551
        %v1663 = vmul.f32 %v1495, %v1551
        %v1664 = vmul.f32 %v1496, %v1551
        %v1665 = vmul.f32 %v1497, %v1551
        %v1666 = vmul.f32 %v1498, %v1551
        %v1667 = vmul.f32 %v1499, %v1551
        %v1668 = vmul.f32 %v1500, %v1551
        %v1669 = vmul.f32 %v1501, %v1551
        %v1670 = vmul.f32 %v1502, %v1551
        %v1671 = vmul.f32 %v1503, %v1551
        %v1672 = vmul.f32 %v1504, %v1551
        %v1673 = vmul.f32 %v1505, %v1551
        %v1674 = vmul.f32 %v1506, %v1551
        %v1675 = vmul.f32 %v1507, %v1551
        %v1676 = vmul.f32 %v1508, %v1555
        %v1677 = vmul.f32 %v1509, %v1555
        %v1678 = vmul.f32 %v1510, %v1555
        %v1679 = vmul.f32 %v1511, %v1555
        %v1680 = vmul.f32 %v1512, %v1555
        %v1681 = vmul.f32 %v1513, %v1555
        %v1682 = vmul.f32 %v1514, %v1555
        %v1683 = vmul.f32 %v1515, %v1555
        %v1684 = vmul.f32 %v1516, %v1555
        %v1685 = vmul.f32 %v1517, %v1555
        %v1686 = vmul.f32 %v1518, %v1555
        %v1687 = vmul.f32 %v1519, %v1555
        %v1688 = vmul.f32 %v1520, %v1555
        %v1689 = vmul.f32 %v1521, %v1555
        %v1690 = vmul.f32 %v1522, %v1555
        %v1691 = vmul.f32 %v1523, %v1555
        %1692 = vadd.xlane.f32.xlu0 %v1564
        %v1693 = vpop.xlane.xlu0 %1692
        %1694 = vadd.xlane.f32.xlu0 %v1565
        %v1695 = vpop.xlane.xlu0 %1694
        %1696 = vadd.xlane.f32.xlu0 %v1566
        %v1697 = vpop.xlane.xlu0 %1696
        %1698 = vadd.xlane.f32.xlu0 %v1567
        %v1699 = vpop.xlane.xlu0 %1698
        %1700 = vadd.xlane.f32.xlu0 %v1568
        %v1701 = vpop.xlane.xlu0 %1700
        %1702 = vadd.xlane.f32.xlu0 %v1569
        %v1703 = vpop.xlane.xlu0 %1702
        %1704 = vadd.xlane.f32.xlu0 %v1570
        %v1705 = vpop.xlane.xlu0 %1704
        %1706 = vadd.xlane.f32.xlu0 %v1571
        %v1707 = vpop.xlane.xlu0 %1706
        %1708 = vadd.xlane.f32.xlu0 %v1572
        %v1709 = vpop.xlane.xlu0 %1708
        %1710 = vadd.xlane.f32.xlu0 %v1573
        %v1711 = vpop.xlane.xlu0 %1710
        %1712 = vadd.xlane.f32.xlu0 %v1574
        %v1713 = vpop.xlane.xlu0 %1712
        %1714 = vadd.xlane.f32.xlu0 %v1575
        %v1715 = vpop.xlane.xlu0 %1714
        %1716 = vadd.xlane.f32.xlu0 %v1576
        %v1717 = vpop.xlane.xlu0 %1716
        %1718 = vadd.xlane.f32.xlu0 %v1577
        %v1719 = vpop.xlane.xlu0 %1718
        %1720 = vadd.xlane.f32.xlu0 %v1578
        %v1721 = vpop.xlane.xlu0 %1720
        %1722 = vadd.xlane.f32.xlu0 %v1579
        %v1723 = vpop.xlane.xlu0 %1722
        %1724 = vadd.xlane.f32.xlu0 %v1580
        %v1725 = vpop.xlane.xlu0 %1724
        %1726 = vadd.xlane.f32.xlu0 %v1581
        %v1727 = vpop.xlane.xlu0 %1726
        %1728 = vadd.xlane.f32.xlu0 %v1582
        %v1729 = vpop.xlane.xlu0 %1728
        %1730 = vadd.xlane.f32.xlu0 %v1583
        %v1731 = vpop.xlane.xlu0 %1730
        %1732 = vadd.xlane.f32.xlu0 %v1584
        %v1733 = vpop.xlane.xlu0 %1732
        %1734 = vadd.xlane.f32.xlu0 %v1585
        %v1735 = vpop.xlane.xlu0 %1734
        %1736 = vadd.xlane.f32.xlu0 %v1586
        %v1737 = vpop.xlane.xlu0 %1736
        %1738 = vadd.xlane.f32.xlu0 %v1587
        %v1739 = vpop.xlane.xlu0 %1738
        %1740 = vadd.xlane.f32.xlu0 %v1588
        %v1741 = vpop.xlane.xlu0 %1740
        %1742 = vadd.xlane.f32.xlu0 %v1589
        %v1743 = vpop.xlane.xlu0 %1742
        %1744 = vadd.xlane.f32.xlu0 %v1590
        %v1745 = vpop.xlane.xlu0 %1744
        %1746 = vadd.xlane.f32.xlu0 %v1591
        %v1747 = vpop.xlane.xlu0 %1746
        %1748 = vadd.xlane.f32.xlu0 %v1592
        %v1749 = vpop.xlane.xlu0 %1748
        %1750 = vadd.xlane.f32.xlu0 %v1593
        %v1751 = vpop.xlane.xlu0 %1750
        %1752 = vadd.xlane.f32.xlu0 %v1594
        %v1753 = vpop.xlane.xlu0 %1752
        %1754 = vadd.xlane.f32.xlu0 %v1595
        %v1755 = vpop.xlane.xlu0 %1754
        %1756 = vadd.xlane.f32.xlu0 %v1596
        %v1757 = vpop.xlane.xlu0 %1756
        %1758 = vadd.xlane.f32.xlu0 %v1597
        %v1759 = vpop.xlane.xlu0 %1758
        %1760 = vadd.xlane.f32.xlu0 %v1598
        %v1761 = vpop.xlane.xlu0 %1760
        %1762 = vadd.xlane.f32.xlu0 %v1599
        %v1763 = vpop.xlane.xlu0 %1762
        %1764 = vadd.xlane.f32.xlu0 %v1600
        %v1765 = vpop.xlane.xlu0 %1764
        %1766 = vadd.xlane.f32.xlu0 %v1601
        %v1767 = vpop.xlane.xlu0 %1766
        %1768 = vadd.xlane.f32.xlu0 %v1602
        %v1769 = vpop.xlane.xlu0 %1768
        %1770 = vadd.xlane.f32.xlu0 %v1603
        %v1771 = vpop.xlane.xlu0 %1770
        %1772 = vadd.xlane.f32.xlu0 %v1604
        %v1773 = vpop.xlane.xlu0 %1772
        %1774 = vadd.xlane.f32.xlu0 %v1605
        %v1775 = vpop.xlane.xlu0 %1774
        %1776 = vadd.xlane.f32.xlu0 %v1606
        %v1777 = vpop.xlane.xlu0 %1776
        %1778 = vadd.xlane.f32.xlu0 %v1607
        %v1779 = vpop.xlane.xlu0 %1778
        %1780 = vadd.xlane.f32.xlu0 %v1608
        %v1781 = vpop.xlane.xlu0 %1780
        %1782 = vadd.xlane.f32.xlu0 %v1609
        %v1783 = vpop.xlane.xlu0 %1782
        %1784 = vadd.xlane.f32.xlu0 %v1610
        %v1785 = vpop.xlane.xlu0 %1784
        %1786 = vadd.xlane.f32.xlu0 %v1611
        %v1787 = vpop.xlane.xlu0 %1786
        %1788 = vadd.xlane.f32.xlu0 %v1612
        %v1789 = vpop.xlane.xlu0 %1788
        %1790 = vadd.xlane.f32.xlu0 %v1613
        %v1791 = vpop.xlane.xlu0 %1790
        %1792 = vadd.xlane.f32.xlu0 %v1614
        %v1793 = vpop.xlane.xlu0 %1792
        %1794 = vadd.xlane.f32.xlu0 %v1615
        %v1795 = vpop.xlane.xlu0 %1794
        %1796 = vadd.xlane.f32.xlu0 %v1616
        %v1797 = vpop.xlane.xlu0 %1796
        %1798 = vadd.xlane.f32.xlu0 %v1617
        %v1799 = vpop.xlane.xlu0 %1798
        %1800 = vadd.xlane.f32.xlu0 %v1618
        %v1801 = vpop.xlane.xlu0 %1800
        %1802 = vadd.xlane.f32.xlu0 %v1619
        %v1803 = vpop.xlane.xlu0 %1802
        %1804 = vadd.xlane.f32.xlu0 %v1620
        %v1805 = vpop.xlane.xlu0 %1804
        %1806 = vadd.xlane.f32.xlu0 %v1621
        %v1807 = vpop.xlane.xlu0 %1806
        %1808 = vadd.xlane.f32.xlu0 %v1622
        %v1809 = vpop.xlane.xlu0 %1808
        %1810 = vadd.xlane.f32.xlu0 %v1623
        %v1811 = vpop.xlane.xlu0 %1810
        %1812 = vadd.xlane.f32.xlu0 %v1624
        %v1813 = vpop.xlane.xlu0 %1812
        %1814 = vadd.xlane.f32.xlu0 %v1625
        %v1815 = vpop.xlane.xlu0 %1814
        %1816 = vadd.xlane.f32.xlu0 %v1626
        %v1817 = vpop.xlane.xlu0 %1816
        %1818 = vadd.xlane.f32.xlu0 %v1627
        %v1819 = vpop.xlane.xlu0 %1818
        %1820 = vadd.xlane.f32.xlu0 %v1628
        %v1821 = vpop.xlane.xlu0 %1820
        %1822 = vadd.xlane.f32.xlu0 %v1629
        %v1823 = vpop.xlane.xlu0 %1822
        %1824 = vadd.xlane.f32.xlu0 %v1630
        %v1825 = vpop.xlane.xlu0 %1824
        %1826 = vadd.xlane.f32.xlu0 %v1631
        %v1827 = vpop.xlane.xlu0 %1826
        %1828 = vadd.xlane.f32.xlu0 %v1632
        %v1829 = vpop.xlane.xlu0 %1828
        %1830 = vadd.xlane.f32.xlu0 %v1633
        %v1831 = vpop.xlane.xlu0 %1830
        %1832 = vadd.xlane.f32.xlu0 %v1634
        %v1833 = vpop.xlane.xlu0 %1832
        %1834 = vadd.xlane.f32.xlu0 %v1635
        %v1835 = vpop.xlane.xlu0 %1834
        %1836 = vadd.xlane.f32.xlu0 %v1636
        %v1837 = vpop.xlane.xlu0 %1836
        %1838 = vadd.xlane.f32.xlu0 %v1637
        %v1839 = vpop.xlane.xlu0 %1838
        %1840 = vadd.xlane.f32.xlu0 %v1638
        %v1841 = vpop.xlane.xlu0 %1840
        %1842 = vadd.xlane.f32.xlu0 %v1639
        %v1843 = vpop.xlane.xlu0 %1842
        %1844 = vadd.xlane.f32.xlu0 %v1640
        %v1845 = vpop.xlane.xlu0 %1844
        %1846 = vadd.xlane.f32.xlu0 %v1641
        %v1847 = vpop.xlane.xlu0 %1846
        %1848 = vadd.xlane.f32.xlu0 %v1642
        %v1849 = vpop.xlane.xlu0 %1848
        %1850 = vadd.xlane.f32.xlu0 %v1643
        %v1851 = vpop.xlane.xlu0 %1850
        %1852 = vadd.xlane.f32.xlu0 %v1644
        %v1853 = vpop.xlane.xlu0 %1852
        %1854 = vadd.xlane.f32.xlu0 %v1645
        %v1855 = vpop.xlane.xlu0 %1854
        %1856 = vadd.xlane.f32.xlu0 %v1646
        %v1857 = vpop.xlane.xlu0 %1856
        %1858 = vadd.xlane.f32.xlu0 %v1647
        %v1859 = vpop.xlane.xlu0 %1858
        %1860 = vadd.xlane.f32.xlu0 %v1648
        %v1861 = vpop.xlane.xlu0 %1860
        %1862 = vadd.xlane.f32.xlu0 %v1649
        %v1863 = vpop.xlane.xlu0 %1862
        %1864 = vadd.xlane.f32.xlu0 %v1650
        %v1865 = vpop.xlane.xlu0 %1864
        %1866 = vadd.xlane.f32.xlu0 %v1651
        %v1867 = vpop.xlane.xlu0 %1866
        %1868 = vadd.xlane.f32.xlu0 %v1652
        %v1869 = vpop.xlane.xlu0 %1868
        %1870 = vadd.xlane.f32.xlu0 %v1653
        %v1871 = vpop.xlane.xlu0 %1870
        %1872 = vadd.xlane.f32.xlu0 %v1654
        %v1873 = vpop.xlane.xlu0 %1872
        %1874 = vadd.xlane.f32.xlu0 %v1655
        %v1875 = vpop.xlane.xlu0 %1874
        %1876 = vadd.xlane.f32.xlu0 %v1656
        %v1877 = vpop.xlane.xlu0 %1876
        %1878 = vadd.xlane.f32.xlu0 %v1657
        %v1879 = vpop.xlane.xlu0 %1878
        %1880 = vadd.xlane.f32.xlu0 %v1658
        %v1881 = vpop.xlane.xlu0 %1880
        %1882 = vadd.xlane.f32.xlu0 %v1659
        %v1883 = vpop.xlane.xlu0 %1882
        %1884 = vadd.xlane.f32.xlu0 %v1660
        %v1885 = vpop.xlane.xlu0 %1884
        %1886 = vadd.xlane.f32.xlu0 %v1661
        %v1887 = vpop.xlane.xlu0 %1886
        %1888 = vadd.xlane.f32.xlu0 %v1662
        %v1889 = vpop.xlane.xlu0 %1888
        %1890 = vadd.xlane.f32.xlu0 %v1663
        %v1891 = vpop.xlane.xlu0 %1890
        %1892 = vadd.xlane.f32.xlu0 %v1664
        %v1893 = vpop.xlane.xlu0 %1892
        %1894 = vadd.xlane.f32.xlu0 %v1665
        %v1895 = vpop.xlane.xlu0 %1894
        %1896 = vadd.xlane.f32.xlu0 %v1666
        %v1897 = vpop.xlane.xlu0 %1896
        %1898 = vadd.xlane.f32.xlu0 %v1667
        %v1899 = vpop.xlane.xlu0 %1898
        %1900 = vadd.xlane.f32.xlu0 %v1668
        %v1901 = vpop.xlane.xlu0 %1900
        %1902 = vadd.xlane.f32.xlu0 %v1669
        %v1903 = vpop.xlane.xlu0 %1902
        %1904 = vadd.xlane.f32.xlu0 %v1670
        %v1905 = vpop.xlane.xlu0 %1904
        %1906 = vadd.xlane.f32.xlu0 %v1671
        %v1907 = vpop.xlane.xlu0 %1906
        %1908 = vadd.xlane.f32.xlu0 %v1672
        %v1909 = vpop.xlane.xlu0 %1908
        %1910 = vadd.xlane.f32.xlu0 %v1673
        %v1911 = vpop.xlane.xlu0 %1910
        %1912 = vadd.xlane.f32.xlu0 %v1674
        %v1913 = vpop.xlane.xlu0 %1912
        %1914 = vadd.xlane.f32.xlu0 %v1675
        %v1915 = vpop.xlane.xlu0 %1914
        %1916 = vadd.xlane.f32.xlu0 %v1676
        %v1917 = vpop.xlane.xlu0 %1916
        %1918 = vadd.xlane.f32.xlu0 %v1677
        %v1919 = vpop.xlane.xlu0 %1918
        %1920 = vadd.xlane.f32.xlu0 %v1678
        %v1921 = vpop.xlane.xlu0 %1920
        %1922 = vadd.xlane.f32.xlu0 %v1679
        %v1923 = vpop.xlane.xlu0 %1922
        %1924 = vadd.xlane.f32.xlu0 %v1680
        %v1925 = vpop.xlane.xlu0 %1924
        %1926 = vadd.xlane.f32.xlu0 %v1681
        %v1927 = vpop.xlane.xlu0 %1926
        %1928 = vadd.xlane.f32.xlu0 %v1682
        %v1929 = vpop.xlane.xlu0 %1928
        %1930 = vadd.xlane.f32.xlu0 %v1683
        %v1931 = vpop.xlane.xlu0 %1930
        %1932 = vadd.xlane.f32.xlu0 %v1684
        %v1933 = vpop.xlane.xlu0 %1932
        %1934 = vadd.xlane.f32.xlu0 %v1685
        %v1935 = vpop.xlane.xlu0 %1934
        %1936 = vadd.xlane.f32.xlu0 %v1686
        %v1937 = vpop.xlane.xlu0 %1936
        %1938 = vadd.xlane.f32.xlu0 %v1687
        %v1939 = vpop.xlane.xlu0 %1938
        %1940 = vadd.xlane.f32.xlu0 %v1688
        %v1941 = vpop.xlane.xlu0 %1940
        %1942 = vadd.xlane.f32.xlu0 %v1689
        %v1943 = vpop.xlane.xlu0 %1942
        %1944 = vadd.xlane.f32.xlu0 %v1690
        %v1945 = vpop.xlane.xlu0 %1944
        %1946 = vadd.xlane.f32.xlu0 %v1691
        %v1947 = vpop.xlane.xlu0 %1946
        %v2076 = vlaneseq
        %v2077 = vand.u32 %v2076, 127
        %v2078 = vlaneseq
        %v2079 = vshrl.u32 %v2078, 7
        %v2080 = vsub.s32 %v2077, %v2079
        %v2081 = vrot.slane %v1693, %v2080
        %v2082 = vadd.s32 %v2077, 4294967288
        %v2083 = vlaneseq
        %v2084 = vshrl.u32 %v2083, 7
        %v2085 = vsub.s32 %v2082, %v2084
        %v2086 = vrot.slane %v1695, %v2085
        %vm2087 = vcmask 130112
        %v2088 = vsel %vm2087, %v2086, %v2081
        %v2089 = vadd.s32 %v2077, 4294967280
        %v2090 = vlaneseq
        %v2091 = vshrl.u32 %v2090, 7
        %v2092 = vsub.s32 %v2089, %v2091
        %v2093 = vrot.slane %v1697, %v2092
        %vm2094 = vcmask 195712
        %v2095 = vsel %vm2094, %v2093, %v2088
        %v2096 = vadd.s32 %v2077, 4294967272
        %v2097 = vlaneseq
        %v2098 = vshrl.u32 %v2097, 7
        %v2099 = vsub.s32 %v2096, %v2098
        %v2100 = vrot.slane %v1699, %v2099
        %vm2101 = vcmask 261312
        %v2102 = vsel %vm2101, %v2100, %v2095
        %v2103 = vadd.s32 %v2077, 4294967264
        %v2104 = vlaneseq
        %v2105 = vshrl.u32 %v2104, 7
        %v2106 = vsub.s32 %v2103, %v2105
        %v2107 = vrot.slane %v1701, %v2106
        %vm2108 = vcmask 326912
        %v2109 = vsel %vm2108, %v2107, %v2102
        %v2110 = vadd.s32 %v2077, 4294967256
        %v2111 = vlaneseq
        %v2112 = vshrl.u32 %v2111, 7
        %v2113 = vsub.s32 %v2110, %v2112
        %v2114 = vrot.slane %v1703, %v2113
        %vm2115 = vcmask 392512
        %v2116 = vsel %vm2115, %v2114, %v2109
        %v2117 = vadd.s32 %v2077, 4294967248
        %v2118 = vlaneseq
        %v2119 = vshrl.u32 %v2118, 7
        %v2120 = vsub.s32 %v2117, %v2119
        %v2121 = vrot.slane %v1705, %v2120
        %vm2122 = vcmask 458112
        %v2123 = vsel %vm2122, %v2121, %v2116
        %v2124 = vadd.s32 %v2077, 4294967240
        %v2125 = vlaneseq
        %v2126 = vshrl.u32 %v2125, 7
        %v2127 = vsub.s32 %v2124, %v2126
        %v2128 = vrot.slane %v1707, %v2127
        %vm2129 = vcmask 523712
        %v2130 = vsel %vm2129, %v2128, %v2123
        %v2131 = vadd.s32 %v2077, 4294967232
        %v2132 = vlaneseq
        %v2133 = vshrl.u32 %v2132, 7
        %v2134 = vsub.s32 %v2131, %v2133
        %v2135 = vrot.slane %v1709, %v2134
        %vm2136 = vcmask 589312
        %v2137 = vsel %vm2136, %v2135, %v2130
        %v2138 = vadd.s32 %v2077, 4294967224
        %v2139 = vlaneseq
        %v2140 = vshrl.u32 %v2139, 7
        %v2141 = vsub.s32 %v2138, %v2140
        %v2142 = vrot.slane %v1711, %v2141
        %vm2143 = vcmask 654912
        %v2144 = vsel %vm2143, %v2142, %v2137
        %v2145 = vadd.s32 %v2077, 4294967216
        %v2146 = vlaneseq
        %v2147 = vshrl.u32 %v2146, 7
        %v2148 = vsub.s32 %v2145, %v2147
        %v2149 = vrot.slane %v1713, %v2148
        %vm2150 = vcmask 720512
        %v2151 = vsel %vm2150, %v2149, %v2144
        %v2152 = vadd.s32 %v2077, 4294967208
        %v2153 = vlaneseq
        %v2154 = vshrl.u32 %v2153, 7
        %v2155 = vsub.s32 %v2152, %v2154
        %v2156 = vrot.slane %v1715, %v2155
        %vm2157 = vcmask 786112
        %v2158 = vsel %vm2157, %v2156, %v2151
        %v2159 = vadd.s32 %v2077, 4294967200
        %v2160 = vlaneseq
        %v2161 = vshrl.u32 %v2160, 7
        %v2162 = vsub.s32 %v2159, %v2161
        %v2163 = vrot.slane %v1717, %v2162
        %vm2164 = vcmask 851712
        %v2165 = vsel %vm2164, %v2163, %v2158
        %v2166 = vadd.s32 %v2077, 4294967192
        %v2167 = vlaneseq
        %v2168 = vshrl.u32 %v2167, 7
        %v2169 = vsub.s32 %v2166, %v2168
        %v2170 = vrot.slane %v1719, %v2169
        %vm2171 = vcmask 917312
        %v2172 = vsel %vm2171, %v2170, %v2165
        %v2173 = vadd.s32 %v2077, 4294967184
        %v2174 = vlaneseq
        %v2175 = vshrl.u32 %v2174, 7
        %v2176 = vsub.s32 %v2173, %v2175
        %v2177 = vrot.slane %v1721, %v2176
        %vm2178 = vcmask 982912
        %v2179 = vsel %vm2178, %v2177, %v2172
        %v2180 = vadd.s32 %v2077, 4294967176
        %v2181 = vlaneseq
        %v2182 = vshrl.u32 %v2181, 7
        %v2183 = vsub.s32 %v2180, %v2182
        %v2184 = vrot.slane %v1723, %v2183
        %vm2185 = vcmask 1048512
        %v2186 = vsel %vm2185, %v2184, %v2179
        %v2187 = vlaneseq
        %v2188 = vshrl.u32 %v2187, 7
        %v2189 = vsub.s32 %v2077, %v2188
        %v2190 = vrot.slane %v1725, %v2189
        %v2191 = vlaneseq
        %v2192 = vshrl.u32 %v2191, 7
        %v2193 = vsub.s32 %v2082, %v2192
        %v2194 = vrot.slane %v1727, %v2193
        %v2195 = vsel %vm2087, %v2194, %v2190
        %v2196 = vlaneseq
        %v2197 = vshrl.u32 %v2196, 7
        %v2198 = vsub.s32 %v2089, %v2197
        %v2199 = vrot.slane %v1729, %v2198
        %v2200 = vsel %vm2094, %v2199, %v2195
        %v2201 = vlaneseq
        %v2202 = vshrl.u32 %v2201, 7
        %v2203 = vsub.s32 %v2096, %v2202
        %v2204 = vrot.slane %v1731, %v2203
        %v2205 = vsel %vm2101, %v2204, %v2200
        %v2206 = vlaneseq
        %v2207 = vshrl.u32 %v2206, 7
        %v2208 = vsub.s32 %v2103, %v2207
        %v2209 = vrot.slane %v1733, %v2208
        %v2210 = vsel %vm2108, %v2209, %v2205
        %v2211 = vlaneseq
        %v2212 = vshrl.u32 %v2211, 7
        %v2213 = vsub.s32 %v2110, %v2212
        %v2214 = vrot.slane %v1735, %v2213
        %v2215 = vsel %vm2115, %v2214, %v2210
        %v2216 = vlaneseq
        %v2217 = vshrl.u32 %v2216, 7
        %v2218 = vsub.s32 %v2117, %v2217
        %v2219 = vrot.slane %v1737, %v2218
        %v2220 = vsel %vm2122, %v2219, %v2215
        %v2221 = vlaneseq
        %v2222 = vshrl.u32 %v2221, 7
        %v2223 = vsub.s32 %v2124, %v2222
        %v2224 = vrot.slane %v1739, %v2223
        %v2225 = vsel %vm2129, %v2224, %v2220
        %v2226 = vlaneseq
        %v2227 = vshrl.u32 %v2226, 7
        %v2228 = vsub.s32 %v2131, %v2227
        %v2229 = vrot.slane %v1741, %v2228
        %v2230 = vsel %vm2136, %v2229, %v2225
        %v2231 = vlaneseq
        %v2232 = vshrl.u32 %v2231, 7
        %v2233 = vsub.s32 %v2138, %v2232
        %v2234 = vrot.slane %v1743, %v2233
        %v2235 = vsel %vm2143, %v2234, %v2230
        %v2236 = vlaneseq
        %v2237 = vshrl.u32 %v2236, 7
        %v2238 = vsub.s32 %v2145, %v2237
        %v2239 = vrot.slane %v1745, %v2238
        %v2240 = vsel %vm2150, %v2239, %v2235
        %v2241 = vlaneseq
        %v2242 = vshrl.u32 %v2241, 7
        %v2243 = vsub.s32 %v2152, %v2242
        %v2244 = vrot.slane %v1747, %v2243
        %v2245 = vsel %vm2157, %v2244, %v2240
        %v2246 = vlaneseq
        %v2247 = vshrl.u32 %v2246, 7
        %v2248 = vsub.s32 %v2159, %v2247
        %v2249 = vrot.slane %v1749, %v2248
        %v2250 = vsel %vm2164, %v2249, %v2245
        %v2251 = vlaneseq
        %v2252 = vshrl.u32 %v2251, 7
        %v2253 = vsub.s32 %v2166, %v2252
        %v2254 = vrot.slane %v1751, %v2253
        %v2255 = vsel %vm2171, %v2254, %v2250
        %v2256 = vlaneseq
        %v2257 = vshrl.u32 %v2256, 7
        %v2258 = vsub.s32 %v2173, %v2257
        %v2259 = vrot.slane %v1753, %v2258
        %v2260 = vsel %vm2178, %v2259, %v2255
        %v2261 = vlaneseq
        %v2262 = vshrl.u32 %v2261, 7
        %v2263 = vsub.s32 %v2180, %v2262
        %v2264 = vrot.slane %v1755, %v2263
        %v2265 = vsel %vm2185, %v2264, %v2260
        %v2266 = vlaneseq
        %v2267 = vshrl.u32 %v2266, 7
        %v2268 = vsub.s32 %v2077, %v2267
        %v2269 = vrot.slane %v1757, %v2268
        %v2270 = vlaneseq
        %v2271 = vshrl.u32 %v2270, 7
        %v2272 = vsub.s32 %v2082, %v2271
        %v2273 = vrot.slane %v1759, %v2272
        %v2274 = vsel %vm2087, %v2273, %v2269
        %v2275 = vlaneseq
        %v2276 = vshrl.u32 %v2275, 7
        %v2277 = vsub.s32 %v2089, %v2276
        %v2278 = vrot.slane %v1761, %v2277
        %v2279 = vsel %vm2094, %v2278, %v2274
        %v2280 = vlaneseq
        %v2281 = vshrl.u32 %v2280, 7
        %v2282 = vsub.s32 %v2096, %v2281
        %v2283 = vrot.slane %v1763, %v2282
        %v2284 = vsel %vm2101, %v2283, %v2279
        %v2285 = vlaneseq
        %v2286 = vshrl.u32 %v2285, 7
        %v2287 = vsub.s32 %v2103, %v2286
        %v2288 = vrot.slane %v1765, %v2287
        %v2289 = vsel %vm2108, %v2288, %v2284
        %v2290 = vlaneseq
        %v2291 = vshrl.u32 %v2290, 7
        %v2292 = vsub.s32 %v2110, %v2291
        %v2293 = vrot.slane %v1767, %v2292
        %v2294 = vsel %vm2115, %v2293, %v2289
        %v2295 = vlaneseq
        %v2296 = vshrl.u32 %v2295, 7
        %v2297 = vsub.s32 %v2117, %v2296
        %v2298 = vrot.slane %v1769, %v2297
        %v2299 = vsel %vm2122, %v2298, %v2294
        %v2300 = vlaneseq
        %v2301 = vshrl.u32 %v2300, 7
        %v2302 = vsub.s32 %v2124, %v2301
        %v2303 = vrot.slane %v1771, %v2302
        %v2304 = vsel %vm2129, %v2303, %v2299
        %v2305 = vlaneseq
        %v2306 = vshrl.u32 %v2305, 7
        %v2307 = vsub.s32 %v2131, %v2306
        %v2308 = vrot.slane %v1773, %v2307
        %v2309 = vsel %vm2136, %v2308, %v2304
        %v2310 = vlaneseq
        %v2311 = vshrl.u32 %v2310, 7
        %v2312 = vsub.s32 %v2138, %v2311
        %v2313 = vrot.slane %v1775, %v2312
        %v2314 = vsel %vm2143, %v2313, %v2309
        %v2315 = vlaneseq
        %v2316 = vshrl.u32 %v2315, 7
        %v2317 = vsub.s32 %v2145, %v2316
        %v2318 = vrot.slane %v1777, %v2317
        %v2319 = vsel %vm2150, %v2318, %v2314
        %v2320 = vlaneseq
        %v2321 = vshrl.u32 %v2320, 7
        %v2322 = vsub.s32 %v2152, %v2321
        %v2323 = vrot.slane %v1779, %v2322
        %v2324 = vsel %vm2157, %v2323, %v2319
        %v2325 = vlaneseq
        %v2326 = vshrl.u32 %v2325, 7
        %v2327 = vsub.s32 %v2159, %v2326
        %v2328 = vrot.slane %v1781, %v2327
        %v2329 = vsel %vm2164, %v2328, %v2324
        %v2330 = vlaneseq
        %v2331 = vshrl.u32 %v2330, 7
        %v2332 = vsub.s32 %v2166, %v2331
        %v2333 = vrot.slane %v1783, %v2332
        %v2334 = vsel %vm2171, %v2333, %v2329
        %v2335 = vlaneseq
        %v2336 = vshrl.u32 %v2335, 7
        %v2337 = vsub.s32 %v2173, %v2336
        %v2338 = vrot.slane %v1785, %v2337
        %v2339 = vsel %vm2178, %v2338, %v2334
        %v2340 = vlaneseq
        %v2341 = vshrl.u32 %v2340, 7
        %v2342 = vsub.s32 %v2180, %v2341
        %v2343 = vrot.slane %v1787, %v2342
        %v2344 = vsel %vm2185, %v2343, %v2339
        %v2345 = vlaneseq
        %v2346 = vshrl.u32 %v2345, 7
        %v2347 = vsub.s32 %v2077, %v2346
        %v2348 = vrot.slane %v1789, %v2347
        %v2349 = vlaneseq
        %v2350 = vshrl.u32 %v2349, 7
        %v2351 = vsub.s32 %v2082, %v2350
        %v2352 = vrot.slane %v1791, %v2351
        %v2353 = vsel %vm2087, %v2352, %v2348
        %v2354 = vlaneseq
        %v2355 = vshrl.u32 %v2354, 7
        %v2356 = vsub.s32 %v2089, %v2355
        %v2357 = vrot.slane %v1793, %v2356
        %v2358 = vsel %vm2094, %v2357, %v2353
        %v2359 = vlaneseq
        %v2360 = vshrl.u32 %v2359, 7
        %v2361 = vsub.s32 %v2096, %v2360
        %v2362 = vrot.slane %v1795, %v2361
        %v2363 = vsel %vm2101, %v2362, %v2358
        %v2364 = vlaneseq
        %v2365 = vshrl.u32 %v2364, 7
        %v2366 = vsub.s32 %v2103, %v2365
        %v2367 = vrot.slane %v1797, %v2366
        %v2368 = vsel %vm2108, %v2367, %v2363
        %v2369 = vlaneseq
        %v2370 = vshrl.u32 %v2369, 7
        %v2371 = vsub.s32 %v2110, %v2370
        %v2372 = vrot.slane %v1799, %v2371
        %v2373 = vsel %vm2115, %v2372, %v2368
        %v2374 = vlaneseq
        %v2375 = vshrl.u32 %v2374, 7
        %v2376 = vsub.s32 %v2117, %v2375
        %v2377 = vrot.slane %v1801, %v2376
        %v2378 = vsel %vm2122, %v2377, %v2373
        %v2379 = vlaneseq
        %v2380 = vshrl.u32 %v2379, 7
        %v2381 = vsub.s32 %v2124, %v2380
        %v2382 = vrot.slane %v1803, %v2381
        %v2383 = vsel %vm2129, %v2382, %v2378
        %v2384 = vlaneseq
        %v2385 = vshrl.u32 %v2384, 7
        %v2386 = vsub.s32 %v2131, %v2385
        %v2387 = vrot.slane %v1805, %v2386
        %v2388 = vsel %vm2136, %v2387, %v2383
        %v2389 = vlaneseq
        %v2390 = vshrl.u32 %v2389, 7
        %v2391 = vsub.s32 %v2138, %v2390
        %v2392 = vrot.slane %v1807, %v2391
        %v2393 = vsel %vm2143, %v2392, %v2388
        %v2394 = vlaneseq
        %v2395 = vshrl.u32 %v2394, 7
        %v2396 = vsub.s32 %v2145, %v2395
        %v2397 = vrot.slane %v1809, %v2396
        %v2398 = vsel %vm2150, %v2397, %v2393
        %v2399 = vlaneseq
        %v2400 = vshrl.u32 %v2399, 7
        %v2401 = vsub.s32 %v2152, %v2400
        %v2402 = vrot.slane %v1811, %v2401
        %v2403 = vsel %vm2157, %v2402, %v2398
        %v2404 = vlaneseq
        %v2405 = vshrl.u32 %v2404, 7
        %v2406 = vsub.s32 %v2159, %v2405
        %v2407 = vrot.slane %v1813, %v2406
        %v2408 = vsel %vm2164, %v2407, %v2403
        %v2409 = vlaneseq
        %v2410 = vshrl.u32 %v2409, 7
        %v2411 = vsub.s32 %v2166, %v2410
        %v2412 = vrot.slane %v1815, %v2411
        %v2413 = vsel %vm2171, %v2412, %v2408
        %v2414 = vlaneseq
        %v2415 = vshrl.u32 %v2414, 7
        %v2416 = vsub.s32 %v2173, %v2415
        %v2417 = vrot.slane %v1817, %v2416
        %v2418 = vsel %vm2178, %v2417, %v2413
        %v2419 = vlaneseq
        %v2420 = vshrl.u32 %v2419, 7
        %v2421 = vsub.s32 %v2180, %v2420
        %v2422 = vrot.slane %v1819, %v2421
        %v2423 = vsel %vm2185, %v2422, %v2418
        %v2424 = vlaneseq
        %v2425 = vshrl.u32 %v2424, 7
        %v2426 = vsub.s32 %v2077, %v2425
        %v2427 = vrot.slane %v1821, %v2426
        %v2428 = vlaneseq
        %v2429 = vshrl.u32 %v2428, 7
        %v2430 = vsub.s32 %v2082, %v2429
        %v2431 = vrot.slane %v1823, %v2430
        %v2432 = vsel %vm2087, %v2431, %v2427
        %v2433 = vlaneseq
        %v2434 = vshrl.u32 %v2433, 7
        %v2435 = vsub.s32 %v2089, %v2434
        %v2436 = vrot.slane %v1825, %v2435
        %v2437 = vsel %vm2094, %v2436, %v2432
        %v2438 = vlaneseq
        %v2439 = vshrl.u32 %v2438, 7
        %v2440 = vsub.s32 %v2096, %v2439
        %v2441 = vrot.slane %v1827, %v2440
        %v2442 = vsel %vm2101, %v2441, %v2437
        %v2443 = vlaneseq
        %v2444 = vshrl.u32 %v2443, 7
        %v2445 = vsub.s32 %v2103, %v2444
        %v2446 = vrot.slane %v1829, %v2445
        %v2447 = vsel %vm2108, %v2446, %v2442
        %v2448 = vlaneseq
        %v2449 = vshrl.u32 %v2448, 7
        %v2450 = vsub.s32 %v2110, %v2449
        %v2451 = vrot.slane %v1831, %v2450
        %v2452 = vsel %vm2115, %v2451, %v2447
        %v2453 = vlaneseq
        %v2454 = vshrl.u32 %v2453, 7
        %v2455 = vsub.s32 %v2117, %v2454
        %v2456 = vrot.slane %v1833, %v2455
        %v2457 = vsel %vm2122, %v2456, %v2452
        %v2458 = vlaneseq
        %v2459 = vshrl.u32 %v2458, 7
        %v2460 = vsub.s32 %v2124, %v2459
        %v2461 = vrot.slane %v1835, %v2460
        %v2462 = vsel %vm2129, %v2461, %v2457
        %v2463 = vlaneseq
        %v2464 = vshrl.u32 %v2463, 7
        %v2465 = vsub.s32 %v2131, %v2464
        %v2466 = vrot.slane %v1837, %v2465
        %v2467 = vsel %vm2136, %v2466, %v2462
        %v2468 = vlaneseq
        %v2469 = vshrl.u32 %v2468, 7
        %v2470 = vsub.s32 %v2138, %v2469
        %v2471 = vrot.slane %v1839, %v2470
        %v2472 = vsel %vm2143, %v2471, %v2467
        %v2473 = vlaneseq
        %v2474 = vshrl.u32 %v2473, 7
        %v2475 = vsub.s32 %v2145, %v2474
        %v2476 = vrot.slane %v1841, %v2475
        %v2477 = vsel %vm2150, %v2476, %v2472
        %v2478 = vlaneseq
        %v2479 = vshrl.u32 %v2478, 7
        %v2480 = vsub.s32 %v2152, %v2479
        %v2481 = vrot.slane %v1843, %v2480
        %v2482 = vsel %vm2157, %v2481, %v2477
        %v2483 = vlaneseq
        %v2484 = vshrl.u32 %v2483, 7
        %v2485 = vsub.s32 %v2159, %v2484
        %v2486 = vrot.slane %v1845, %v2485
        %v2487 = vsel %vm2164, %v2486, %v2482
        %v2488 = vlaneseq
        %v2489 = vshrl.u32 %v2488, 7
        %v2490 = vsub.s32 %v2166, %v2489
        %v2491 = vrot.slane %v1847, %v2490
        %v2492 = vsel %vm2171, %v2491, %v2487
        %v2493 = vlaneseq
        %v2494 = vshrl.u32 %v2493, 7
        %v2495 = vsub.s32 %v2173, %v2494
        %v2496 = vrot.slane %v1849, %v2495
        %v2497 = vsel %vm2178, %v2496, %v2492
        %v2498 = vlaneseq
        %v2499 = vshrl.u32 %v2498, 7
        %v2500 = vsub.s32 %v2180, %v2499
        %v2501 = vrot.slane %v1851, %v2500
        %v2502 = vsel %vm2185, %v2501, %v2497
        %v2503 = vlaneseq
        %v2504 = vshrl.u32 %v2503, 7
        %v2505 = vsub.s32 %v2077, %v2504
        %v2506 = vrot.slane %v1853, %v2505
        %v2507 = vlaneseq
        %v2508 = vshrl.u32 %v2507, 7
        %v2509 = vsub.s32 %v2082, %v2508
        %v2510 = vrot.slane %v1855, %v2509
        %v2511 = vsel %vm2087, %v2510, %v2506
        %v2512 = vlaneseq
        %v2513 = vshrl.u32 %v2512, 7
        %v2514 = vsub.s32 %v2089, %v2513
        %v2515 = vrot.slane %v1857, %v2514
        %v2516 = vsel %vm2094, %v2515, %v2511
        %v2517 = vlaneseq
        %v2518 = vshrl.u32 %v2517, 7
        %v2519 = vsub.s32 %v2096, %v2518
        %v2520 = vrot.slane %v1859, %v2519
        %v2521 = vsel %vm2101, %v2520, %v2516
        %v2522 = vlaneseq
        %v2523 = vshrl.u32 %v2522, 7
        %v2524 = vsub.s32 %v2103, %v2523
        %v2525 = vrot.slane %v1861, %v2524
        %v2526 = vsel %vm2108, %v2525, %v2521
        %v2527 = vlaneseq
        %v2528 = vshrl.u32 %v2527, 7
        %v2529 = vsub.s32 %v2110, %v2528
        %v2530 = vrot.slane %v1863, %v2529
        %v2531 = vsel %vm2115, %v2530, %v2526
        %v2532 = vlaneseq
        %v2533 = vshrl.u32 %v2532, 7
        %v2534 = vsub.s32 %v2117, %v2533
        %v2535 = vrot.slane %v1865, %v2534
        %v2536 = vsel %vm2122, %v2535, %v2531
        %v2537 = vlaneseq
        %v2538 = vshrl.u32 %v2537, 7
        %v2539 = vsub.s32 %v2124, %v2538
        %v2540 = vrot.slane %v1867, %v2539
        %v2541 = vsel %vm2129, %v2540, %v2536
        %v2542 = vlaneseq
        %v2543 = vshrl.u32 %v2542, 7
        %v2544 = vsub.s32 %v2131, %v2543
        %v2545 = vrot.slane %v1869, %v2544
        %v2546 = vsel %vm2136, %v2545, %v2541
        %v2547 = vlaneseq
        %v2548 = vshrl.u32 %v2547, 7
        %v2549 = vsub.s32 %v2138, %v2548
        %v2550 = vrot.slane %v1871, %v2549
        %v2551 = vsel %vm2143, %v2550, %v2546
        %v2552 = vlaneseq
        %v2553 = vshrl.u32 %v2552, 7
        %v2554 = vsub.s32 %v2145, %v2553
        %v2555 = vrot.slane %v1873, %v2554
        %v2556 = vsel %vm2150, %v2555, %v2551
        %v2557 = vlaneseq
        %v2558 = vshrl.u32 %v2557, 7
        %v2559 = vsub.s32 %v2152, %v2558
        %v2560 = vrot.slane %v1875, %v2559
        %v2561 = vsel %vm2157, %v2560, %v2556
        %v2562 = vlaneseq
        %v2563 = vshrl.u32 %v2562, 7
        %v2564 = vsub.s32 %v2159, %v2563
        %v2565 = vrot.slane %v1877, %v2564
        %v2566 = vsel %vm2164, %v2565, %v2561
        %v2567 = vlaneseq
        %v2568 = vshrl.u32 %v2567, 7
        %v2569 = vsub.s32 %v2166, %v2568
        %v2570 = vrot.slane %v1879, %v2569
        %v2571 = vsel %vm2171, %v2570, %v2566
        %v2572 = vlaneseq
        %v2573 = vshrl.u32 %v2572, 7
        %v2574 = vsub.s32 %v2173, %v2573
        %v2575 = vrot.slane %v1881, %v2574
        %v2576 = vsel %vm2178, %v2575, %v2571
        %v2577 = vlaneseq
        %v2578 = vshrl.u32 %v2577, 7
        %v2579 = vsub.s32 %v2180, %v2578
        %v2580 = vrot.slane %v1883, %v2579
        %v2581 = vsel %vm2185, %v2580, %v2576
        %v2582 = vlaneseq
        %v2583 = vshrl.u32 %v2582, 7
        %v2584 = vsub.s32 %v2077, %v2583
        %v2585 = vrot.slane %v1885, %v2584
        %v2586 = vlaneseq
        %v2587 = vshrl.u32 %v2586, 7
        %v2588 = vsub.s32 %v2082, %v2587
        %v2589 = vrot.slane %v1887, %v2588
        %v2590 = vsel %vm2087, %v2589, %v2585
        %v2591 = vlaneseq
        %v2592 = vshrl.u32 %v2591, 7
        %v2593 = vsub.s32 %v2089, %v2592
        %v2594 = vrot.slane %v1889, %v2593
        %v2595 = vsel %vm2094, %v2594, %v2590
        %v2596 = vlaneseq
        %v2597 = vshrl.u32 %v2596, 7
        %v2598 = vsub.s32 %v2096, %v2597
        %v2599 = vrot.slane %v1891, %v2598
        %v2600 = vsel %vm2101, %v2599, %v2595
        %v2601 = vlaneseq
        %v2602 = vshrl.u32 %v2601, 7
        %v2603 = vsub.s32 %v2103, %v2602
        %v2604 = vrot.slane %v1893, %v2603
        %v2605 = vsel %vm2108, %v2604, %v2600
        %v2606 = vlaneseq
        %v2607 = vshrl.u32 %v2606, 7
        %v2608 = vsub.s32 %v2110, %v2607
        %v2609 = vrot.slane %v1895, %v2608
        %v2610 = vsel %vm2115, %v2609, %v2605
        %v2611 = vlaneseq
        %v2612 = vshrl.u32 %v2611, 7
        %v2613 = vsub.s32 %v2117, %v2612
        %v2614 = vrot.slane %v1897, %v2613
        %v2615 = vsel %vm2122, %v2614, %v2610
        %v2616 = vlaneseq
        %v2617 = vshrl.u32 %v2616, 7
        %v2618 = vsub.s32 %v2124, %v2617
        %v2619 = vrot.slane %v1899, %v2618
        %v2620 = vsel %vm2129, %v2619, %v2615
        %v2621 = vlaneseq
        %v2622 = vshrl.u32 %v2621, 7
        %v2623 = vsub.s32 %v2131, %v2622
        %v2624 = vrot.slane %v1901, %v2623
        %v2625 = vsel %vm2136, %v2624, %v2620
        %v2626 = vlaneseq
        %v2627 = vshrl.u32 %v2626, 7
        %v2628 = vsub.s32 %v2138, %v2627
        %v2629 = vrot.slane %v1903, %v2628
        %v2630 = vsel %vm2143, %v2629, %v2625
        %v2631 = vlaneseq
        %v2632 = vshrl.u32 %v2631, 7
        %v2633 = vsub.s32 %v2145, %v2632
        %v2634 = vrot.slane %v1905, %v2633
        %v2635 = vsel %vm2150, %v2634, %v2630
        %v2636 = vlaneseq
        %v2637 = vshrl.u32 %v2636, 7
        %v2638 = vsub.s32 %v2152, %v2637
        %v2639 = vrot.slane %v1907, %v2638
        %v2640 = vsel %vm2157, %v2639, %v2635
        %v2641 = vlaneseq
        %v2642 = vshrl.u32 %v2641, 7
        %v2643 = vsub.s32 %v2159, %v2642
        %v2644 = vrot.slane %v1909, %v2643
        %v2645 = vsel %vm2164, %v2644, %v2640
        %v2646 = vlaneseq
        %v2647 = vshrl.u32 %v2646, 7
        %v2648 = vsub.s32 %v2166, %v2647
        %v2649 = vrot.slane %v1911, %v2648
        %v2650 = vsel %vm2171, %v2649, %v2645
        %v2651 = vlaneseq
        %v2652 = vshrl.u32 %v2651, 7
        %v2653 = vsub.s32 %v2173, %v2652
        %v2654 = vrot.slane %v1913, %v2653
        %v2655 = vsel %vm2178, %v2654, %v2650
        %v2656 = vlaneseq
        %v2657 = vshrl.u32 %v2656, 7
        %v2658 = vsub.s32 %v2180, %v2657
        %v2659 = vrot.slane %v1915, %v2658
        %v2660 = vsel %vm2185, %v2659, %v2655
        %v2661 = vlaneseq
        %v2662 = vshrl.u32 %v2661, 7
        %v2663 = vsub.s32 %v2077, %v2662
        %v2664 = vrot.slane %v1917, %v2663
        %v2665 = vlaneseq
        %v2666 = vshrl.u32 %v2665, 7
        %v2667 = vsub.s32 %v2082, %v2666
        %v2668 = vrot.slane %v1919, %v2667
        %v2669 = vsel %vm2087, %v2668, %v2664
        %v2670 = vlaneseq
        %v2671 = vshrl.u32 %v2670, 7
        %v2672 = vsub.s32 %v2089, %v2671
        %v2673 = vrot.slane %v1921, %v2672
        %v2674 = vsel %vm2094, %v2673, %v2669
        %v2675 = vlaneseq
        %v2676 = vshrl.u32 %v2675, 7
        %v2677 = vsub.s32 %v2096, %v2676
        %v2678 = vrot.slane %v1923, %v2677
        %v2679 = vsel %vm2101, %v2678, %v2674
        %v2680 = vlaneseq
        %v2681 = vshrl.u32 %v2680, 7
        %v2682 = vsub.s32 %v2103, %v2681
        %v2683 = vrot.slane %v1925, %v2682
        %v2684 = vsel %vm2108, %v2683, %v2679
        %v2685 = vlaneseq
        %v2686 = vshrl.u32 %v2685, 7
        %v2687 = vsub.s32 %v2110, %v2686
        %v2688 = vrot.slane %v1927, %v2687
        %v2689 = vsel %vm2115, %v2688, %v2684
        %v2690 = vlaneseq
        %v2691 = vshrl.u32 %v2690, 7
        %v2692 = vsub.s32 %v2117, %v2691
        %v2693 = vrot.slane %v1929, %v2692
        %v2694 = vsel %vm2122, %v2693, %v2689
        %v2695 = vlaneseq
        %v2696 = vshrl.u32 %v2695, 7
        %v2697 = vsub.s32 %v2124, %v2696
        %v2698 = vrot.slane %v1931, %v2697
        %v2699 = vsel %vm2129, %v2698, %v2694
        %v2700 = vlaneseq
        %v2701 = vshrl.u32 %v2700, 7
        %v2702 = vsub.s32 %v2131, %v2701
        %v2703 = vrot.slane %v1933, %v2702
        %v2704 = vsel %vm2136, %v2703, %v2699
        %v2705 = vlaneseq
        %v2706 = vshrl.u32 %v2705, 7
        %v2707 = vsub.s32 %v2138, %v2706
        %v2708 = vrot.slane %v1935, %v2707
        %v2709 = vsel %vm2143, %v2708, %v2704
        %v2710 = vlaneseq
        %v2711 = vshrl.u32 %v2710, 7
        %v2712 = vsub.s32 %v2145, %v2711
        %v2713 = vrot.slane %v1937, %v2712
        %v2714 = vsel %vm2150, %v2713, %v2709
        %v2715 = vlaneseq
        %v2716 = vshrl.u32 %v2715, 7
        %v2717 = vsub.s32 %v2152, %v2716
        %v2718 = vrot.slane %v1939, %v2717
        %v2719 = vsel %vm2157, %v2718, %v2714
        %v2720 = vlaneseq
        %v2721 = vshrl.u32 %v2720, 7
        %v2722 = vsub.s32 %v2159, %v2721
        %v2723 = vrot.slane %v1941, %v2722
        %v2724 = vsel %vm2164, %v2723, %v2719
        %v2725 = vlaneseq
        %v2726 = vshrl.u32 %v2725, 7
        %v2727 = vsub.s32 %v2166, %v2726
        %v2728 = vrot.slane %v1943, %v2727
        %v2729 = vsel %vm2171, %v2728, %v2724
        %v2730 = vlaneseq
        %v2731 = vshrl.u32 %v2730, 7
        %v2732 = vsub.s32 %v2173, %v2731
        %v2733 = vrot.slane %v1945, %v2732
        %v2734 = vsel %vm2178, %v2733, %v2729
        %v2735 = vlaneseq
        %v2736 = vshrl.u32 %v2735, 7
        %v2737 = vsub.s32 %v2180, %v2736
        %v2738 = vrot.slane %v1947, %v2737
        %v2739 = vsel %vm2185, %v2738, %v2734
        %vm2740 = vcmask 1041409
        %v2741 = vsel %vm2740, %v2265, %v2186
        %vm2742 = vcmask 1042434
        %v2743 = vsel %vm2742, %v2344, %v2741
        %vm2744 = vcmask 1043459
        %v2745 = vsel %vm2744, %v2423, %v2743
        %vm2746 = vcmask 1044484
        %v2747 = vsel %vm2746, %v2502, %v2745
        %vm2748 = vcmask 1045509
        %v2749 = vsel %vm2748, %v2581, %v2747
        %vm2750 = vcmask 1046534
        %v2751 = vsel %vm2750, %v2660, %v2749
        %vm2752 = vcmask 1047559
        %v2753 = vsel %vm2752, %v2739, %v2751
        %v2755 = vadd.f32 %v1215, %v2753
        %v2756 = vtanh.pop %v2755
        %v2758 = vcombine.high %v2756, %v2756
        %v2760 = vunpack.c.l.s4 1966171168
        %v2761 = vunpack.c.0.s8 %v2760
        %v2762 = vlaneseq
        %v2763 = vshrl.u32 %v2762, 7
        %v2764 = vsub.s32 %v2761, %v2763
        %v2765 = vrot.slane %v2756, %v2764
        %v2767 = vunpack.c.l.s4 1966171168
        %v2768 = vunpack.c.0.s8 %v2767
        %v2769 = vlaneseq
        %v2770 = vshrl.u32 %v2769, 7
        %v2771 = vsub.s32 %v2768, %v2770
        %v2772 = vrot.slane %v2758, %v2771
        %v2773 = vcombine.high %v2765, %v2765
        %v2774 = vcombine.high %v2772, %v2772
        %v2776 = vunpack.c.l.s4 1966171168
        %v2777 = vunpack.c.0.s8 %v2776
        %v2778 = vlaneseq
        %v2779 = vshrl.u32 %v2778, 7
        %v2780 = vsub.s32 %v2777, %v2779
        %v2781 = vrot.slane %v2765, %v2780
        %v2783 = vunpack.c.l.s4 1966171168
        %v2784 = vunpack.c.0.s8 %v2783
        %v2785 = vlaneseq
        %v2786 = vshrl.u32 %v2785, 7
        %v2787 = vsub.s32 %v2784, %v2786
        %v2788 = vrot.slane %v2772, %v2787
        %v2790 = vunpack.c.l.s4 1966171168
        %v2791 = vunpack.c.0.s8 %v2790
        %v2792 = vlaneseq
        %v2793 = vshrl.u32 %v2792, 7
        %v2794 = vsub.s32 %v2791, %v2793
        %v2795 = vrot.slane %v2773, %v2794
        %v2797 = vunpack.c.l.s4 1966171168
        %v2798 = vunpack.c.0.s8 %v2797
        %v2799 = vlaneseq
        %v2800 = vshrl.u32 %v2799, 7
        %v2801 = vsub.s32 %v2798, %v2800
        %v2802 = vrot.slane %v2774, %v2801
        %v2803 = vcombine.high %v2781, %v2781
        %v2804 = vcombine.high %v2788, %v2788
        %v2805 = vcombine.high %v2795, %v2795
        %v2806 = vcombine.high %v2802, %v2802
        %v2815 = vld [vmem:[%s8] sm:$0x1]
        %v2816 = vmul.f32 %v2781, %v2815
        %v2817 = vmul.f32 %v2795, %v2815
        %v2818 = vmul.f32 %v2803, %v2815
        %v2819 = vmul.f32 %v2805, %v2815
        %v2820 = vmul.f32 %v2788, %v2815
        %v2821 = vmul.f32 %v2802, %v2815
        %v2822 = vmul.f32 %v2804, %v2815
        %v2823 = vmul.f32 %v2806, %v2815
        %vm2824 = vcmask 1040384
        %v2825 = vsel %vm2824, %v2816, 0.0
        %2826 = vadd.xlane.f32.xlu0 %v2825
        %v2827 = vpop.xlane.xlu0 %2826
        %v2828 = vsel %vm2824, %v2817, 0.0
        %2829 = vadd.xlane.f32.xlu0 %v2828
        %v2830 = vpop.xlane.xlu0 %2829
        %v2831 = vsel %vm2824, %v2818, 0.0
        %2832 = vadd.xlane.f32.xlu0 %v2831
        %v2833 = vpop.xlane.xlu0 %2832
        %v2834 = vsel %vm2824, %v2819, 0.0
        %2835 = vadd.xlane.f32.xlu0 %v2834
        %v2836 = vpop.xlane.xlu0 %2835
        %v2837 = vsel %vm2824, %v2820, 0.0
        %2838 = vadd.xlane.f32.xlu0 %v2837
        %v2839 = vpop.xlane.xlu0 %2838
        %v2840 = vsel %vm2824, %v2821, 0.0
        %2841 = vadd.xlane.f32.xlu0 %v2840
        %v2842 = vpop.xlane.xlu0 %2841
        %v2843 = vsel %vm2824, %v2822, 0.0
        %2844 = vadd.xlane.f32.xlu0 %v2843
        %v2845 = vpop.xlane.xlu0 %2844
        %v2846 = vsel %vm2824, %v2823, 0.0
        %2847 = vadd.xlane.f32.xlu0 %v2846
        %v2848 = vpop.xlane.xlu0 %2847
        %v2849 = vstv %s1135
        %v2850 = vadd.f32 %v2827, %v2849
        %v2851 = vadd.f32 %v2830, %v2849
        %v2852 = vadd.f32 %v2833, %v2849
        %v2853 = vadd.f32 %v2836, %v2849
        %v2854 = vadd.f32 %v2839, %v2849
        %v2855 = vadd.f32 %v2842, %v2849
        %v2856 = vadd.f32 %v2845, %v2849
        %v2857 = vadd.f32 %v2848, %v2849
        %v2858 = vtanh.pop %v2850
        %v2859 = vtanh.pop %v2851
        %v2860 = vtanh.pop %v2852
        %v2861 = vtanh.pop %v2853
        %v2862 = vtanh.pop %v2854
        %v2863 = vtanh.pop %v2855
        %v2864 = vtanh.pop %v2856
        %v2865 = vtanh.pop %v2857
        %v2866 = vlaneseq
        %v2867 = vshrl.u32 %v2866, 7
        %v2868 = vsub.s32 0, %v2867
        %v2869 = vrot.slane %v2756, %v2868
        %2871 = vbcast.lane.b32.xlu0 %v2869, 256
        %v2872 = vpop.permute.xlu0 %2871
        %s2874 = sor.u32 256, 8
        %2875 = vbcast.lane.b32.xlu0 %v2869, %s2874
        %v2876 = vpop.permute.xlu0 %2875
        %s2878 = sor.u32 256, 16
        %2879 = vbcast.lane.b32.xlu0 %v2869, %s2878
        %v2880 = vpop.permute.xlu0 %2879
        %s2882 = sor.u32 256, 24
        %2883 = vbcast.lane.b32.xlu0 %v2869, %s2882
        %v2884 = vpop.permute.xlu0 %2883
        %s2886 = sor.u32 256, 32
        %2887 = vbcast.lane.b32.xlu0 %v2869, %s2886
        %v2888 = vpop.permute.xlu0 %2887
        %s2890 = sor.u32 256, 40
        %2891 = vbcast.lane.b32.xlu0 %v2869, %s2890
        %v2892 = vpop.permute.xlu0 %2891
        %s2894 = sor.u32 256, 48
        %2895 = vbcast.lane.b32.xlu0 %v2869, %s2894
        %v2896 = vpop.permute.xlu0 %2895
        %s2898 = sor.u32 256, 56
        %2899 = vbcast.lane.b32.xlu0 %v2869, %s2898
        %v2900 = vpop.permute.xlu0 %2899
        %s2902 = sor.u32 256, 64
        %2903 = vbcast.lane.b32.xlu0 %v2869, %s2902
        %v2904 = vpop.permute.xlu0 %2903
        %s2906 = sor.u32 256, 72
        %2907 = vbcast.lane.b32.xlu0 %v2869, %s2906
        %v2908 = vpop.permute.xlu0 %2907
        %s2910 = sor.u32 256, 80
        %2911 = vbcast.lane.b32.xlu0 %v2869, %s2910
        %v2912 = vpop.permute.xlu0 %2911
        %s2914 = sor.u32 256, 88
        %2915 = vbcast.lane.b32.xlu0 %v2869, %s2914
        %v2916 = vpop.permute.xlu0 %2915
        %s2918 = sor.u32 256, 96
        %2919 = vbcast.lane.b32.xlu0 %v2869, %s2918
        %v2920 = vpop.permute.xlu0 %2919
        %s2922 = sor.u32 256, 104
        %2923 = vbcast.lane.b32.xlu0 %v2869, %s2922
        %v2924 = vpop.permute.xlu0 %2923
        %s2926 = sor.u32 256, 112
        %2927 = vbcast.lane.b32.xlu0 %v2869, %s2926
        %v2928 = vpop.permute.xlu0 %2927
        %s2930 = sor.u32 256, 120
        %2931 = vbcast.lane.b32.xlu0 %v2869, %s2930
        %v2932 = vpop.permute.xlu0 %2931
        %v2933 = vlaneseq
        %v2934 = vshrl.u32 %v2933, 7
        %v2935 = vsub.s32 1, %v2934
        %v2936 = vrot.slane %v2756, %v2935
        %2938 = vbcast.lane.b32.xlu0 %v2936, 256
        %v2939 = vpop.permute.xlu0 %2938
        %s2941 = sor.u32 256, 8
        %2942 = vbcast.lane.b32.xlu0 %v2936, %s2941
        %v2943 = vpop.permute.xlu0 %2942
        %s2945 = sor.u32 256, 16
        %2946 = vbcast.lane.b32.xlu0 %v2936, %s2945
        %v2947 = vpop.permute.xlu0 %2946
        %s2949 = sor.u32 256, 24
        %2950 = vbcast.lane.b32.xlu0 %v2936, %s2949
        %v2951 = vpop.permute.xlu0 %2950
        %s2953 = sor.u32 256, 32
        %2954 = vbcast.lane.b32.xlu0 %v2936, %s2953
        %v2955 = vpop.permute.xlu0 %2954
        %s2957 = sor.u32 256, 40
        %2958 = vbcast.lane.b32.xlu0 %v2936, %s2957
        %v2959 = vpop.permute.xlu0 %2958
        %s2961 = sor.u32 256, 48
        %2962 = vbcast.lane.b32.xlu0 %v2936, %s2961
        %v2963 = vpop.permute.xlu0 %2962
        %s2965 = sor.u32 256, 56
        %2966 = vbcast.lane.b32.xlu0 %v2936, %s2965
        %v2967 = vpop.permute.xlu0 %2966
        %s2969 = sor.u32 256, 64
        %2970 = vbcast.lane.b32.xlu0 %v2936, %s2969
        %v2971 = vpop.permute.xlu0 %2970
        %s2973 = sor.u32 256, 72
        %2974 = vbcast.lane.b32.xlu0 %v2936, %s2973
        %v2975 = vpop.permute.xlu0 %2974
        %s2977 = sor.u32 256, 80
        %2978 = vbcast.lane.b32.xlu0 %v2936, %s2977
        %v2979 = vpop.permute.xlu0 %2978
        %s2981 = sor.u32 256, 88
        %2982 = vbcast.lane.b32.xlu0 %v2936, %s2981
        %v2983 = vpop.permute.xlu0 %2982
        %s2985 = sor.u32 256, 96
        %2986 = vbcast.lane.b32.xlu0 %v2936, %s2985
        %v2987 = vpop.permute.xlu0 %2986
        %s2989 = sor.u32 256, 104
        %2990 = vbcast.lane.b32.xlu0 %v2936, %s2989
        %v2991 = vpop.permute.xlu0 %2990
        %s2993 = sor.u32 256, 112
        %2994 = vbcast.lane.b32.xlu0 %v2936, %s2993
        %v2995 = vpop.permute.xlu0 %2994
        %s2997 = sor.u32 256, 120
        %2998 = vbcast.lane.b32.xlu0 %v2936, %s2997
        %v2999 = vpop.permute.xlu0 %2998
        %v3000 = vlaneseq
        %v3001 = vshrl.u32 %v3000, 7
        %v3002 = vsub.s32 2, %v3001
        %v3003 = vrot.slane %v2756, %v3002
        %3005 = vbcast.lane.b32.xlu0 %v3003, 256
        %v3006 = vpop.permute.xlu0 %3005
        %s3008 = sor.u32 256, 8
        %3009 = vbcast.lane.b32.xlu0 %v3003, %s3008
        %v3010 = vpop.permute.xlu0 %3009
        %s3012 = sor.u32 256, 16
        %3013 = vbcast.lane.b32.xlu0 %v3003, %s3012
        %v3014 = vpop.permute.xlu0 %3013
        %s3016 = sor.u32 256, 24
        %3017 = vbcast.lane.b32.xlu0 %v3003, %s3016
        %v3018 = vpop.permute.xlu0 %3017
        %s3020 = sor.u32 256, 32
        %3021 = vbcast.lane.b32.xlu0 %v3003, %s3020
        %v3022 = vpop.permute.xlu0 %3021
        %s3024 = sor.u32 256, 40
        %3025 = vbcast.lane.b32.xlu0 %v3003, %s3024
        %v3026 = vpop.permute.xlu0 %3025
        %s3028 = sor.u32 256, 48
        %3029 = vbcast.lane.b32.xlu0 %v3003, %s3028
        %v3030 = vpop.permute.xlu0 %3029
        %s3032 = sor.u32 256, 56
        %3033 = vbcast.lane.b32.xlu0 %v3003, %s3032
        %v3034 = vpop.permute.xlu0 %3033
        %s3036 = sor.u32 256, 64
        %3037 = vbcast.lane.b32.xlu0 %v3003, %s3036
        %v3038 = vpop.permute.xlu0 %3037
        %s3040 = sor.u32 256, 72
        %3041 = vbcast.lane.b32.xlu0 %v3003, %s3040
        %v3042 = vpop.permute.xlu0 %3041
        %s3044 = sor.u32 256, 80
        %3045 = vbcast.lane.b32.xlu0 %v3003, %s3044
        %v3046 = vpop.permute.xlu0 %3045
        %s3048 = sor.u32 256, 88
        %3049 = vbcast.lane.b32.xlu0 %v3003, %s3048
        %v3050 = vpop.permute.xlu0 %3049
        %s3052 = sor.u32 256, 96
        %3053 = vbcast.lane.b32.xlu0 %v3003, %s3052
        %v3054 = vpop.permute.xlu0 %3053
        %s3056 = sor.u32 256, 104
        %3057 = vbcast.lane.b32.xlu0 %v3003, %s3056
        %v3058 = vpop.permute.xlu0 %3057
        %s3060 = sor.u32 256, 112
        %3061 = vbcast.lane.b32.xlu0 %v3003, %s3060
        %v3062 = vpop.permute.xlu0 %3061
        %s3064 = sor.u32 256, 120
        %3065 = vbcast.lane.b32.xlu0 %v3003, %s3064
        %v3066 = vpop.permute.xlu0 %3065
        %v3067 = vlaneseq
        %v3068 = vshrl.u32 %v3067, 7
        %v3069 = vsub.s32 3, %v3068
        %v3070 = vrot.slane %v2756, %v3069
        %3072 = vbcast.lane.b32.xlu0 %v3070, 256
        %v3073 = vpop.permute.xlu0 %3072
        %s3075 = sor.u32 256, 8
        %3076 = vbcast.lane.b32.xlu0 %v3070, %s3075
        %v3077 = vpop.permute.xlu0 %3076
        %s3079 = sor.u32 256, 16
        %3080 = vbcast.lane.b32.xlu0 %v3070, %s3079
        %v3081 = vpop.permute.xlu0 %3080
        %s3083 = sor.u32 256, 24
        %3084 = vbcast.lane.b32.xlu0 %v3070, %s3083
        %v3085 = vpop.permute.xlu0 %3084
        %s3087 = sor.u32 256, 32
        %3088 = vbcast.lane.b32.xlu0 %v3070, %s3087
        %v3089 = vpop.permute.xlu0 %3088
        %s3091 = sor.u32 256, 40
        %3092 = vbcast.lane.b32.xlu0 %v3070, %s3091
        %v3093 = vpop.permute.xlu0 %3092
        %s3095 = sor.u32 256, 48
        %3096 = vbcast.lane.b32.xlu0 %v3070, %s3095
        %v3097 = vpop.permute.xlu0 %3096
        %s3099 = sor.u32 256, 56
        %3100 = vbcast.lane.b32.xlu0 %v3070, %s3099
        %v3101 = vpop.permute.xlu0 %3100
        %s3103 = sor.u32 256, 64
        %3104 = vbcast.lane.b32.xlu0 %v3070, %s3103
        %v3105 = vpop.permute.xlu0 %3104
        %s3107 = sor.u32 256, 72
        %3108 = vbcast.lane.b32.xlu0 %v3070, %s3107
        %v3109 = vpop.permute.xlu0 %3108
        %s3111 = sor.u32 256, 80
        %3112 = vbcast.lane.b32.xlu0 %v3070, %s3111
        %v3113 = vpop.permute.xlu0 %3112
        %s3115 = sor.u32 256, 88
        %3116 = vbcast.lane.b32.xlu0 %v3070, %s3115
        %v3117 = vpop.permute.xlu0 %3116
        %s3119 = sor.u32 256, 96
        %3120 = vbcast.lane.b32.xlu0 %v3070, %s3119
        %v3121 = vpop.permute.xlu0 %3120
        %s3123 = sor.u32 256, 104
        %3124 = vbcast.lane.b32.xlu0 %v3070, %s3123
        %v3125 = vpop.permute.xlu0 %3124
        %s3127 = sor.u32 256, 112
        %3128 = vbcast.lane.b32.xlu0 %v3070, %s3127
        %v3129 = vpop.permute.xlu0 %3128
        %s3131 = sor.u32 256, 120
        %3132 = vbcast.lane.b32.xlu0 %v3070, %s3131
        %v3133 = vpop.permute.xlu0 %3132
        %v3134 = vlaneseq
        %v3135 = vshrl.u32 %v3134, 7
        %v3136 = vsub.s32 4, %v3135
        %v3137 = vrot.slane %v2756, %v3136
        %3139 = vbcast.lane.b32.xlu0 %v3137, 256
        %v3140 = vpop.permute.xlu0 %3139
        %s3142 = sor.u32 256, 8
        %3143 = vbcast.lane.b32.xlu0 %v3137, %s3142
        %v3144 = vpop.permute.xlu0 %3143
        %s3146 = sor.u32 256, 16
        %3147 = vbcast.lane.b32.xlu0 %v3137, %s3146
        %v3148 = vpop.permute.xlu0 %3147
        %s3150 = sor.u32 256, 24
        %3151 = vbcast.lane.b32.xlu0 %v3137, %s3150
        %v3152 = vpop.permute.xlu0 %3151
        %s3154 = sor.u32 256, 32
        %3155 = vbcast.lane.b32.xlu0 %v3137, %s3154
        %v3156 = vpop.permute.xlu0 %3155
        %s3158 = sor.u32 256, 40
        %3159 = vbcast.lane.b32.xlu0 %v3137, %s3158
        %v3160 = vpop.permute.xlu0 %3159
        %s3162 = sor.u32 256, 48
        %3163 = vbcast.lane.b32.xlu0 %v3137, %s3162
        %v3164 = vpop.permute.xlu0 %3163
        %s3166 = sor.u32 256, 56
        %3167 = vbcast.lane.b32.xlu0 %v3137, %s3166
        %v3168 = vpop.permute.xlu0 %3167
        %s3170 = sor.u32 256, 64
        %3171 = vbcast.lane.b32.xlu0 %v3137, %s3170
        %v3172 = vpop.permute.xlu0 %3171
        %s3174 = sor.u32 256, 72
        %3175 = vbcast.lane.b32.xlu0 %v3137, %s3174
        %v3176 = vpop.permute.xlu0 %3175
        %s3178 = sor.u32 256, 80
        %3179 = vbcast.lane.b32.xlu0 %v3137, %s3178
        %v3180 = vpop.permute.xlu0 %3179
        %s3182 = sor.u32 256, 88
        %3183 = vbcast.lane.b32.xlu0 %v3137, %s3182
        %v3184 = vpop.permute.xlu0 %3183
        %s3186 = sor.u32 256, 96
        %3187 = vbcast.lane.b32.xlu0 %v3137, %s3186
        %v3188 = vpop.permute.xlu0 %3187
        %s3190 = sor.u32 256, 104
        %3191 = vbcast.lane.b32.xlu0 %v3137, %s3190
        %v3192 = vpop.permute.xlu0 %3191
        %s3194 = sor.u32 256, 112
        %3195 = vbcast.lane.b32.xlu0 %v3137, %s3194
        %v3196 = vpop.permute.xlu0 %3195
        %s3198 = sor.u32 256, 120
        %3199 = vbcast.lane.b32.xlu0 %v3137, %s3198
        %v3200 = vpop.permute.xlu0 %3199
        %v3201 = vlaneseq
        %v3202 = vshrl.u32 %v3201, 7
        %v3203 = vsub.s32 5, %v3202
        %v3204 = vrot.slane %v2756, %v3203
        %3206 = vbcast.lane.b32.xlu0 %v3204, 256
        %v3207 = vpop.permute.xlu0 %3206
        %s3209 = sor.u32 256, 8
        %3210 = vbcast.lane.b32.xlu0 %v3204, %s3209
        %v3211 = vpop.permute.xlu0 %3210
        %s3213 = sor.u32 256, 16
        %3214 = vbcast.lane.b32.xlu0 %v3204, %s3213
        %v3215 = vpop.permute.xlu0 %3214
        %s3217 = sor.u32 256, 24
        %3218 = vbcast.lane.b32.xlu0 %v3204, %s3217
        %v3219 = vpop.permute.xlu0 %3218
        %s3221 = sor.u32 256, 32
        %3222 = vbcast.lane.b32.xlu0 %v3204, %s3221
        %v3223 = vpop.permute.xlu0 %3222
        %s3225 = sor.u32 256, 40
        %3226 = vbcast.lane.b32.xlu0 %v3204, %s3225
        %v3227 = vpop.permute.xlu0 %3226
        %s3229 = sor.u32 256, 48
        %3230 = vbcast.lane.b32.xlu0 %v3204, %s3229
        %v3231 = vpop.permute.xlu0 %3230
        %s3233 = sor.u32 256, 56
        %3234 = vbcast.lane.b32.xlu0 %v3204, %s3233
        %v3235 = vpop.permute.xlu0 %3234
        %s3237 = sor.u32 256, 64
        %3238 = vbcast.lane.b32.xlu0 %v3204, %s3237
        %v3239 = vpop.permute.xlu0 %3238
        %s3241 = sor.u32 256, 72
        %3242 = vbcast.lane.b32.xlu0 %v3204, %s3241
        %v3243 = vpop.permute.xlu0 %3242
        %s3245 = sor.u32 256, 80
        %3246 = vbcast.lane.b32.xlu0 %v3204, %s3245
        %v3247 = vpop.permute.xlu0 %3246
        %s3249 = sor.u32 256, 88
        %3250 = vbcast.lane.b32.xlu0 %v3204, %s3249
        %v3251 = vpop.permute.xlu0 %3250
        %s3253 = sor.u32 256, 96
        %3254 = vbcast.lane.b32.xlu0 %v3204, %s3253
        %v3255 = vpop.permute.xlu0 %3254
        %s3257 = sor.u32 256, 104
        %3258 = vbcast.lane.b32.xlu0 %v3204, %s3257
        %v3259 = vpop.permute.xlu0 %3258
        %s3261 = sor.u32 256, 112
        %3262 = vbcast.lane.b32.xlu0 %v3204, %s3261
        %v3263 = vpop.permute.xlu0 %3262
        %s3265 = sor.u32 256, 120
        %3266 = vbcast.lane.b32.xlu0 %v3204, %s3265
        %v3267 = vpop.permute.xlu0 %3266
        %v3268 = vlaneseq
        %v3269 = vshrl.u32 %v3268, 7
        %v3270 = vsub.s32 6, %v3269
        %v3271 = vrot.slane %v2756, %v3270
        %3273 = vbcast.lane.b32.xlu0 %v3271, 256
        %v3274 = vpop.permute.xlu0 %3273
        %s3276 = sor.u32 256, 8
        %3277 = vbcast.lane.b32.xlu0 %v3271, %s3276
        %v3278 = vpop.permute.xlu0 %3277
        %s3280 = sor.u32 256, 16
        %3281 = vbcast.lane.b32.xlu0 %v3271, %s3280
        %v3282 = vpop.permute.xlu0 %3281
        %s3284 = sor.u32 256, 24
        %3285 = vbcast.lane.b32.xlu0 %v3271, %s3284
        %v3286 = vpop.permute.xlu0 %3285
        %s3288 = sor.u32 256, 32
        %3289 = vbcast.lane.b32.xlu0 %v3271, %s3288
        %v3290 = vpop.permute.xlu0 %3289
        %s3292 = sor.u32 256, 40
        %3293 = vbcast.lane.b32.xlu0 %v3271, %s3292
        %v3294 = vpop.permute.xlu0 %3293
        %s3296 = sor.u32 256, 48
        %3297 = vbcast.lane.b32.xlu0 %v3271, %s3296
        %v3298 = vpop.permute.xlu0 %3297
        %s3300 = sor.u32 256, 56
        %3301 = vbcast.lane.b32.xlu0 %v3271, %s3300
        %v3302 = vpop.permute.xlu0 %3301
        %s3304 = sor.u32 256, 64
        %3305 = vbcast.lane.b32.xlu0 %v3271, %s3304
        %v3306 = vpop.permute.xlu0 %3305
        %s3308 = sor.u32 256, 72
        %3309 = vbcast.lane.b32.xlu0 %v3271, %s3308
        %v3310 = vpop.permute.xlu0 %3309
        %s3312 = sor.u32 256, 80
        %3313 = vbcast.lane.b32.xlu0 %v3271, %s3312
        %v3314 = vpop.permute.xlu0 %3313
        %s3316 = sor.u32 256, 88
        %3317 = vbcast.lane.b32.xlu0 %v3271, %s3316
        %v3318 = vpop.permute.xlu0 %3317
        %s3320 = sor.u32 256, 96
        %3321 = vbcast.lane.b32.xlu0 %v3271, %s3320
        %v3322 = vpop.permute.xlu0 %3321
        %s3324 = sor.u32 256, 104
        %3325 = vbcast.lane.b32.xlu0 %v3271, %s3324
        %v3326 = vpop.permute.xlu0 %3325
        %s3328 = sor.u32 256, 112
        %3329 = vbcast.lane.b32.xlu0 %v3271, %s3328
        %v3330 = vpop.permute.xlu0 %3329
        %s3332 = sor.u32 256, 120
        %3333 = vbcast.lane.b32.xlu0 %v3271, %s3332
        %v3334 = vpop.permute.xlu0 %3333
        %v3335 = vlaneseq
        %v3336 = vshrl.u32 %v3335, 7
        %v3337 = vsub.s32 7, %v3336
        %v3338 = vrot.slane %v2756, %v3337
        %3340 = vbcast.lane.b32.xlu0 %v3338, 256
        %v3341 = vpop.permute.xlu0 %3340
        %s3343 = sor.u32 256, 8
        %3344 = vbcast.lane.b32.xlu0 %v3338, %s3343
        %v3345 = vpop.permute.xlu0 %3344
        %s3347 = sor.u32 256, 16
        %3348 = vbcast.lane.b32.xlu0 %v3338, %s3347
        %v3349 = vpop.permute.xlu0 %3348
        %s3351 = sor.u32 256, 24
        %3352 = vbcast.lane.b32.xlu0 %v3338, %s3351
        %v3353 = vpop.permute.xlu0 %3352
        %s3355 = sor.u32 256, 32
        %3356 = vbcast.lane.b32.xlu0 %v3338, %s3355
        %v3357 = vpop.permute.xlu0 %3356
        %s3359 = sor.u32 256, 40
        %3360 = vbcast.lane.b32.xlu0 %v3338, %s3359
        %v3361 = vpop.permute.xlu0 %3360
        %s3363 = sor.u32 256, 48
        %3364 = vbcast.lane.b32.xlu0 %v3338, %s3363
        %v3365 = vpop.permute.xlu0 %3364
        %s3367 = sor.u32 256, 56
        %3368 = vbcast.lane.b32.xlu0 %v3338, %s3367
        %v3369 = vpop.permute.xlu0 %3368
        %s3371 = sor.u32 256, 64
        %3372 = vbcast.lane.b32.xlu0 %v3338, %s3371
        %v3373 = vpop.permute.xlu0 %3372
        %s3375 = sor.u32 256, 72
        %3376 = vbcast.lane.b32.xlu0 %v3338, %s3375
        %v3377 = vpop.permute.xlu0 %3376
        %s3379 = sor.u32 256, 80
        %3380 = vbcast.lane.b32.xlu0 %v3338, %s3379
        %v3381 = vpop.permute.xlu0 %3380
        %s3383 = sor.u32 256, 88
        %3384 = vbcast.lane.b32.xlu0 %v3338, %s3383
        %v3385 = vpop.permute.xlu0 %3384
        %s3387 = sor.u32 256, 96
        %3388 = vbcast.lane.b32.xlu0 %v3338, %s3387
        %v3389 = vpop.permute.xlu0 %3388
        %s3391 = sor.u32 256, 104
        %3392 = vbcast.lane.b32.xlu0 %v3338, %s3391
        %v3393 = vpop.permute.xlu0 %3392
        %s3395 = sor.u32 256, 112
        %3396 = vbcast.lane.b32.xlu0 %v3338, %s3395
        %v3397 = vpop.permute.xlu0 %3396
        %s3399 = sor.u32 256, 120
        %3400 = vbcast.lane.b32.xlu0 %v3338, %s3399
        %v3401 = vpop.permute.xlu0 %3400
        %v3402 = vmul.f32 %v2872, %v1527
        %v3403 = vmul.f32 %v2876, %v1527
        %v3404 = vmul.f32 %v2880, %v1527
        %v3405 = vmul.f32 %v2884, %v1527
        %v3406 = vmul.f32 %v2888, %v1527
        %v3407 = vmul.f32 %v2892, %v1527
        %v3408 = vmul.f32 %v2896, %v1527
        %v3409 = vmul.f32 %v2900, %v1527
        %v3410 = vmul.f32 %v2904, %v1527
        %v3411 = vmul.f32 %v2908, %v1527
        %v3412 = vmul.f32 %v2912, %v1527
        %v3413 = vmul.f32 %v2916, %v1527
        %v3414 = vmul.f32 %v2920, %v1527
        %v3415 = vmul.f32 %v2924, %v1527
        %v3416 = vmul.f32 %v2928, %v1527
        %v3417 = vmul.f32 %v2932, %v1527
        %v3418 = vmul.f32 %v2939, %v1531
        %v3419 = vmul.f32 %v2943, %v1531
        %v3420 = vmul.f32 %v2947, %v1531
        %v3421 = vmul.f32 %v2951, %v1531
        %v3422 = vmul.f32 %v2955, %v1531
        %v3423 = vmul.f32 %v2959, %v1531
        %v3424 = vmul.f32 %v2963, %v1531
        %v3425 = vmul.f32 %v2967, %v1531
        %v3426 = vmul.f32 %v2971, %v1531
        %v3427 = vmul.f32 %v2975, %v1531
        %v3428 = vmul.f32 %v2979, %v1531
        %v3429 = vmul.f32 %v2983, %v1531
        %v3430 = vmul.f32 %v2987, %v1531
        %v3431 = vmul.f32 %v2991, %v1531
        %v3432 = vmul.f32 %v2995, %v1531
        %v3433 = vmul.f32 %v2999, %v1531
        %v3434 = vmul.f32 %v3006, %v1535
        %v3435 = vmul.f32 %v3010, %v1535
        %v3436 = vmul.f32 %v3014, %v1535
        %v3437 = vmul.f32 %v3018, %v1535
        %v3438 = vmul.f32 %v3022, %v1535
        %v3439 = vmul.f32 %v3026, %v1535
        %v3440 = vmul.f32 %v3030, %v1535
        %v3441 = vmul.f32 %v3034, %v1535
        %v3442 = vmul.f32 %v3038, %v1535
        %v3443 = vmul.f32 %v3042, %v1535
        %v3444 = vmul.f32 %v3046, %v1535
        %v3445 = vmul.f32 %v3050, %v1535
        %v3446 = vmul.f32 %v3054, %v1535
        %v3447 = vmul.f32 %v3058, %v1535
        %v3448 = vmul.f32 %v3062, %v1535
        %v3449 = vmul.f32 %v3066, %v1535
        %v3450 = vmul.f32 %v3073, %v1539
        %v3451 = vmul.f32 %v3077, %v1539
        %v3452 = vmul.f32 %v3081, %v1539
        %v3453 = vmul.f32 %v3085, %v1539
        %v3454 = vmul.f32 %v3089, %v1539
        %v3455 = vmul.f32 %v3093, %v1539
        %v3456 = vmul.f32 %v3097, %v1539
        %v3457 = vmul.f32 %v3101, %v1539
        %v3458 = vmul.f32 %v3105, %v1539
        %v3459 = vmul.f32 %v3109, %v1539
        %v3460 = vmul.f32 %v3113, %v1539
        %v3461 = vmul.f32 %v3117, %v1539
        %v3462 = vmul.f32 %v3121, %v1539
        %v3463 = vmul.f32 %v3125, %v1539
        %v3464 = vmul.f32 %v3129, %v1539
        %v3465 = vmul.f32 %v3133, %v1539
        %v3466 = vmul.f32 %v3140, %v1543
        %v3467 = vmul.f32 %v3144, %v1543
        %v3468 = vmul.f32 %v3148, %v1543
        %v3469 = vmul.f32 %v3152, %v1543
        %v3470 = vmul.f32 %v3156, %v1543
        %v3471 = vmul.f32 %v3160, %v1543
        %v3472 = vmul.f32 %v3164, %v1543
        %v3473 = vmul.f32 %v3168, %v1543
        %v3474 = vmul.f32 %v3172, %v1543
        %v3475 = vmul.f32 %v3176, %v1543
        %v3476 = vmul.f32 %v3180, %v1543
        %v3477 = vmul.f32 %v3184, %v1543
        %v3478 = vmul.f32 %v3188, %v1543
        %v3479 = vmul.f32 %v3192, %v1543
        %v3480 = vmul.f32 %v3196, %v1543
        %v3481 = vmul.f32 %v3200, %v1543
        %v3482 = vmul.f32 %v3207, %v1547
        %v3483 = vmul.f32 %v3211, %v1547
        %v3484 = vmul.f32 %v3215, %v1547
        %v3485 = vmul.f32 %v3219, %v1547
        %v3486 = vmul.f32 %v3223, %v1547
        %v3487 = vmul.f32 %v3227, %v1547
        %v3488 = vmul.f32 %v3231, %v1547
        %v3489 = vmul.f32 %v3235, %v1547
        %v3490 = vmul.f32 %v3239, %v1547
        %v3491 = vmul.f32 %v3243, %v1547
        %v3492 = vmul.f32 %v3247, %v1547
        %v3493 = vmul.f32 %v3251, %v1547
        %v3494 = vmul.f32 %v3255, %v1547
        %v3495 = vmul.f32 %v3259, %v1547
        %v3496 = vmul.f32 %v3263, %v1547
        %v3497 = vmul.f32 %v3267, %v1547
        %v3498 = vmul.f32 %v3274, %v1551
        %v3499 = vmul.f32 %v3278, %v1551
        %v3500 = vmul.f32 %v3282, %v1551
        %v3501 = vmul.f32 %v3286, %v1551
        %v3502 = vmul.f32 %v3290, %v1551
        %v3503 = vmul.f32 %v3294, %v1551
        %v3504 = vmul.f32 %v3298, %v1551
        %v3505 = vmul.f32 %v3302, %v1551
        %v3506 = vmul.f32 %v3306, %v1551
        %v3507 = vmul.f32 %v3310, %v1551
        %v3508 = vmul.f32 %v3314, %v1551
        %v3509 = vmul.f32 %v3318, %v1551
        %v3510 = vmul.f32 %v3322, %v1551
        %v3511 = vmul.f32 %v3326, %v1551
        %v3512 = vmul.f32 %v3330, %v1551
        %v3513 = vmul.f32 %v3334, %v1551
        %v3514 = vmul.f32 %v3341, %v1555
        %v3515 = vmul.f32 %v3345, %v1555
        %v3516 = vmul.f32 %v3349, %v1555
        %v3517 = vmul.f32 %v3353, %v1555
        %v3518 = vmul.f32 %v3357, %v1555
        %v3519 = vmul.f32 %v3361, %v1555
        %v3520 = vmul.f32 %v3365, %v1555
        %v3521 = vmul.f32 %v3369, %v1555
        %v3522 = vmul.f32 %v3373, %v1555
        %v3523 = vmul.f32 %v3377, %v1555
        %v3524 = vmul.f32 %v3381, %v1555
        %v3525 = vmul.f32 %v3385, %v1555
        %v3526 = vmul.f32 %v3389, %v1555
        %v3527 = vmul.f32 %v3393, %v1555
        %v3528 = vmul.f32 %v3397, %v1555
        %v3529 = vmul.f32 %v3401, %v1555
        %v3530 = vlaneseq
        %v3531 = vshrl.u32 %v3530, 7
        %v3532 = vsub.s32 0, %v3531
        %v3533 = vrot.slane %v2858, %v3532
        %v3534 = vlaneseq
        %v3535 = vshrl.u32 %v3534, 7
        %v3536 = vsub.s32 0, %v3535
        %v3537 = vrot.slane %v2859, %v3536
        %v3538 = vlaneseq
        %v3539 = vshrl.u32 %v3538, 7
        %v3540 = vsub.s32 0, %v3539
        %v3541 = vrot.slane %v2860, %v3540
        %v3542 = vlaneseq
        %v3543 = vshrl.u32 %v3542, 7
        %v3544 = vsub.s32 0, %v3543
        %v3545 = vrot.slane %v2861, %v3544
        %v3546 = vlaneseq
        %v3547 = vshrl.u32 %v3546, 7
        %v3548 = vsub.s32 0, %v3547
        %v3549 = vrot.slane %v2862, %v3548
        %v3550 = vlaneseq
        %v3551 = vshrl.u32 %v3550, 7
        %v3552 = vsub.s32 0, %v3551
        %v3553 = vrot.slane %v2863, %v3552
        %v3554 = vlaneseq
        %v3555 = vshrl.u32 %v3554, 7
        %v3556 = vsub.s32 0, %v3555
        %v3557 = vrot.slane %v2864, %v3556
        %v3558 = vlaneseq
        %v3559 = vshrl.u32 %v3558, 7
        %v3560 = vsub.s32 0, %v3559
        %v3561 = vrot.slane %v2865, %v3560
        %v3562 = vmul.f32 %v3533, %v718
        %v3563 = vmul.f32 %v3533, %v719
        %v3564 = vmul.f32 %v3533, %v720
        %v3565 = vmul.f32 %v3533, %v721
        %v3566 = vmul.f32 %v3533, %v722
        %v3567 = vmul.f32 %v3533, %v723
        %v3568 = vmul.f32 %v3533, %v724
        %v3569 = vmul.f32 %v3533, %v725
        %v3570 = vmul.f32 %v3533, %v726
        %v3571 = vmul.f32 %v3533, %v727
        %v3572 = vmul.f32 %v3533, %v728
        %v3573 = vmul.f32 %v3533, %v729
        %v3574 = vmul.f32 %v3533, %v730
        %v3575 = vmul.f32 %v3533, %v731
        %v3576 = vmul.f32 %v3533, %v732
        %v3577 = vmul.f32 %v3533, %v733
        %v3578 = vmul.f32 %v3537, %v734
        %v3579 = vmul.f32 %v3537, %v735
        %v3580 = vmul.f32 %v3537, %v736
        %v3581 = vmul.f32 %v3537, %v737
        %v3582 = vmul.f32 %v3537, %v738
        %v3583 = vmul.f32 %v3537, %v739
        %v3584 = vmul.f32 %v3537, %v740
        %v3585 = vmul.f32 %v3537, %v741
        %v3586 = vmul.f32 %v3537, %v742
        %v3587 = vmul.f32 %v3537, %v743
        %v3588 = vmul.f32 %v3537, %v744
        %v3589 = vmul.f32 %v3537, %v745
        %v3590 = vmul.f32 %v3537, %v746
        %v3591 = vmul.f32 %v3537, %v747
        %v3592 = vmul.f32 %v3537, %v748
        %v3593 = vmul.f32 %v3537, %v749
        %v3594 = vmul.f32 %v3541, %v750
        %v3595 = vmul.f32 %v3541, %v751
        %v3596 = vmul.f32 %v3541, %v752
        %v3597 = vmul.f32 %v3541, %v753
        %v3598 = vmul.f32 %v3541, %v754
        %v3599 = vmul.f32 %v3541, %v755
        %v3600 = vmul.f32 %v3541, %v756
        %v3601 = vmul.f32 %v3541, %v757
        %v3602 = vmul.f32 %v3541, %v758
        %v3603 = vmul.f32 %v3541, %v759
        %v3604 = vmul.f32 %v3541, %v760
        %v3605 = vmul.f32 %v3541, %v761
        %v3606 = vmul.f32 %v3541, %v762
        %v3607 = vmul.f32 %v3541, %v763
        %v3608 = vmul.f32 %v3541, %v764
        %v3609 = vmul.f32 %v3541, %v765
        %v3610 = vmul.f32 %v3545, %v766
        %v3611 = vmul.f32 %v3545, %v767
        %v3612 = vmul.f32 %v3545, %v768
        %v3613 = vmul.f32 %v3545, %v769
        %v3614 = vmul.f32 %v3545, %v770
        %v3615 = vmul.f32 %v3545, %v771
        %v3616 = vmul.f32 %v3545, %v772
        %v3617 = vmul.f32 %v3545, %v773
        %v3618 = vmul.f32 %v3545, %v774
        %v3619 = vmul.f32 %v3545, %v775
        %v3620 = vmul.f32 %v3545, %v776
        %v3621 = vmul.f32 %v3545, %v777
        %v3622 = vmul.f32 %v3545, %v778
        %v3623 = vmul.f32 %v3545, %v779
        %v3624 = vmul.f32 %v3545, %v780
        %v3625 = vmul.f32 %v3545, %v781
        %v3626 = vmul.f32 %v3549, %v782
        %v3627 = vmul.f32 %v3549, %v783
        %v3628 = vmul.f32 %v3549, %v784
        %v3629 = vmul.f32 %v3549, %v785
        %v3630 = vmul.f32 %v3549, %v786
        %v3631 = vmul.f32 %v3549, %v787
        %v3632 = vmul.f32 %v3549, %v788
        %v3633 = vmul.f32 %v3549, %v789
        %v3634 = vmul.f32 %v3549, %v790
        %v3635 = vmul.f32 %v3549, %v791
        %v3636 = vmul.f32 %v3549, %v792
        %v3637 = vmul.f32 %v3549, %v793
        %v3638 = vmul.f32 %v3549, %v794
        %v3639 = vmul.f32 %v3549, %v795
        %v3640 = vmul.f32 %v3549, %v796
        %v3641 = vmul.f32 %v3549, %v797
        %v3642 = vmul.f32 %v3553, %v798
        %v3643 = vmul.f32 %v3553, %v799
        %v3644 = vmul.f32 %v3553, %v800
        %v3645 = vmul.f32 %v3553, %v801
        %v3646 = vmul.f32 %v3553, %v802
        %v3647 = vmul.f32 %v3553, %v803
        %v3648 = vmul.f32 %v3553, %v804
        %v3649 = vmul.f32 %v3553, %v805
        %v3650 = vmul.f32 %v3553, %v806
        %v3651 = vmul.f32 %v3553, %v807
        %v3652 = vmul.f32 %v3553, %v808
        %v3653 = vmul.f32 %v3553, %v809
        %v3654 = vmul.f32 %v3553, %v810
        %v3655 = vmul.f32 %v3553, %v811
        %v3656 = vmul.f32 %v3553, %v812
        %v3657 = vmul.f32 %v3553, %v813
        %v3658 = vmul.f32 %v3557, %v814
        %v3659 = vmul.f32 %v3557, %v815
        %v3660 = vmul.f32 %v3557, %v816
        %v3661 = vmul.f32 %v3557, %v817
        %v3662 = vmul.f32 %v3557, %v818
        %v3663 = vmul.f32 %v3557, %v819
        %v3664 = vmul.f32 %v3557, %v820
        %v3665 = vmul.f32 %v3557, %v821
        %v3666 = vmul.f32 %v3557, %v822
        %v3667 = vmul.f32 %v3557, %v823
        %v3668 = vmul.f32 %v3557, %v824
        %v3669 = vmul.f32 %v3557, %v825
        %v3670 = vmul.f32 %v3557, %v826
        %v3671 = vmul.f32 %v3557, %v827
        %v3672 = vmul.f32 %v3557, %v828
        %v3673 = vmul.f32 %v3557, %v829
        %v3674 = vmul.f32 %v3561, %v830
        %v3675 = vmul.f32 %v3561, %v831
        %v3676 = vmul.f32 %v3561, %v832
        %v3677 = vmul.f32 %v3561, %v833
        %v3678 = vmul.f32 %v3561, %v834
        %v3679 = vmul.f32 %v3561, %v835
        %v3680 = vmul.f32 %v3561, %v836
        %v3681 = vmul.f32 %v3561, %v837
        %v3682 = vmul.f32 %v3561, %v838
        %v3683 = vmul.f32 %v3561, %v839
        %v3684 = vmul.f32 %v3561, %v840
        %v3685 = vmul.f32 %v3561, %v841
        %v3686 = vmul.f32 %v3561, %v842
        %v3687 = vmul.f32 %v3561, %v843
        %v3688 = vmul.f32 %v3561, %v844
        %v3689 = vmul.f32 %v3561, %v845
        %v3690 = vadd.f32 %v974, %v3562
        %v3691 = vadd.f32 %v975, %v3563
        %v3692 = vadd.f32 %v976, %v3564
        %v3693 = vadd.f32 %v977, %v3565
        %v3694 = vadd.f32 %v978, %v3566
        %v3695 = vadd.f32 %v979, %v3567
        %v3696 = vadd.f32 %v980, %v3568
        %v3697 = vadd.f32 %v981, %v3569
        %v3698 = vadd.f32 %v982, %v3570
        %v3699 = vadd.f32 %v983, %v3571
        %v3700 = vadd.f32 %v984, %v3572
        %v3701 = vadd.f32 %v985, %v3573
        %v3702 = vadd.f32 %v986, %v3574
        %v3703 = vadd.f32 %v987, %v3575
        %v3704 = vadd.f32 %v988, %v3576
        %v3705 = vadd.f32 %v989, %v3577
        %v3706 = vadd.f32 %v990, %v3578
        %v3707 = vadd.f32 %v991, %v3579
        %v3708 = vadd.f32 %v992, %v3580
        %v3709 = vadd.f32 %v993, %v3581
        %v3710 = vadd.f32 %v994, %v3582
        %v3711 = vadd.f32 %v995, %v3583
        %v3712 = vadd.f32 %v996, %v3584
        %v3713 = vadd.f32 %v997, %v3585
        %v3714 = vadd.f32 %v998, %v3586
        %v3715 = vadd.f32 %v999, %v3587
        %v3716 = vadd.f32 %v1000, %v3588
        %v3717 = vadd.f32 %v1001, %v3589
        %v3718 = vadd.f32 %v1002, %v3590
        %v3719 = vadd.f32 %v1003, %v3591
        %v3720 = vadd.f32 %v1004, %v3592
        %v3721 = vadd.f32 %v1005, %v3593
        %v3722 = vadd.f32 %v1006, %v3594
        %v3723 = vadd.f32 %v1007, %v3595
        %v3724 = vadd.f32 %v1008, %v3596
        %v3725 = vadd.f32 %v1009, %v3597
        %v3726 = vadd.f32 %v1010, %v3598
        %v3727 = vadd.f32 %v1011, %v3599
        %v3728 = vadd.f32 %v1012, %v3600
        %v3729 = vadd.f32 %v1013, %v3601
        %v3730 = vadd.f32 %v1014, %v3602
        %v3731 = vadd.f32 %v1015, %v3603
        %v3732 = vadd.f32 %v1016, %v3604
        %v3733 = vadd.f32 %v1017, %v3605
        %v3734 = vadd.f32 %v1018, %v3606
        %v3735 = vadd.f32 %v1019, %v3607
        %v3736 = vadd.f32 %v1020, %v3608
        %v3737 = vadd.f32 %v1021, %v3609
        %v3738 = vadd.f32 %v1022, %v3610
        %v3739 = vadd.f32 %v1023, %v3611
        %v3740 = vadd.f32 %v1024, %v3612
        %v3741 = vadd.f32 %v1025, %v3613
        %v3742 = vadd.f32 %v1026, %v3614
        %v3743 = vadd.f32 %v1027, %v3615
        %v3744 = vadd.f32 %v1028, %v3616
        %v3745 = vadd.f32 %v1029, %v3617
        %v3746 = vadd.f32 %v1030, %v3618
        %v3747 = vadd.f32 %v1031, %v3619
        %v3748 = vadd.f32 %v1032, %v3620
        %v3749 = vadd.f32 %v1033, %v3621
        %v3750 = vadd.f32 %v1034, %v3622
        %v3751 = vadd.f32 %v1035, %v3623
        %v3752 = vadd.f32 %v1036, %v3624
        %v3753 = vadd.f32 %v1037, %v3625
        %v3754 = vadd.f32 %v1038, %v3626
        %v3755 = vadd.f32 %v1039, %v3627
        %v3756 = vadd.f32 %v1040, %v3628
        %v3757 = vadd.f32 %v1041, %v3629
        %v3758 = vadd.f32 %v1042, %v3630
        %v3759 = vadd.f32 %v1043, %v3631
        %v3760 = vadd.f32 %v1044, %v3632
        %v3761 = vadd.f32 %v1045, %v3633
        %v3762 = vadd.f32 %v1046, %v3634
        %v3763 = vadd.f32 %v1047, %v3635
        %v3764 = vadd.f32 %v1048, %v3636
        %v3765 = vadd.f32 %v1049, %v3637
        %v3766 = vadd.f32 %v1050, %v3638
        %v3767 = vadd.f32 %v1051, %v3639
        %v3768 = vadd.f32 %v1052, %v3640
        %v3769 = vadd.f32 %v1053, %v3641
        %v3770 = vadd.f32 %v1054, %v3642
        %v3771 = vadd.f32 %v1055, %v3643
        %v3772 = vadd.f32 %v1056, %v3644
        %v3773 = vadd.f32 %v1057, %v3645
        %v3774 = vadd.f32 %v1058, %v3646
        %v3775 = vadd.f32 %v1059, %v3647
        %v3776 = vadd.f32 %v1060, %v3648
        %v3777 = vadd.f32 %v1061, %v3649
        %v3778 = vadd.f32 %v1062, %v3650
        %v3779 = vadd.f32 %v1063, %v3651
        %v3780 = vadd.f32 %v1064, %v3652
        %v3781 = vadd.f32 %v1065, %v3653
        %v3782 = vadd.f32 %v1066, %v3654
        %v3783 = vadd.f32 %v1067, %v3655
        %v3784 = vadd.f32 %v1068, %v3656
        %v3785 = vadd.f32 %v1069, %v3657
        %v3786 = vadd.f32 %v1070, %v3658
        %v3787 = vadd.f32 %v1071, %v3659
        %v3788 = vadd.f32 %v1072, %v3660
        %v3789 = vadd.f32 %v1073, %v3661
        %v3790 = vadd.f32 %v1074, %v3662
        %v3791 = vadd.f32 %v1075, %v3663
        %v3792 = vadd.f32 %v1076, %v3664
        %v3793 = vadd.f32 %v1077, %v3665
        %v3794 = vadd.f32 %v1078, %v3666
        %v3795 = vadd.f32 %v1079, %v3667
        %v3796 = vadd.f32 %v1080, %v3668
        %v3797 = vadd.f32 %v1081, %v3669
        %v3798 = vadd.f32 %v1082, %v3670
        %v3799 = vadd.f32 %v1083, %v3671
        %v3800 = vadd.f32 %v1084, %v3672
        %v3801 = vadd.f32 %v1085, %v3673
        %v3802 = vadd.f32 %v1086, %v3674
        %v3803 = vadd.f32 %v1087, %v3675
        %v3804 = vadd.f32 %v1088, %v3676
        %v3805 = vadd.f32 %v1089, %v3677
        %v3806 = vadd.f32 %v1090, %v3678
        %v3807 = vadd.f32 %v1091, %v3679
        %v3808 = vadd.f32 %v1092, %v3680
        %v3809 = vadd.f32 %v1093, %v3681
        %v3810 = vadd.f32 %v1094, %v3682
        %v3811 = vadd.f32 %v1095, %v3683
        %v3812 = vadd.f32 %v1096, %v3684
        %v3813 = vadd.f32 %v1097, %v3685
        %v3814 = vadd.f32 %v1098, %v3686
        %v3815 = vadd.f32 %v1099, %v3687
        %v3816 = vadd.f32 %v1100, %v3688
        %v3817 = vadd.f32 %v1101, %v3689
        %v3818 = vmax.f32 %v3690, -1.0
        %v3819 = vmax.f32 %v3691, -1.0
        %v3820 = vmax.f32 %v3692, -1.0
        %v3821 = vmax.f32 %v3693, -1.0
        %v3822 = vmax.f32 %v3694, -1.0
        %v3823 = vmax.f32 %v3695, -1.0
        %v3824 = vmax.f32 %v3696, -1.0
        %v3825 = vmax.f32 %v3697, -1.0
        %v3826 = vmax.f32 %v3698, -1.0
        %v3827 = vmax.f32 %v3699, -1.0
        %v3828 = vmax.f32 %v3700, -1.0
        %v3829 = vmax.f32 %v3701, -1.0
        %v3830 = vmax.f32 %v3702, -1.0
        %v3831 = vmax.f32 %v3703, -1.0
        %v3832 = vmax.f32 %v3704, -1.0
        %v3833 = vmax.f32 %v3705, -1.0
        %v3834 = vmax.f32 %v3706, -1.0
        %v3835 = vmax.f32 %v3707, -1.0
        %v3836 = vmax.f32 %v3708, -1.0
        %v3837 = vmax.f32 %v3709, -1.0
        %v3838 = vmax.f32 %v3710, -1.0
        %v3839 = vmax.f32 %v3711, -1.0
        %v3840 = vmax.f32 %v3712, -1.0
        %v3841 = vmax.f32 %v3713, -1.0
        %v3842 = vmax.f32 %v3714, -1.0
        %v3843 = vmax.f32 %v3715, -1.0
        %v3844 = vmax.f32 %v3716, -1.0
        %v3845 = vmax.f32 %v3717, -1.0
        %v3846 = vmax.f32 %v3718, -1.0
        %v3847 = vmax.f32 %v3719, -1.0
        %v3848 = vmax.f32 %v3720, -1.0
        %v3849 = vmax.f32 %v3721, -1.0
        %v3850 = vmax.f32 %v3722, -1.0
        %v3851 = vmax.f32 %v3723, -1.0
        %v3852 = vmax.f32 %v3724, -1.0
        %v3853 = vmax.f32 %v3725, -1.0
        %v3854 = vmax.f32 %v3726, -1.0
        %v3855 = vmax.f32 %v3727, -1.0
        %v3856 = vmax.f32 %v3728, -1.0
        %v3857 = vmax.f32 %v3729, -1.0
        %v3858 = vmax.f32 %v3730, -1.0
        %v3859 = vmax.f32 %v3731, -1.0
        %v3860 = vmax.f32 %v3732, -1.0
        %v3861 = vmax.f32 %v3733, -1.0
        %v3862 = vmax.f32 %v3734, -1.0
        %v3863 = vmax.f32 %v3735, -1.0
        %v3864 = vmax.f32 %v3736, -1.0
        %v3865 = vmax.f32 %v3737, -1.0
        %v3866 = vmax.f32 %v3738, -1.0
        %v3867 = vmax.f32 %v3739, -1.0
        %v3868 = vmax.f32 %v3740, -1.0
        %v3869 = vmax.f32 %v3741, -1.0
        %v3870 = vmax.f32 %v3742, -1.0
        %v3871 = vmax.f32 %v3743, -1.0
        %v3872 = vmax.f32 %v3744, -1.0
        %v3873 = vmax.f32 %v3745, -1.0
        %v3874 = vmax.f32 %v3746, -1.0
        %v3875 = vmax.f32 %v3747, -1.0
        %v3876 = vmax.f32 %v3748, -1.0
        %v3877 = vmax.f32 %v3749, -1.0
        %v3878 = vmax.f32 %v3750, -1.0
        %v3879 = vmax.f32 %v3751, -1.0
        %v3880 = vmax.f32 %v3752, -1.0
        %v3881 = vmax.f32 %v3753, -1.0
        %v3882 = vmax.f32 %v3754, -1.0
        %v3883 = vmax.f32 %v3755, -1.0
        %v3884 = vmax.f32 %v3756, -1.0
        %v3885 = vmax.f32 %v3757, -1.0
        %v3886 = vmax.f32 %v3758, -1.0
        %v3887 = vmax.f32 %v3759, -1.0
        %v3888 = vmax.f32 %v3760, -1.0
        %v3889 = vmax.f32 %v3761, -1.0
        %v3890 = vmax.f32 %v3762, -1.0
        %v3891 = vmax.f32 %v3763, -1.0
        %v3892 = vmax.f32 %v3764, -1.0
        %v3893 = vmax.f32 %v3765, -1.0
        %v3894 = vmax.f32 %v3766, -1.0
        %v3895 = vmax.f32 %v3767, -1.0
        %v3896 = vmax.f32 %v3768, -1.0
        %v3897 = vmax.f32 %v3769, -1.0
        %v3898 = vmax.f32 %v3770, -1.0
        %v3899 = vmax.f32 %v3771, -1.0
        %v3900 = vmax.f32 %v3772, -1.0
        %v3901 = vmax.f32 %v3773, -1.0
        %v3902 = vmax.f32 %v3774, -1.0
        %v3903 = vmax.f32 %v3775, -1.0
        %v3904 = vmax.f32 %v3776, -1.0
        %v3905 = vmax.f32 %v3777, -1.0
        %v3906 = vmax.f32 %v3778, -1.0
        %v3907 = vmax.f32 %v3779, -1.0
        %v3908 = vmax.f32 %v3780, -1.0
        %v3909 = vmax.f32 %v3781, -1.0
        %v3910 = vmax.f32 %v3782, -1.0
        %v3911 = vmax.f32 %v3783, -1.0
        %v3912 = vmax.f32 %v3784, -1.0
        %v3913 = vmax.f32 %v3785, -1.0
        %v3914 = vmax.f32 %v3786, -1.0
        %v3915 = vmax.f32 %v3787, -1.0
        %v3916 = vmax.f32 %v3788, -1.0
        %v3917 = vmax.f32 %v3789, -1.0
        %v3918 = vmax.f32 %v3790, -1.0
        %v3919 = vmax.f32 %v3791, -1.0
        %v3920 = vmax.f32 %v3792, -1.0
        %v3921 = vmax.f32 %v3793, -1.0
        %v3922 = vmax.f32 %v3794, -1.0
        %v3923 = vmax.f32 %v3795, -1.0
        %v3924 = vmax.f32 %v3796, -1.0
        %v3925 = vmax.f32 %v3797, -1.0
        %v3926 = vmax.f32 %v3798, -1.0
        %v3927 = vmax.f32 %v3799, -1.0
        %v3928 = vmax.f32 %v3800, -1.0
        %v3929 = vmax.f32 %v3801, -1.0
        %v3930 = vmax.f32 %v3802, -1.0
        %v3931 = vmax.f32 %v3803, -1.0
        %v3932 = vmax.f32 %v3804, -1.0
        %v3933 = vmax.f32 %v3805, -1.0
        %v3934 = vmax.f32 %v3806, -1.0
        %v3935 = vmax.f32 %v3807, -1.0
        %v3936 = vmax.f32 %v3808, -1.0
        %v3937 = vmax.f32 %v3809, -1.0
        %v3938 = vmax.f32 %v3810, -1.0
        %v3939 = vmax.f32 %v3811, -1.0
        %v3940 = vmax.f32 %v3812, -1.0
        %v3941 = vmax.f32 %v3813, -1.0
        %v3942 = vmax.f32 %v3814, -1.0
        %v3943 = vmax.f32 %v3815, -1.0
        %v3944 = vmax.f32 %v3816, -1.0
        %v3945 = vmax.f32 %v3817, -1.0
        %v3946 = vmin.f32 %v3818, 1.0
        %v3947 = vmin.f32 %v3819, 1.0
        %v3948 = vmin.f32 %v3820, 1.0
        %v3949 = vmin.f32 %v3821, 1.0
        %v3950 = vmin.f32 %v3822, 1.0
        %v3951 = vmin.f32 %v3823, 1.0
        %v3952 = vmin.f32 %v3824, 1.0
        %v3953 = vmin.f32 %v3825, 1.0
        %v3954 = vmin.f32 %v3826, 1.0
        %v3955 = vmin.f32 %v3827, 1.0
        %v3956 = vmin.f32 %v3828, 1.0
        %v3957 = vmin.f32 %v3829, 1.0
        %v3958 = vmin.f32 %v3830, 1.0
        %v3959 = vmin.f32 %v3831, 1.0
        %v3960 = vmin.f32 %v3832, 1.0
        %v3961 = vmin.f32 %v3833, 1.0
        %v3962 = vmin.f32 %v3834, 1.0
        %v3963 = vmin.f32 %v3835, 1.0
        %v3964 = vmin.f32 %v3836, 1.0
        %v3965 = vmin.f32 %v3837, 1.0
        %v3966 = vmin.f32 %v3838, 1.0
        %v3967 = vmin.f32 %v3839, 1.0
        %v3968 = vmin.f32 %v3840, 1.0
        %v3969 = vmin.f32 %v3841, 1.0
        %v3970 = vmin.f32 %v3842, 1.0
        %v3971 = vmin.f32 %v3843, 1.0
        %v3972 = vmin.f32 %v3844, 1.0
        %v3973 = vmin.f32 %v3845, 1.0
        %v3974 = vmin.f32 %v3846, 1.0
        %v3975 = vmin.f32 %v3847, 1.0
        %v3976 = vmin.f32 %v3848, 1.0
        %v3977 = vmin.f32 %v3849, 1.0
        %v3978 = vmin.f32 %v3850, 1.0
        %v3979 = vmin.f32 %v3851, 1.0
        %v3980 = vmin.f32 %v3852, 1.0
        %v3981 = vmin.f32 %v3853, 1.0
        %v3982 = vmin.f32 %v3854, 1.0
        %v3983 = vmin.f32 %v3855, 1.0
        %v3984 = vmin.f32 %v3856, 1.0
        %v3985 = vmin.f32 %v3857, 1.0
        %v3986 = vmin.f32 %v3858, 1.0
        %v3987 = vmin.f32 %v3859, 1.0
        %v3988 = vmin.f32 %v3860, 1.0
        %v3989 = vmin.f32 %v3861, 1.0
        %v3990 = vmin.f32 %v3862, 1.0
        %v3991 = vmin.f32 %v3863, 1.0
        %v3992 = vmin.f32 %v3864, 1.0
        %v3993 = vmin.f32 %v3865, 1.0
        %v3994 = vmin.f32 %v3866, 1.0
        %v3995 = vmin.f32 %v3867, 1.0
        %v3996 = vmin.f32 %v3868, 1.0
        %v3997 = vmin.f32 %v3869, 1.0
        %v3998 = vmin.f32 %v3870, 1.0
        %v3999 = vmin.f32 %v3871, 1.0
        %v4000 = vmin.f32 %v3872, 1.0
        %v4001 = vmin.f32 %v3873, 1.0
        %v4002 = vmin.f32 %v3874, 1.0
        %v4003 = vmin.f32 %v3875, 1.0
        %v4004 = vmin.f32 %v3876, 1.0
        %v4005 = vmin.f32 %v3877, 1.0
        %v4006 = vmin.f32 %v3878, 1.0
        %v4007 = vmin.f32 %v3879, 1.0
        %v4008 = vmin.f32 %v3880, 1.0
        %v4009 = vmin.f32 %v3881, 1.0
        %v4010 = vmin.f32 %v3882, 1.0
        %v4011 = vmin.f32 %v3883, 1.0
        %v4012 = vmin.f32 %v3884, 1.0
        %v4013 = vmin.f32 %v3885, 1.0
        %v4014 = vmin.f32 %v3886, 1.0
        %v4015 = vmin.f32 %v3887, 1.0
        %v4016 = vmin.f32 %v3888, 1.0
        %v4017 = vmin.f32 %v3889, 1.0
        %v4018 = vmin.f32 %v3890, 1.0
        %v4019 = vmin.f32 %v3891, 1.0
        %v4020 = vmin.f32 %v3892, 1.0
        %v4021 = vmin.f32 %v3893, 1.0
        %v4022 = vmin.f32 %v3894, 1.0
        %v4023 = vmin.f32 %v3895, 1.0
        %v4024 = vmin.f32 %v3896, 1.0
        %v4025 = vmin.f32 %v3897, 1.0
        %v4026 = vmin.f32 %v3898, 1.0
        %v4027 = vmin.f32 %v3899, 1.0
        %v4028 = vmin.f32 %v3900, 1.0
        %v4029 = vmin.f32 %v3901, 1.0
        %v4030 = vmin.f32 %v3902, 1.0
        %v4031 = vmin.f32 %v3903, 1.0
        %v4032 = vmin.f32 %v3904, 1.0
        %v4033 = vmin.f32 %v3905, 1.0
        %v4034 = vmin.f32 %v3906, 1.0
        %v4035 = vmin.f32 %v3907, 1.0
        %v4036 = vmin.f32 %v3908, 1.0
        %v4037 = vmin.f32 %v3909, 1.0
        %v4038 = vmin.f32 %v3910, 1.0
        %v4039 = vmin.f32 %v3911, 1.0
        %v4040 = vmin.f32 %v3912, 1.0
        %v4041 = vmin.f32 %v3913, 1.0
        %v4042 = vmin.f32 %v3914, 1.0
        %v4043 = vmin.f32 %v3915, 1.0
        %v4044 = vmin.f32 %v3916, 1.0
        %v4045 = vmin.f32 %v3917, 1.0
        %v4046 = vmin.f32 %v3918, 1.0
        %v4047 = vmin.f32 %v3919, 1.0
        %v4048 = vmin.f32 %v3920, 1.0
        %v4049 = vmin.f32 %v3921, 1.0
        %v4050 = vmin.f32 %v3922, 1.0
        %v4051 = vmin.f32 %v3923, 1.0
        %v4052 = vmin.f32 %v3924, 1.0
        %v4053 = vmin.f32 %v3925, 1.0
        %v4054 = vmin.f32 %v3926, 1.0
        %v4055 = vmin.f32 %v3927, 1.0
        %v4056 = vmin.f32 %v3928, 1.0
        %v4057 = vmin.f32 %v3929, 1.0
        %v4058 = vmin.f32 %v3930, 1.0
        %v4059 = vmin.f32 %v3931, 1.0
        %v4060 = vmin.f32 %v3932, 1.0
        %v4061 = vmin.f32 %v3933, 1.0
        %v4062 = vmin.f32 %v3934, 1.0
        %v4063 = vmin.f32 %v3935, 1.0
        %v4064 = vmin.f32 %v3936, 1.0
        %v4065 = vmin.f32 %v3937, 1.0
        %v4066 = vmin.f32 %v3938, 1.0
        %v4067 = vmin.f32 %v3939, 1.0
        %v4068 = vmin.f32 %v3940, 1.0
        %v4069 = vmin.f32 %v3941, 1.0
        %v4070 = vmin.f32 %v3942, 1.0
        %v4071 = vmin.f32 %v3943, 1.0
        %v4072 = vmin.f32 %v3944, 1.0
        %v4073 = vmin.f32 %v3945, 1.0
        %s4074 = ssub.f32 1.0, %s1134
        %v4075 = vstv %s4074
        %v4076 = vmul.f32 %v4075, %v718
        %v4077 = vmul.f32 %v4075, %v719
        %v4078 = vmul.f32 %v4075, %v720
        %v4079 = vmul.f32 %v4075, %v721
        %v4080 = vmul.f32 %v4075, %v722
        %v4081 = vmul.f32 %v4075, %v723
        %v4082 = vmul.f32 %v4075, %v724
        %v4083 = vmul.f32 %v4075, %v725
        %v4084 = vmul.f32 %v4075, %v726
        %v4085 = vmul.f32 %v4075, %v727
        %v4086 = vmul.f32 %v4075, %v728
        %v4087 = vmul.f32 %v4075, %v729
        %v4088 = vmul.f32 %v4075, %v730
        %v4089 = vmul.f32 %v4075, %v731
        %v4090 = vmul.f32 %v4075, %v732
        %v4091 = vmul.f32 %v4075, %v733
        %v4092 = vmul.f32 %v4075, %v734
        %v4093 = vmul.f32 %v4075, %v735
        %v4094 = vmul.f32 %v4075, %v736
        %v4095 = vmul.f32 %v4075, %v737
        %v4096 = vmul.f32 %v4075, %v738
        %v4097 = vmul.f32 %v4075, %v739
        %v4098 = vmul.f32 %v4075, %v740
        %v4099 = vmul.f32 %v4075, %v741
        %v4100 = vmul.f32 %v4075, %v742
        %v4101 = vmul.f32 %v4075, %v743
        %v4102 = vmul.f32 %v4075, %v744
        %v4103 = vmul.f32 %v4075, %v745
        %v4104 = vmul.f32 %v4075, %v746
        %v4105 = vmul.f32 %v4075, %v747
        %v4106 = vmul.f32 %v4075, %v748
        %v4107 = vmul.f32 %v4075, %v749
        %v4108 = vmul.f32 %v4075, %v750
        %v4109 = vmul.f32 %v4075, %v751
        %v4110 = vmul.f32 %v4075, %v752
        %v4111 = vmul.f32 %v4075, %v753
        %v4112 = vmul.f32 %v4075, %v754
        %v4113 = vmul.f32 %v4075, %v755
        %v4114 = vmul.f32 %v4075, %v756
        %v4115 = vmul.f32 %v4075, %v757
        %v4116 = vmul.f32 %v4075, %v758
        %v4117 = vmul.f32 %v4075, %v759
        %v4118 = vmul.f32 %v4075, %v760
        %v4119 = vmul.f32 %v4075, %v761
        %v4120 = vmul.f32 %v4075, %v762
        %v4121 = vmul.f32 %v4075, %v763
        %v4122 = vmul.f32 %v4075, %v764
        %v4123 = vmul.f32 %v4075, %v765
        %v4124 = vmul.f32 %v4075, %v766
        %v4125 = vmul.f32 %v4075, %v767
        %v4126 = vmul.f32 %v4075, %v768
        %v4127 = vmul.f32 %v4075, %v769
        %v4128 = vmul.f32 %v4075, %v770
        %v4129 = vmul.f32 %v4075, %v771
        %v4130 = vmul.f32 %v4075, %v772
        %v4131 = vmul.f32 %v4075, %v773
        %v4132 = vmul.f32 %v4075, %v774
        %v4133 = vmul.f32 %v4075, %v775
        %v4134 = vmul.f32 %v4075, %v776
        %v4135 = vmul.f32 %v4075, %v777
        %v4136 = vmul.f32 %v4075, %v778
        %v4137 = vmul.f32 %v4075, %v779
        %v4138 = vmul.f32 %v4075, %v780
        %v4139 = vmul.f32 %v4075, %v781
        %v4140 = vmul.f32 %v4075, %v782
        %v4141 = vmul.f32 %v4075, %v783
        %v4142 = vmul.f32 %v4075, %v784
        %v4143 = vmul.f32 %v4075, %v785
        %v4144 = vmul.f32 %v4075, %v786
        %v4145 = vmul.f32 %v4075, %v787
        %v4146 = vmul.f32 %v4075, %v788
        %v4147 = vmul.f32 %v4075, %v789
        %v4148 = vmul.f32 %v4075, %v790
        %v4149 = vmul.f32 %v4075, %v791
        %v4150 = vmul.f32 %v4075, %v792
        %v4151 = vmul.f32 %v4075, %v793
        %v4152 = vmul.f32 %v4075, %v794
        %v4153 = vmul.f32 %v4075, %v795
        %v4154 = vmul.f32 %v4075, %v796
        %v4155 = vmul.f32 %v4075, %v797
        %v4156 = vmul.f32 %v4075, %v798
        %v4157 = vmul.f32 %v4075, %v799
        %v4158 = vmul.f32 %v4075, %v800
        %v4159 = vmul.f32 %v4075, %v801
        %v4160 = vmul.f32 %v4075, %v802
        %v4161 = vmul.f32 %v4075, %v803
        %v4162 = vmul.f32 %v4075, %v804
        %v4163 = vmul.f32 %v4075, %v805
        %v4164 = vmul.f32 %v4075, %v806
        %v4165 = vmul.f32 %v4075, %v807
        %v4166 = vmul.f32 %v4075, %v808
        %v4167 = vmul.f32 %v4075, %v809
        %v4168 = vmul.f32 %v4075, %v810
        %v4169 = vmul.f32 %v4075, %v811
        %v4170 = vmul.f32 %v4075, %v812
        %v4171 = vmul.f32 %v4075, %v813
        %v4172 = vmul.f32 %v4075, %v814
        %v4173 = vmul.f32 %v4075, %v815
        %v4174 = vmul.f32 %v4075, %v816
        %v4175 = vmul.f32 %v4075, %v817
        %v4176 = vmul.f32 %v4075, %v818
        %v4177 = vmul.f32 %v4075, %v819
        %v4178 = vmul.f32 %v4075, %v820
        %v4179 = vmul.f32 %v4075, %v821
        %v4180 = vmul.f32 %v4075, %v822
        %v4181 = vmul.f32 %v4075, %v823
        %v4182 = vmul.f32 %v4075, %v824
        %v4183 = vmul.f32 %v4075, %v825
        %v4184 = vmul.f32 %v4075, %v826
        %v4185 = vmul.f32 %v4075, %v827
        %v4186 = vmul.f32 %v4075, %v828
        %v4187 = vmul.f32 %v4075, %v829
        %v4188 = vmul.f32 %v4075, %v830
        %v4189 = vmul.f32 %v4075, %v831
        %v4190 = vmul.f32 %v4075, %v832
        %v4191 = vmul.f32 %v4075, %v833
        %v4192 = vmul.f32 %v4075, %v834
        %v4193 = vmul.f32 %v4075, %v835
        %v4194 = vmul.f32 %v4075, %v836
        %v4195 = vmul.f32 %v4075, %v837
        %v4196 = vmul.f32 %v4075, %v838
        %v4197 = vmul.f32 %v4075, %v839
        %v4198 = vmul.f32 %v4075, %v840
        %v4199 = vmul.f32 %v4075, %v841
        %v4200 = vmul.f32 %v4075, %v842
        %v4201 = vmul.f32 %v4075, %v843
        %v4202 = vmul.f32 %v4075, %v844
        %v4203 = vmul.f32 %v4075, %v845
        %v4204 = vstv %s1134
        %v4205 = vmul.f32 %v4204, %v3402
        %v4206 = vmul.f32 %v4204, %v3403
        %v4207 = vmul.f32 %v4204, %v3404
        %v4208 = vmul.f32 %v4204, %v3405
        %v4209 = vmul.f32 %v4204, %v3406
        %v4210 = vmul.f32 %v4204, %v3407
        %v4211 = vmul.f32 %v4204, %v3408
        %v4212 = vmul.f32 %v4204, %v3409
        %v4213 = vmul.f32 %v4204, %v3410
        %v4214 = vmul.f32 %v4204, %v3411
        %v4215 = vmul.f32 %v4204, %v3412
        %v4216 = vmul.f32 %v4204, %v3413
        %v4217 = vmul.f32 %v4204, %v3414
        %v4218 = vmul.f32 %v4204, %v3415
        %v4219 = vmul.f32 %v4204, %v3416
        %v4220 = vmul.f32 %v4204, %v3417
        %v4221 = vmul.f32 %v4204, %v3418
        %v4222 = vmul.f32 %v4204, %v3419
        %v4223 = vmul.f32 %v4204, %v3420
        %v4224 = vmul.f32 %v4204, %v3421
        %v4225 = vmul.f32 %v4204, %v3422
        %v4226 = vmul.f32 %v4204, %v3423
        %v4227 = vmul.f32 %v4204, %v3424
        %v4228 = vmul.f32 %v4204, %v3425
        %v4229 = vmul.f32 %v4204, %v3426
        %v4230 = vmul.f32 %v4204, %v3427
        %v4231 = vmul.f32 %v4204, %v3428
        %v4232 = vmul.f32 %v4204, %v3429
        %v4233 = vmul.f32 %v4204, %v3430
        %v4234 = vmul.f32 %v4204, %v3431
        %v4235 = vmul.f32 %v4204, %v3432
        %v4236 = vmul.f32 %v4204, %v3433
        %v4237 = vmul.f32 %v4204, %v3434
        %v4238 = vmul.f32 %v4204, %v3435
        %v4239 = vmul.f32 %v4204, %v3436
        %v4240 = vmul.f32 %v4204, %v3437
        %v4241 = vmul.f32 %v4204, %v3438
        %v4242 = vmul.f32 %v4204, %v3439
        %v4243 = vmul.f32 %v4204, %v3440
        %v4244 = vmul.f32 %v4204, %v3441
        %v4245 = vmul.f32 %v4204, %v3442
        %v4246 = vmul.f32 %v4204, %v3443
        %v4247 = vmul.f32 %v4204, %v3444
        %v4248 = vmul.f32 %v4204, %v3445
        %v4249 = vmul.f32 %v4204, %v3446
        %v4250 = vmul.f32 %v4204, %v3447
        %v4251 = vmul.f32 %v4204, %v3448
        %v4252 = vmul.f32 %v4204, %v3449
        %v4253 = vmul.f32 %v4204, %v3450
        %v4254 = vmul.f32 %v4204, %v3451
        %v4255 = vmul.f32 %v4204, %v3452
        %v4256 = vmul.f32 %v4204, %v3453
        %v4257 = vmul.f32 %v4204, %v3454
        %v4258 = vmul.f32 %v4204, %v3455
        %v4259 = vmul.f32 %v4204, %v3456
        %v4260 = vmul.f32 %v4204, %v3457
        %v4261 = vmul.f32 %v4204, %v3458
        %v4262 = vmul.f32 %v4204, %v3459
        %v4263 = vmul.f32 %v4204, %v3460
        %v4264 = vmul.f32 %v4204, %v3461
        %v4265 = vmul.f32 %v4204, %v3462
        %v4266 = vmul.f32 %v4204, %v3463
        %v4267 = vmul.f32 %v4204, %v3464
        %v4268 = vmul.f32 %v4204, %v3465
        %v4269 = vmul.f32 %v4204, %v3466
        %v4270 = vmul.f32 %v4204, %v3467
        %v4271 = vmul.f32 %v4204, %v3468
        %v4272 = vmul.f32 %v4204, %v3469
        %v4273 = vmul.f32 %v4204, %v3470
        %v4274 = vmul.f32 %v4204, %v3471
        %v4275 = vmul.f32 %v4204, %v3472
        %v4276 = vmul.f32 %v4204, %v3473
        %v4277 = vmul.f32 %v4204, %v3474
        %v4278 = vmul.f32 %v4204, %v3475
        %v4279 = vmul.f32 %v4204, %v3476
        %v4280 = vmul.f32 %v4204, %v3477
        %v4281 = vmul.f32 %v4204, %v3478
        %v4282 = vmul.f32 %v4204, %v3479
        %v4283 = vmul.f32 %v4204, %v3480
        %v4284 = vmul.f32 %v4204, %v3481
        %v4285 = vmul.f32 %v4204, %v3482
        %v4286 = vmul.f32 %v4204, %v3483
        %v4287 = vmul.f32 %v4204, %v3484
        %v4288 = vmul.f32 %v4204, %v3485
        %v4289 = vmul.f32 %v4204, %v3486
        %v4290 = vmul.f32 %v4204, %v3487
        %v4291 = vmul.f32 %v4204, %v3488
        %v4292 = vmul.f32 %v4204, %v3489
        %v4293 = vmul.f32 %v4204, %v3490
        %v4294 = vmul.f32 %v4204, %v3491
        %v4295 = vmul.f32 %v4204, %v3492
        %v4296 = vmul.f32 %v4204, %v3493
        %v4297 = vmul.f32 %v4204, %v3494
        %v4298 = vmul.f32 %v4204, %v3495
        %v4299 = vmul.f32 %v4204, %v3496
        %v4300 = vmul.f32 %v4204, %v3497
        %v4301 = vmul.f32 %v4204, %v3498
        %v4302 = vmul.f32 %v4204, %v3499
        %v4303 = vmul.f32 %v4204, %v3500
        %v4304 = vmul.f32 %v4204, %v3501
        %v4305 = vmul.f32 %v4204, %v3502
        %v4306 = vmul.f32 %v4204, %v3503
        %v4307 = vmul.f32 %v4204, %v3504
        %v4308 = vmul.f32 %v4204, %v3505
        %v4309 = vmul.f32 %v4204, %v3506
        %v4310 = vmul.f32 %v4204, %v3507
        %v4311 = vmul.f32 %v4204, %v3508
        %v4312 = vmul.f32 %v4204, %v3509
        %v4313 = vmul.f32 %v4204, %v3510
        %v4314 = vmul.f32 %v4204, %v3511
        %v4315 = vmul.f32 %v4204, %v3512
        %v4316 = vmul.f32 %v4204, %v3513
        %v4317 = vmul.f32 %v4204, %v3514
        %v4318 = vmul.f32 %v4204, %v3515
        %v4319 = vmul.f32 %v4204, %v3516
        %v4320 = vmul.f32 %v4204, %v3517
        %v4321 = vmul.f32 %v4204, %v3518
        %v4322 = vmul.f32 %v4204, %v3519
        %v4323 = vmul.f32 %v4204, %v3520
        %v4324 = vmul.f32 %v4204, %v3521
        %v4325 = vmul.f32 %v4204, %v3522
        %v4326 = vmul.f32 %v4204, %v3523
        %v4327 = vmul.f32 %v4204, %v3524
        %v4328 = vmul.f32 %v4204, %v3525
        %v4329 = vmul.f32 %v4204, %v3526
        %v4330 = vmul.f32 %v4204, %v3527
        %v4331 = vmul.f32 %v4204, %v3528
        %v4332 = vmul.f32 %v4204, %v3529
        %v4333 = vadd.f32 %v4076, %v4205
        %v4334 = vadd.f32 %v4077, %v4206
        %v4335 = vadd.f32 %v4078, %v4207
        %v4336 = vadd.f32 %v4079, %v4208
        %v4337 = vadd.f32 %v4080, %v4209
        %v4338 = vadd.f32 %v4081, %v4210
        %v4339 = vadd.f32 %v4082, %v4211
        %v4340 = vadd.f32 %v4083, %v4212
        %v4341 = vadd.f32 %v4084, %v4213
        %v4342 = vadd.f32 %v4085, %v4214
        %v4343 = vadd.f32 %v4086, %v4215
        %v4344 = vadd.f32 %v4087, %v4216
        %v4345 = vadd.f32 %v4088, %v4217
        %v4346 = vadd.f32 %v4089, %v4218
        %v4347 = vadd.f32 %v4090, %v4219
        %v4348 = vadd.f32 %v4091, %v4220
        %v4349 = vadd.f32 %v4092, %v4221
        %v4350 = vadd.f32 %v4093, %v4222
        %v4351 = vadd.f32 %v4094, %v4223
        %v4352 = vadd.f32 %v4095, %v4224
        %v4353 = vadd.f32 %v4096, %v4225
        %v4354 = vadd.f32 %v4097, %v4226
        %v4355 = vadd.f32 %v4098, %v4227
        %v4356 = vadd.f32 %v4099, %v4228
        %v4357 = vadd.f32 %v4100, %v4229
        %v4358 = vadd.f32 %v4101, %v4230
        %v4359 = vadd.f32 %v4102, %v4231
        %v4360 = vadd.f32 %v4103, %v4232
        %v4361 = vadd.f32 %v4104, %v4233
        %v4362 = vadd.f32 %v4105, %v4234
        %v4363 = vadd.f32 %v4106, %v4235
        %v4364 = vadd.f32 %v4107, %v4236
        %v4365 = vadd.f32 %v4108, %v4237
        %v4366 = vadd.f32 %v4109, %v4238
        %v4367 = vadd.f32 %v4110, %v4239
        %v4368 = vadd.f32 %v4111, %v4240
        %v4369 = vadd.f32 %v4112, %v4241
        %v4370 = vadd.f32 %v4113, %v4242
        %v4371 = vadd.f32 %v4114, %v4243
        %v4372 = vadd.f32 %v4115, %v4244
        %v4373 = vadd.f32 %v4116, %v4245
        %v4374 = vadd.f32 %v4117, %v4246
        %v4375 = vadd.f32 %v4118, %v4247
        %v4376 = vadd.f32 %v4119, %v4248
        %v4377 = vadd.f32 %v4120, %v4249
        %v4378 = vadd.f32 %v4121, %v4250
        %v4379 = vadd.f32 %v4122, %v4251
        %v4380 = vadd.f32 %v4123, %v4252
        %v4381 = vadd.f32 %v4124, %v4253
        %v4382 = vadd.f32 %v4125, %v4254
        %v4383 = vadd.f32 %v4126, %v4255
        %v4384 = vadd.f32 %v4127, %v4256
        %v4385 = vadd.f32 %v4128, %v4257
        %v4386 = vadd.f32 %v4129, %v4258
        %v4387 = vadd.f32 %v4130, %v4259
        %v4388 = vadd.f32 %v4131, %v4260
        %v4389 = vadd.f32 %v4132, %v4261
        %v4390 = vadd.f32 %v4133, %v4262
        %v4391 = vadd.f32 %v4134, %v4263
        %v4392 = vadd.f32 %v4135, %v4264
        %v4393 = vadd.f32 %v4136, %v4265
        %v4394 = vadd.f32 %v4137, %v4266
        %v4395 = vadd.f32 %v4138, %v4267
        %v4396 = vadd.f32 %v4139, %v4268
        %v4397 = vadd.f32 %v4140, %v4269
        %v4398 = vadd.f32 %v4141, %v4270
        %v4399 = vadd.f32 %v4142, %v4271
        %v4400 = vadd.f32 %v4143, %v4272
        %v4401 = vadd.f32 %v4144, %v4273
        %v4402 = vadd.f32 %v4145, %v4274
        %v4403 = vadd.f32 %v4146, %v4275
        %v4404 = vadd.f32 %v4147, %v4276
        %v4405 = vadd.f32 %v4148, %v4277
        %v4406 = vadd.f32 %v4149, %v4278
        %v4407 = vadd.f32 %v4150, %v4279
        %v4408 = vadd.f32 %v4151, %v4280
        %v4409 = vadd.f32 %v4152, %v4281
        %v4410 = vadd.f32 %v4153, %v4282
        %v4411 = vadd.f32 %v4154, %v4283
        %v4412 = vadd.f32 %v4155, %v4284
        %v4413 = vadd.f32 %v4156, %v4285
        %v4414 = vadd.f32 %v4157, %v4286
        %v4415 = vadd.f32 %v4158, %v4287
        %v4416 = vadd.f32 %v4159, %v4288
        %v4417 = vadd.f32 %v4160, %v4289
        %v4418 = vadd.f32 %v4161, %v4290
        %v4419 = vadd.f32 %v4162, %v4291
        %v4420 = vadd.f32 %v4163, %v4292
        %v4421 = vadd.f32 %v4164, %v4293
        %v4422 = vadd.f32 %v4165, %v4294
        %v4423 = vadd.f32 %v4166, %v4295
        %v4424 = vadd.f32 %v4167, %v4296
        %v4425 = vadd.f32 %v4168, %v4297
        %v4426 = vadd.f32 %v4169, %v4298
        %v4427 = vadd.f32 %v4170, %v4299
        %v4428 = vadd.f32 %v4171, %v4300
        %v4429 = vadd.f32 %v4172, %v4301
        %v4430 = vadd.f32 %v4173, %v4302
        %v4431 = vadd.f32 %v4174, %v4303
        %v4432 = vadd.f32 %v4175, %v4304
        %v4433 = vadd.f32 %v4176, %v4305
        %v4434 = vadd.f32 %v4177, %v4306
        %v4435 = vadd.f32 %v4178, %v4307
        %v4436 = vadd.f32 %v4179, %v4308
        %v4437 = vadd.f32 %v4180, %v4309
        %v4438 = vadd.f32 %v4181, %v4310
        %v4439 = vadd.f32 %v4182, %v4311
        %v4440 = vadd.f32 %v4183, %v4312
        %v4441 = vadd.f32 %v4184, %v4313
        %v4442 = vadd.f32 %v4185, %v4314
        %v4443 = vadd.f32 %v4186, %v4315
        %v4444 = vadd.f32 %v4187, %v4316
        %v4445 = vadd.f32 %v4188, %v4317
        %v4446 = vadd.f32 %v4189, %v4318
        %v4447 = vadd.f32 %v4190, %v4319
        %v4448 = vadd.f32 %v4191, %v4320
        %v4449 = vadd.f32 %v4192, %v4321
        %v4450 = vadd.f32 %v4193, %v4322
        %v4451 = vadd.f32 %v4194, %v4323
        %v4452 = vadd.f32 %v4195, %v4324
        %v4453 = vadd.f32 %v4196, %v4325
        %v4454 = vadd.f32 %v4197, %v4326
        %v4455 = vadd.f32 %v4198, %v4327
        %v4456 = vadd.f32 %v4199, %v4328
        %v4457 = vadd.f32 %v4200, %v4329
        %v4458 = vadd.f32 %v4201, %v4330
        %v4459 = vadd.f32 %v4202, %v4331
        %v4460 = vadd.f32 %v4203, %v4332
        %4461 = vst [vmem:[%s561] sm:$0xff] %v2756
        %v4462 = vpack.c.bf16 %v4334, %v4333
        %v4463 = vpack.c.bf16 %v4336, %v4335
        %v4464 = vpack.c.bf16 %v4338, %v4337
        %v4465 = vpack.c.bf16 %v4340, %v4339
        %v4466 = vpack.c.bf16 %v4342, %v4341
        %v4467 = vpack.c.bf16 %v4344, %v4343
        %v4468 = vpack.c.bf16 %v4346, %v4345
        %v4469 = vpack.c.bf16 %v4348, %v4347
        %v4470 = vpack.c.bf16 %v4350, %v4349
        %v4471 = vpack.c.bf16 %v4352, %v4351
        %v4472 = vpack.c.bf16 %v4354, %v4353
        %v4473 = vpack.c.bf16 %v4356, %v4355
        %v4474 = vpack.c.bf16 %v4358, %v4357
        %v4475 = vpack.c.bf16 %v4360, %v4359
        %v4476 = vpack.c.bf16 %v4362, %v4361
        %v4477 = vpack.c.bf16 %v4364, %v4363
        %v4478 = vpack.c.bf16 %v4366, %v4365
        %v4479 = vpack.c.bf16 %v4368, %v4367
        %v4480 = vpack.c.bf16 %v4370, %v4369
        %v4481 = vpack.c.bf16 %v4372, %v4371
        %v4482 = vpack.c.bf16 %v4374, %v4373
        %v4483 = vpack.c.bf16 %v4376, %v4375
        %v4484 = vpack.c.bf16 %v4378, %v4377
        %v4485 = vpack.c.bf16 %v4380, %v4379
        %v4486 = vpack.c.bf16 %v4382, %v4381
        %v4487 = vpack.c.bf16 %v4384, %v4383
        %v4488 = vpack.c.bf16 %v4386, %v4385
        %v4489 = vpack.c.bf16 %v4388, %v4387
        %v4490 = vpack.c.bf16 %v4390, %v4389
        %v4491 = vpack.c.bf16 %v4392, %v4391
        %v4492 = vpack.c.bf16 %v4394, %v4393
        %v4493 = vpack.c.bf16 %v4396, %v4395
        %v4494 = vpack.c.bf16 %v4398, %v4397
        %v4495 = vpack.c.bf16 %v4400, %v4399
        %v4496 = vpack.c.bf16 %v4402, %v4401
        %v4497 = vpack.c.bf16 %v4404, %v4403
        %v4498 = vpack.c.bf16 %v4406, %v4405
        %v4499 = vpack.c.bf16 %v4408, %v4407
        %v4500 = vpack.c.bf16 %v4410, %v4409
        %v4501 = vpack.c.bf16 %v4412, %v4411
        %v4502 = vpack.c.bf16 %v4414, %v4413
        %v4503 = vpack.c.bf16 %v4416, %v4415
        %v4504 = vpack.c.bf16 %v4418, %v4417
        %v4505 = vpack.c.bf16 %v4420, %v4419
        %v4506 = vpack.c.bf16 %v4422, %v4421
        %v4507 = vpack.c.bf16 %v4424, %v4423
        %v4508 = vpack.c.bf16 %v4426, %v4425
        %v4509 = vpack.c.bf16 %v4428, %v4427
        %v4510 = vpack.c.bf16 %v4430, %v4429
        %v4511 = vpack.c.bf16 %v4432, %v4431
        %v4512 = vpack.c.bf16 %v4434, %v4433
        %v4513 = vpack.c.bf16 %v4436, %v4435
        %v4514 = vpack.c.bf16 %v4438, %v4437
        %v4515 = vpack.c.bf16 %v4440, %v4439
        %v4516 = vpack.c.bf16 %v4442, %v4441
        %v4517 = vpack.c.bf16 %v4444, %v4443
        %v4518 = vpack.c.bf16 %v4446, %v4445
        %v4519 = vpack.c.bf16 %v4448, %v4447
        %v4520 = vpack.c.bf16 %v4450, %v4449
        %v4521 = vpack.c.bf16 %v4452, %v4451
        %v4522 = vpack.c.bf16 %v4454, %v4453
        %v4523 = vpack.c.bf16 %v4456, %v4455
        %v4524 = vpack.c.bf16 %v4458, %v4457
        %v4525 = vpack.c.bf16 %v4460, %v4459
        %v4590 = vunpack.c.l.b16 %v4462
        %v4591 = vunpack.c.h.b16 %v4462
        %v4592 = vunpack.c.l.b16 %v4463
        %v4593 = vunpack.c.h.b16 %v4463
        %v4594 = vunpack.c.l.b16 %v4464
        %v4595 = vunpack.c.h.b16 %v4464
        %v4596 = vunpack.c.l.b16 %v4465
        %v4597 = vunpack.c.h.b16 %v4465
        %v4598 = vunpack.c.l.b16 %v4466
        %v4599 = vunpack.c.h.b16 %v4466
        %v4600 = vunpack.c.l.b16 %v4467
        %v4601 = vunpack.c.h.b16 %v4467
        %v4602 = vunpack.c.l.b16 %v4468
        %v4603 = vunpack.c.h.b16 %v4468
        %v4604 = vunpack.c.l.b16 %v4469
        %v4605 = vunpack.c.h.b16 %v4469
        %v4606 = vunpack.c.l.b16 %v4470
        %v4607 = vunpack.c.h.b16 %v4470
        %v4608 = vunpack.c.l.b16 %v4471
        %v4609 = vunpack.c.h.b16 %v4471
        %v4610 = vunpack.c.l.b16 %v4472
        %v4611 = vunpack.c.h.b16 %v4472
        %v4612 = vunpack.c.l.b16 %v4473
        %v4613 = vunpack.c.h.b16 %v4473
        %v4614 = vunpack.c.l.b16 %v4474
        %v4615 = vunpack.c.h.b16 %v4474
        %v4616 = vunpack.c.l.b16 %v4475
        %v4617 = vunpack.c.h.b16 %v4475
        %v4618 = vunpack.c.l.b16 %v4476
        %v4619 = vunpack.c.h.b16 %v4476
        %v4620 = vunpack.c.l.b16 %v4477
        %v4621 = vunpack.c.h.b16 %v4477
        %v4622 = vunpack.c.l.b16 %v4478
        %v4623 = vunpack.c.h.b16 %v4478
        %v4624 = vunpack.c.l.b16 %v4479
        %v4625 = vunpack.c.h.b16 %v4479
        %v4626 = vunpack.c.l.b16 %v4480
        %v4627 = vunpack.c.h.b16 %v4480
        %v4628 = vunpack.c.l.b16 %v4481
        %v4629 = vunpack.c.h.b16 %v4481
        %v4630 = vunpack.c.l.b16 %v4482
        %v4631 = vunpack.c.h.b16 %v4482
        %v4632 = vunpack.c.l.b16 %v4483
        %v4633 = vunpack.c.h.b16 %v4483
        %v4634 = vunpack.c.l.b16 %v4484
        %v4635 = vunpack.c.h.b16 %v4484
        %v4636 = vunpack.c.l.b16 %v4485
        %v4637 = vunpack.c.h.b16 %v4485
        %v4638 = vunpack.c.l.b16 %v4486
        %v4639 = vunpack.c.h.b16 %v4486
        %v4640 = vunpack.c.l.b16 %v4487
        %v4641 = vunpack.c.h.b16 %v4487
        %v4642 = vunpack.c.l.b16 %v4488
        %v4643 = vunpack.c.h.b16 %v4488
        %v4644 = vunpack.c.l.b16 %v4489
        %v4645 = vunpack.c.h.b16 %v4489
        %v4646 = vunpack.c.l.b16 %v4490
        %v4647 = vunpack.c.h.b16 %v4490
        %v4648 = vunpack.c.l.b16 %v4491
        %v4649 = vunpack.c.h.b16 %v4491
        %v4650 = vunpack.c.l.b16 %v4492
        %v4651 = vunpack.c.h.b16 %v4492
        %v4652 = vunpack.c.l.b16 %v4493
        %v4653 = vunpack.c.h.b16 %v4493
        %v4654 = vunpack.c.l.b16 %v4494
        %v4655 = vunpack.c.h.b16 %v4494
        %v4656 = vunpack.c.l.b16 %v4495
        %v4657 = vunpack.c.h.b16 %v4495
        %v4658 = vunpack.c.l.b16 %v4496
        %v4659 = vunpack.c.h.b16 %v4496
        %v4660 = vunpack.c.l.b16 %v4497
        %v4661 = vunpack.c.h.b16 %v4497
        %v4662 = vunpack.c.l.b16 %v4498
        %v4663 = vunpack.c.h.b16 %v4498
        %v4664 = vunpack.c.l.b16 %v4499
        %v4665 = vunpack.c.h.b16 %v4499
        %v4666 = vunpack.c.l.b16 %v4500
        %v4667 = vunpack.c.h.b16 %v4500
        %v4668 = vunpack.c.l.b16 %v4501
        %v4669 = vunpack.c.h.b16 %v4501
        %v4670 = vunpack.c.l.b16 %v4502
        %v4671 = vunpack.c.h.b16 %v4502
        %v4672 = vunpack.c.l.b16 %v4503
        %v4673 = vunpack.c.h.b16 %v4503
        %v4674 = vunpack.c.l.b16 %v4504
        %v4675 = vunpack.c.h.b16 %v4504
        %v4676 = vunpack.c.l.b16 %v4505
        %v4677 = vunpack.c.h.b16 %v4505
        %v4678 = vunpack.c.l.b16 %v4506
        %v4679 = vunpack.c.h.b16 %v4506
        %v4680 = vunpack.c.l.b16 %v4507
        %v4681 = vunpack.c.h.b16 %v4507
        %v4682 = vunpack.c.l.b16 %v4508
        %v4683 = vunpack.c.h.b16 %v4508
        %v4684 = vunpack.c.l.b16 %v4509
        %v4685 = vunpack.c.h.b16 %v4509
        %v4686 = vunpack.c.l.b16 %v4510
        %v4687 = vunpack.c.h.b16 %v4510
        %v4688 = vunpack.c.l.b16 %v4511
        %v4689 = vunpack.c.h.b16 %v4511
        %v4690 = vunpack.c.l.b16 %v4512
        %v4691 = vunpack.c.h.b16 %v4512
        %v4692 = vunpack.c.l.b16 %v4513
        %v4693 = vunpack.c.h.b16 %v4513
        %v4694 = vunpack.c.l.b16 %v4514
        %v4695 = vunpack.c.h.b16 %v4514
        %v4696 = vunpack.c.l.b16 %v4515
        %v4697 = vunpack.c.h.b16 %v4515
        %v4698 = vunpack.c.l.b16 %v4516
        %v4699 = vunpack.c.h.b16 %v4516
        %v4700 = vunpack.c.l.b16 %v4517
        %v4701 = vunpack.c.h.b16 %v4517
        %v4702 = vunpack.c.l.b16 %v4518
        %v4703 = vunpack.c.h.b16 %v4518
        %v4704 = vunpack.c.l.b16 %v4519
        %v4705 = vunpack.c.h.b16 %v4519
        %v4706 = vunpack.c.l.b16 %v4520
        %v4707 = vunpack.c.h.b16 %v4520
        %v4708 = vunpack.c.l.b16 %v4521
        %v4709 = vunpack.c.h.b16 %v4521
        %v4710 = vunpack.c.l.b16 %v4522
        %v4711 = vunpack.c.h.b16 %v4522
        %v4712 = vunpack.c.l.b16 %v4523
        %v4713 = vunpack.c.h.b16 %v4523
        %v4714 = vunpack.c.l.b16 %v4524
        %v4715 = vunpack.c.h.b16 %v4524
        %v4716 = vunpack.c.l.b16 %v4525
        %v4717 = vunpack.c.h.b16 %v4525
        %v4718 = vpack.c.b16 %v4590, %v4590
        %v4719 = vpack.c.b16 %v4591, %v4591
        %v4720 = vpack.c.b16 %v4592, %v4592
        %v4721 = vpack.c.b16 %v4593, %v4593
        %v4722 = vpack.c.b16 %v4594, %v4594
        %v4723 = vpack.c.b16 %v4595, %v4595
        %v4724 = vpack.c.b16 %v4596, %v4596
        %v4725 = vpack.c.b16 %v4597, %v4597
        %v4726 = vpack.c.b16 %v4598, %v4598
        %v4727 = vpack.c.b16 %v4599, %v4599
        %v4728 = vpack.c.b16 %v4600, %v4600
        %v4729 = vpack.c.b16 %v4601, %v4601
        %v4730 = vpack.c.b16 %v4602, %v4602
        %v4731 = vpack.c.b16 %v4603, %v4603
        %v4732 = vpack.c.b16 %v4604, %v4604
        %v4733 = vpack.c.b16 %v4605, %v4605
        %v4734 = vpack.c.b16 %v4606, %v4606
        %v4735 = vpack.c.b16 %v4607, %v4607
        %v4736 = vpack.c.b16 %v4608, %v4608
        %v4737 = vpack.c.b16 %v4609, %v4609
        %v4738 = vpack.c.b16 %v4610, %v4610
        %v4739 = vpack.c.b16 %v4611, %v4611
        %v4740 = vpack.c.b16 %v4612, %v4612
        %v4741 = vpack.c.b16 %v4613, %v4613
        %v4742 = vpack.c.b16 %v4614, %v4614
        %v4743 = vpack.c.b16 %v4615, %v4615
        %v4744 = vpack.c.b16 %v4616, %v4616
        %v4745 = vpack.c.b16 %v4617, %v4617
        %v4746 = vpack.c.b16 %v4618, %v4618
        %v4747 = vpack.c.b16 %v4619, %v4619
        %v4748 = vpack.c.b16 %v4620, %v4620
        %v4749 = vpack.c.b16 %v4621, %v4621
        %v4750 = vpack.c.b16 %v4622, %v4622
        %v4751 = vpack.c.b16 %v4623, %v4623
        %v4752 = vpack.c.b16 %v4624, %v4624
        %v4753 = vpack.c.b16 %v4625, %v4625
        %v4754 = vpack.c.b16 %v4626, %v4626
        %v4755 = vpack.c.b16 %v4627, %v4627
        %v4756 = vpack.c.b16 %v4628, %v4628
        %v4757 = vpack.c.b16 %v4629, %v4629
        %v4758 = vpack.c.b16 %v4630, %v4630
        %v4759 = vpack.c.b16 %v4631, %v4631
        %v4760 = vpack.c.b16 %v4632, %v4632
        %v4761 = vpack.c.b16 %v4633, %v4633
        %v4762 = vpack.c.b16 %v4634, %v4634
        %v4763 = vpack.c.b16 %v4635, %v4635
        %v4764 = vpack.c.b16 %v4636, %v4636
        %v4765 = vpack.c.b16 %v4637, %v4637
        %v4766 = vpack.c.b16 %v4638, %v4638
        %v4767 = vpack.c.b16 %v4639, %v4639
        %v4768 = vpack.c.b16 %v4640, %v4640
        %v4769 = vpack.c.b16 %v4641, %v4641
        %v4770 = vpack.c.b16 %v4642, %v4642
        %v4771 = vpack.c.b16 %v4643, %v4643
        %v4772 = vpack.c.b16 %v4644, %v4644
        %v4773 = vpack.c.b16 %v4645, %v4645
        %v4774 = vpack.c.b16 %v4646, %v4646
        %v4775 = vpack.c.b16 %v4647, %v4647
        %v4776 = vpack.c.b16 %v4648, %v4648
        %v4777 = vpack.c.b16 %v4649, %v4649
        %v4778 = vpack.c.b16 %v4650, %v4650
        %v4779 = vpack.c.b16 %v4651, %v4651
        %v4780 = vpack.c.b16 %v4652, %v4652
        %v4781 = vpack.c.b16 %v4653, %v4653
        %v4782 = vpack.c.b16 %v4654, %v4654
        %v4783 = vpack.c.b16 %v4655, %v4655
        %v4784 = vpack.c.b16 %v4656, %v4656
        %v4785 = vpack.c.b16 %v4657, %v4657
        %v4786 = vpack.c.b16 %v4658, %v4658
        %v4787 = vpack.c.b16 %v4659, %v4659
        %v4788 = vpack.c.b16 %v4660, %v4660
        %v4789 = vpack.c.b16 %v4661, %v4661
        %v4790 = vpack.c.b16 %v4662, %v4662
        %v4791 = vpack.c.b16 %v4663, %v4663
        %v4792 = vpack.c.b16 %v4664, %v4664
        %v4793 = vpack.c.b16 %v4665, %v4665
        %v4794 = vpack.c.b16 %v4666, %v4666
        %v4795 = vpack.c.b16 %v4667, %v4667
        %v4796 = vpack.c.b16 %v4668, %v4668
        %v4797 = vpack.c.b16 %v4669, %v4669
        %v4798 = vpack.c.b16 %v4670, %v4670
        %v4799 = vpack.c.b16 %v4671, %v4671
        %v4800 = vpack.c.b16 %v4672, %v4672
        %v4801 = vpack.c.b16 %v4673, %v4673
        %v4802 = vpack.c.b16 %v4674, %v4674
        %v4803 = vpack.c.b16 %v4675, %v4675
        %v4804 = vpack.c.b16 %v4676, %v4676
        %v4805 = vpack.c.b16 %v4677, %v4677
        %v4806 = vpack.c.b16 %v4678, %v4678
        %v4807 = vpack.c.b16 %v4679, %v4679
        %v4808 = vpack.c.b16 %v4680, %v4680
        %v4809 = vpack.c.b16 %v4681, %v4681
        %v4810 = vpack.c.b16 %v4682, %v4682
        %v4811 = vpack.c.b16 %v4683, %v4683
        %v4812 = vpack.c.b16 %v4684, %v4684
        %v4813 = vpack.c.b16 %v4685, %v4685
        %v4814 = vpack.c.b16 %v4686, %v4686
        %v4815 = vpack.c.b16 %v4687, %v4687
        %v4816 = vpack.c.b16 %v4688, %v4688
        %v4817 = vpack.c.b16 %v4689, %v4689
        %v4818 = vpack.c.b16 %v4690, %v4690
        %v4819 = vpack.c.b16 %v4691, %v4691
        %v4820 = vpack.c.b16 %v4692, %v4692
        %v4821 = vpack.c.b16 %v4693, %v4693
        %v4822 = vpack.c.b16 %v4694, %v4694
        %v4823 = vpack.c.b16 %v4695, %v4695
        %v4824 = vpack.c.b16 %v4696, %v4696
        %v4825 = vpack.c.b16 %v4697, %v4697
        %v4826 = vpack.c.b16 %v4698, %v4698
        %v4827 = vpack.c.b16 %v4699, %v4699
        %v4828 = vpack.c.b16 %v4700, %v4700
        %v4829 = vpack.c.b16 %v4701, %v4701
        %v4830 = vpack.c.b16 %v4702, %v4702
        %v4831 = vpack.c.b16 %v4703, %v4703
        %v4832 = vpack.c.b16 %v4704, %v4704
        %v4833 = vpack.c.b16 %v4705, %v4705
        %v4834 = vpack.c.b16 %v4706, %v4706
        %v4835 = vpack.c.b16 %v4707, %v4707
        %v4836 = vpack.c.b16 %v4708, %v4708
        %v4837 = vpack.c.b16 %v4709, %v4709
        %v4838 = vpack.c.b16 %v4710, %v4710
        %v4839 = vpack.c.b16 %v4711, %v4711
        %v4840 = vpack.c.b16 %v4712, %v4712
        %v4841 = vpack.c.b16 %v4713, %v4713
        %v4842 = vpack.c.b16 %v4714, %v4714
        %v4843 = vpack.c.b16 %v4715, %v4715
        %v4844 = vpack.c.b16 %v4716, %v4716
        %v4845 = vpack.c.b16 %v4717, %v4717
        %4974 = vst [vmem:[%s568] sm:$0xf] %v4718
        %4975 = vst [vmem:[%s568 + $0x4] sm:$0xf] %v4719
        %4976 = vst [vmem:[%s568 + $0x8] sm:$0xf] %v4720
        %4977 = vst [vmem:[%s568 + $0xc] sm:$0xf] %v4721
        %4978 = vst [vmem:[%s568 + $0x10] sm:$0xf] %v4722
        %4979 = vst [vmem:[%s568 + $0x14] sm:$0xf] %v4723
        %4980 = vst [vmem:[%s568 + $0x18] sm:$0xf] %v4724
        %4981 = vst [vmem:[%s568 + $0x1c] sm:$0xf] %v4725
        %4982 = vst [vmem:[%s568 + $0x20] sm:$0xf] %v4726
        %4983 = vst [vmem:[%s568 + $0x24] sm:$0xf] %v4727
        %4984 = vst [vmem:[%s568 + $0x28] sm:$0xf] %v4728
        %4985 = vst [vmem:[%s568 + $0x2c] sm:$0xf] %v4729
        %4986 = vst [vmem:[%s568 + $0x30] sm:$0xf] %v4730
        %4987 = vst [vmem:[%s568 + $0x34] sm:$0xf] %v4731
        %4988 = vst [vmem:[%s568 + $0x38] sm:$0xf] %v4732
        %4989 = vst [vmem:[%s568 + $0x3c] sm:$0xf] %v4733
        %4990 = vst [vmem:[%s568 + $0x40] sm:$0xf] %v4734
        %4991 = vst [vmem:[%s568 + $0x44] sm:$0xf] %v4735
        %4992 = vst [vmem:[%s568 + $0x48] sm:$0xf] %v4736
        %4993 = vst [vmem:[%s568 + $0x4c] sm:$0xf] %v4737
        %4994 = vst [vmem:[%s568 + $0x50] sm:$0xf] %v4738
        %4995 = vst [vmem:[%s568 + $0x54] sm:$0xf] %v4739
        %4996 = vst [vmem:[%s568 + $0x58] sm:$0xf] %v4740
        %4997 = vst [vmem:[%s568 + $0x5c] sm:$0xf] %v4741
        %4998 = vst [vmem:[%s568 + $0x60] sm:$0xf] %v4742
        %4999 = vst [vmem:[%s568 + $0x64] sm:$0xf] %v4743
        %5000 = vst [vmem:[%s568 + $0x68] sm:$0xf] %v4744
        %5001 = vst [vmem:[%s568 + $0x6c] sm:$0xf] %v4745
        %5002 = vst [vmem:[%s568 + $0x70] sm:$0xf] %v4746
        %5003 = vst [vmem:[%s568 + $0x74] sm:$0xf] %v4747
        %5004 = vst [vmem:[%s568 + $0x78] sm:$0xf] %v4748
        %5005 = vst [vmem:[%s568 + $0x7c] sm:$0xf] %v4749
        %5006 = vst [vmem:[%s568 + $0x80] sm:$0xf] %v4750
        %5007 = vst [vmem:[%s568 + $0x84] sm:$0xf] %v4751
        %5008 = vst [vmem:[%s568 + $0x88] sm:$0xf] %v4752
        %5009 = vst [vmem:[%s568 + $0x8c] sm:$0xf] %v4753
        %5010 = vst [vmem:[%s568 + $0x90] sm:$0xf] %v4754
        %5011 = vst [vmem:[%s568 + $0x94] sm:$0xf] %v4755
        %5012 = vst [vmem:[%s568 + $0x98] sm:$0xf] %v4756
        %5013 = vst [vmem:[%s568 + $0x9c] sm:$0xf] %v4757
        %5014 = vst [vmem:[%s568 + $0xa0] sm:$0xf] %v4758
        %5015 = vst [vmem:[%s568 + $0xa4] sm:$0xf] %v4759
        %5016 = vst [vmem:[%s568 + $0xa8] sm:$0xf] %v4760
        %5017 = vst [vmem:[%s568 + $0xac] sm:$0xf] %v4761
        %5018 = vst [vmem:[%s568 + $0xb0] sm:$0xf] %v4762
        %5019 = vst [vmem:[%s568 + $0xb4] sm:$0xf] %v4763
        %5020 = vst [vmem:[%s568 + $0xb8] sm:$0xf] %v4764
        %5021 = vst [vmem:[%s568 + $0xbc] sm:$0xf] %v4765
        %5022 = vst [vmem:[%s568 + $0xc0] sm:$0xf] %v4766
        %5023 = vst [vmem:[%s568 + $0xc4] sm:$0xf] %v4767
        %5024 = vst [vmem:[%s568 + $0xc8] sm:$0xf] %v4768
        %5025 = vst [vmem:[%s568 + $0xcc] sm:$0xf] %v4769
        %5026 = vst [vmem:[%s568 + $0xd0] sm:$0xf] %v4770
        %5027 = vst [vmem:[%s568 + $0xd4] sm:$0xf] %v4771
        %5028 = vst [vmem:[%s568 + $0xd8] sm:$0xf] %v4772
        %5029 = vst [vmem:[%s568 + $0xdc] sm:$0xf] %v4773
        %5030 = vst [vmem:[%s568 + $0xe0] sm:$0xf] %v4774
        %5031 = vst [vmem:[%s568 + $0xe4] sm:$0xf] %v4775
        %5032 = vst [vmem:[%s568 + $0xe8] sm:$0xf] %v4776
        %5033 = vst [vmem:[%s568 + $0xec] sm:$0xf] %v4777
        %5034 = vst [vmem:[%s568 + $0xf0] sm:$0xf] %v4778
        %5035 = vst [vmem:[%s568 + $0xf4] sm:$0xf] %v4779
        %5036 = vst [vmem:[%s568 + $0xf8] sm:$0xf] %v4780
        %5037 = vst [vmem:[%s568 + $0xfc] sm:$0xf] %v4781
        %5038 = vst [vmem:[%s568 + $0x100] sm:$0xf] %v4782
        %5039 = vst [vmem:[%s568 + $0x104] sm:$0xf] %v4783
        %5040 = vst [vmem:[%s568 + $0x108] sm:$0xf] %v4784
        %5041 = vst [vmem:[%s568 + $0x10c] sm:$0xf] %v4785
        %5042 = vst [vmem:[%s568 + $0x110] sm:$0xf] %v4786
        %5043 = vst [vmem:[%s568 + $0x114] sm:$0xf] %v4787
        %5044 = vst [vmem:[%s568 + $0x118] sm:$0xf] %v4788
        %5045 = vst [vmem:[%s568 + $0x11c] sm:$0xf] %v4789
        %5046 = vst [vmem:[%s568 + $0x120] sm:$0xf] %v4790
        %5047 = vst [vmem:[%s568 + $0x124] sm:$0xf] %v4791
        %5048 = vst [vmem:[%s568 + $0x128] sm:$0xf] %v4792
        %5049 = vst [vmem:[%s568 + $0x12c] sm:$0xf] %v4793
        %5050 = vst [vmem:[%s568 + $0x130] sm:$0xf] %v4794
        %5051 = vst [vmem:[%s568 + $0x134] sm:$0xf] %v4795
        %5052 = vst [vmem:[%s568 + $0x138] sm:$0xf] %v4796
        %5053 = vst [vmem:[%s568 + $0x13c] sm:$0xf] %v4797
        %5054 = vst [vmem:[%s568 + $0x140] sm:$0xf] %v4798
        %5055 = vst [vmem:[%s568 + $0x144] sm:$0xf] %v4799
        %5056 = vst [vmem:[%s568 + $0x148] sm:$0xf] %v4800
        %5057 = vst [vmem:[%s568 + $0x14c] sm:$0xf] %v4801
        %5058 = vst [vmem:[%s568 + $0x150] sm:$0xf] %v4802
        %5059 = vst [vmem:[%s568 + $0x154] sm:$0xf] %v4803
        %5060 = vst [vmem:[%s568 + $0x158] sm:$0xf] %v4804
        %5061 = vst [vmem:[%s568 + $0x15c] sm:$0xf] %v4805
        %5062 = vst [vmem:[%s568 + $0x160] sm:$0xf] %v4806
        %5063 = vst [vmem:[%s568 + $0x164] sm:$0xf] %v4807
        %5064 = vst [vmem:[%s568 + $0x168] sm:$0xf] %v4808
        %5065 = vst [vmem:[%s568 + $0x16c] sm:$0xf] %v4809
        %5066 = vst [vmem:[%s568 + $0x170] sm:$0xf] %v4810
        %5067 = vst [vmem:[%s568 + $0x174] sm:$0xf] %v4811
        %5068 = vst [vmem:[%s568 + $0x178] sm:$0xf] %v4812
        %5069 = vst [vmem:[%s568 + $0x17c] sm:$0xf] %v4813
        %5070 = vst [vmem:[%s568 + $0x180] sm:$0xf] %v4814
        %5071 = vst [vmem:[%s568 + $0x184] sm:$0xf] %v4815
        %5072 = vst [vmem:[%s568 + $0x188] sm:$0xf] %v4816
        %5073 = vst [vmem:[%s568 + $0x18c] sm:$0xf] %v4817
        %5074 = vst [vmem:[%s568 + $0x190] sm:$0xf] %v4818
        %5075 = vst [vmem:[%s568 + $0x194] sm:$0xf] %v4819
        %5076 = vst [vmem:[%s568 + $0x198] sm:$0xf] %v4820
        %5077 = vst [vmem:[%s568 + $0x19c] sm:$0xf] %v4821
        %5078 = vst [vmem:[%s568 + $0x1a0] sm:$0xf] %v4822
        %5079 = vst [vmem:[%s568 + $0x1a4] sm:$0xf] %v4823
        %5080 = vst [vmem:[%s568 + $0x1a8] sm:$0xf] %v4824
        %5081 = vst [vmem:[%s568 + $0x1ac] sm:$0xf] %v4825
        %5082 = vst [vmem:[%s568 + $0x1b0] sm:$0xf] %v4826
        %5083 = vst [vmem:[%s568 + $0x1b4] sm:$0xf] %v4827
        %5084 = vst [vmem:[%s568 + $0x1b8] sm:$0xf] %v4828
        %5085 = vst [vmem:[%s568 + $0x1bc] sm:$0xf] %v4829
        %5086 = vst [vmem:[%s568 + $0x1c0] sm:$0xf] %v4830
        %5087 = vst [vmem:[%s568 + $0x1c4] sm:$0xf] %v4831
        %5088 = vst [vmem:[%s568 + $0x1c8] sm:$0xf] %v4832
        %5089 = vst [vmem:[%s568 + $0x1cc] sm:$0xf] %v4833
        %5090 = vst [vmem:[%s568 + $0x1d0] sm:$0xf] %v4834
        %5091 = vst [vmem:[%s568 + $0x1d4] sm:$0xf] %v4835
        %5092 = vst [vmem:[%s568 + $0x1d8] sm:$0xf] %v4836
        %5093 = vst [vmem:[%s568 + $0x1dc] sm:$0xf] %v4837
        %5094 = vst [vmem:[%s568 + $0x1e0] sm:$0xf] %v4838
        %5095 = vst [vmem:[%s568 + $0x1e4] sm:$0xf] %v4839
        %5096 = vst [vmem:[%s568 + $0x1e8] sm:$0xf] %v4840
        %5097 = vst [vmem:[%s568 + $0x1ec] sm:$0xf] %v4841
        %5098 = vst [vmem:[%s568 + $0x1f0] sm:$0xf] %v4842
        %5099 = vst [vmem:[%s568 + $0x1f4] sm:$0xf] %v4843
        %5100 = vst [vmem:[%s568 + $0x1f8] sm:$0xf] %v4844
        %5101 = vst [vmem:[%s568 + $0x1fc] sm:$0xf] %v4845
        %v5102 = vpack.c.bf16 %v3947, %v3946
        %v5103 = vpack.c.bf16 %v3949, %v3948
        %v5104 = vpack.c.bf16 %v3951, %v3950
        %v5105 = vpack.c.bf16 %v3953, %v3952
        %v5106 = vpack.c.bf16 %v3955, %v3954
        %v5107 = vpack.c.bf16 %v3957, %v3956
        %v5108 = vpack.c.bf16 %v3959, %v3958
        %v5109 = vpack.c.bf16 %v3961, %v3960
        %v5110 = vpack.c.bf16 %v3963, %v3962
        %v5111 = vpack.c.bf16 %v3965, %v3964
        %v5112 = vpack.c.bf16 %v3967, %v3966
        %v5113 = vpack.c.bf16 %v3969, %v3968
        %v5114 = vpack.c.bf16 %v3971, %v3970
        %v5115 = vpack.c.bf16 %v3973, %v3972
        %v5116 = vpack.c.bf16 %v3975, %v3974
        %v5117 = vpack.c.bf16 %v3977, %v3976
        %v5118 = vpack.c.bf16 %v3979, %v3978
        %v5119 = vpack.c.bf16 %v3981, %v3980
        %v5120 = vpack.c.bf16 %v3983, %v3982
        %v5121 = vpack.c.bf16 %v3985, %v3984
        %v5122 = vpack.c.bf16 %v3987, %v3986
        %v5123 = vpack.c.bf16 %v3989, %v3988
        %v5124 = vpack.c.bf16 %v3991, %v3990
        %v5125 = vpack.c.bf16 %v3993, %v3992
        %v5126 = vpack.c.bf16 %v3995, %v3994
        %v5127 = vpack.c.bf16 %v3997, %v3996
        %v5128 = vpack.c.bf16 %v3999, %v3998
        %v5129 = vpack.c.bf16 %v4001, %v4000
        %v5130 = vpack.c.bf16 %v4003, %v4002
        %v5131 = vpack.c.bf16 %v4005, %v4004
        %v5132 = vpack.c.bf16 %v4007, %v4006
        %v5133 = vpack.c.bf16 %v4009, %v4008
        %v5134 = vpack.c.bf16 %v4011, %v4010
        %v5135 = vpack.c.bf16 %v4013, %v4012
        %v5136 = vpack.c.bf16 %v4015, %v4014
        %v5137 = vpack.c.bf16 %v4017, %v4016
        %v5138 = vpack.c.bf16 %v4019, %v4018
        %v5139 = vpack.c.bf16 %v4021, %v4020
        %v5140 = vpack.c.bf16 %v4023, %v4022
        %v5141 = vpack.c.bf16 %v4025, %v4024
        %v5142 = vpack.c.bf16 %v4027, %v4026
        %v5143 = vpack.c.bf16 %v4029, %v4028
        %v5144 = vpack.c.bf16 %v4031, %v4030
        %v5145 = vpack.c.bf16 %v4033, %v4032
        %v5146 = vpack.c.bf16 %v4035, %v4034
        %v5147 = vpack.c.bf16 %v4037, %v4036
        %v5148 = vpack.c.bf16 %v4039, %v4038
        %v5149 = vpack.c.bf16 %v4041, %v4040
        %v5150 = vpack.c.bf16 %v4043, %v4042
        %v5151 = vpack.c.bf16 %v4045, %v4044
        %v5152 = vpack.c.bf16 %v4047, %v4046
        %v5153 = vpack.c.bf16 %v4049, %v4048
        %v5154 = vpack.c.bf16 %v4051, %v4050
        %v5155 = vpack.c.bf16 %v4053, %v4052
        %v5156 = vpack.c.bf16 %v4055, %v4054
        %v5157 = vpack.c.bf16 %v4057, %v4056
        %v5158 = vpack.c.bf16 %v4059, %v4058
        %v5159 = vpack.c.bf16 %v4061, %v4060
        %v5160 = vpack.c.bf16 %v4063, %v4062
        %v5161 = vpack.c.bf16 %v4065, %v4064
        %v5162 = vpack.c.bf16 %v4067, %v4066
        %v5163 = vpack.c.bf16 %v4069, %v4068
        %v5164 = vpack.c.bf16 %v4071, %v4070
        %v5165 = vpack.c.bf16 %v4073, %v4072
        %v5230 = vunpack.c.l.b16 %v5102
        %v5231 = vunpack.c.h.b16 %v5102
        %v5232 = vunpack.c.l.b16 %v5103
        %v5233 = vunpack.c.h.b16 %v5103
        %v5234 = vunpack.c.l.b16 %v5104
        %v5235 = vunpack.c.h.b16 %v5104
        %v5236 = vunpack.c.l.b16 %v5105
        %v5237 = vunpack.c.h.b16 %v5105
        %v5238 = vunpack.c.l.b16 %v5106
        %v5239 = vunpack.c.h.b16 %v5106
        %v5240 = vunpack.c.l.b16 %v5107
        %v5241 = vunpack.c.h.b16 %v5107
        %v5242 = vunpack.c.l.b16 %v5108
        %v5243 = vunpack.c.h.b16 %v5108
        %v5244 = vunpack.c.l.b16 %v5109
        %v5245 = vunpack.c.h.b16 %v5109
        %v5246 = vunpack.c.l.b16 %v5110
        %v5247 = vunpack.c.h.b16 %v5110
        %v5248 = vunpack.c.l.b16 %v5111
        %v5249 = vunpack.c.h.b16 %v5111
        %v5250 = vunpack.c.l.b16 %v5112
        %v5251 = vunpack.c.h.b16 %v5112
        %v5252 = vunpack.c.l.b16 %v5113
        %v5253 = vunpack.c.h.b16 %v5113
        %v5254 = vunpack.c.l.b16 %v5114
        %v5255 = vunpack.c.h.b16 %v5114
        %v5256 = vunpack.c.l.b16 %v5115
        %v5257 = vunpack.c.h.b16 %v5115
        %v5258 = vunpack.c.l.b16 %v5116
        %v5259 = vunpack.c.h.b16 %v5116
        %v5260 = vunpack.c.l.b16 %v5117
        %v5261 = vunpack.c.h.b16 %v5117
        %v5262 = vunpack.c.l.b16 %v5118
        %v5263 = vunpack.c.h.b16 %v5118
        %v5264 = vunpack.c.l.b16 %v5119
        %v5265 = vunpack.c.h.b16 %v5119
        %v5266 = vunpack.c.l.b16 %v5120
        %v5267 = vunpack.c.h.b16 %v5120
        %v5268 = vunpack.c.l.b16 %v5121
        %v5269 = vunpack.c.h.b16 %v5121
        %v5270 = vunpack.c.l.b16 %v5122
        %v5271 = vunpack.c.h.b16 %v5122
        %v5272 = vunpack.c.l.b16 %v5123
        %v5273 = vunpack.c.h.b16 %v5123
        %v5274 = vunpack.c.l.b16 %v5124
        %v5275 = vunpack.c.h.b16 %v5124
        %v5276 = vunpack.c.l.b16 %v5125
        %v5277 = vunpack.c.h.b16 %v5125
        %v5278 = vunpack.c.l.b16 %v5126
        %v5279 = vunpack.c.h.b16 %v5126
        %v5280 = vunpack.c.l.b16 %v5127
        %v5281 = vunpack.c.h.b16 %v5127
        %v5282 = vunpack.c.l.b16 %v5128
        %v5283 = vunpack.c.h.b16 %v5128
        %v5284 = vunpack.c.l.b16 %v5129
        %v5285 = vunpack.c.h.b16 %v5129
        %v5286 = vunpack.c.l.b16 %v5130
        %v5287 = vunpack.c.h.b16 %v5130
        %v5288 = vunpack.c.l.b16 %v5131
        %v5289 = vunpack.c.h.b16 %v5131
        %v5290 = vunpack.c.l.b16 %v5132
        %v5291 = vunpack.c.h.b16 %v5132
        %v5292 = vunpack.c.l.b16 %v5133
        %v5293 = vunpack.c.h.b16 %v5133
        %v5294 = vunpack.c.l.b16 %v5134
        %v5295 = vunpack.c.h.b16 %v5134
        %v5296 = vunpack.c.l.b16 %v5135
        %v5297 = vunpack.c.h.b16 %v5135
        %v5298 = vunpack.c.l.b16 %v5136
        %v5299 = vunpack.c.h.b16 %v5136
        %v5300 = vunpack.c.l.b16 %v5137
        %v5301 = vunpack.c.h.b16 %v5137
        %v5302 = vunpack.c.l.b16 %v5138
        %v5303 = vunpack.c.h.b16 %v5138
        %v5304 = vunpack.c.l.b16 %v5139
        %v5305 = vunpack.c.h.b16 %v5139
        %v5306 = vunpack.c.l.b16 %v5140
        %v5307 = vunpack.c.h.b16 %v5140
        %v5308 = vunpack.c.l.b16 %v5141
        %v5309 = vunpack.c.h.b16 %v5141
        %v5310 = vunpack.c.l.b16 %v5142
        %v5311 = vunpack.c.h.b16 %v5142
        %v5312 = vunpack.c.l.b16 %v5143
        %v5313 = vunpack.c.h.b16 %v5143
        %v5314 = vunpack.c.l.b16 %v5144
        %v5315 = vunpack.c.h.b16 %v5144
        %v5316 = vunpack.c.l.b16 %v5145
        %v5317 = vunpack.c.h.b16 %v5145
        %v5318 = vunpack.c.l.b16 %v5146
        %v5319 = vunpack.c.h.b16 %v5146
        %v5320 = vunpack.c.l.b16 %v5147
        %v5321 = vunpack.c.h.b16 %v5147
        %v5322 = vunpack.c.l.b16 %v5148
        %v5323 = vunpack.c.h.b16 %v5148
        %v5324 = vunpack.c.l.b16 %v5149
        %v5325 = vunpack.c.h.b16 %v5149
        %v5326 = vunpack.c.l.b16 %v5150
        %v5327 = vunpack.c.h.b16 %v5150
        %v5328 = vunpack.c.l.b16 %v5151
        %v5329 = vunpack.c.h.b16 %v5151
        %v5330 = vunpack.c.l.b16 %v5152
        %v5331 = vunpack.c.h.b16 %v5152
        %v5332 = vunpack.c.l.b16 %v5153
        %v5333 = vunpack.c.h.b16 %v5153
        %v5334 = vunpack.c.l.b16 %v5154
        %v5335 = vunpack.c.h.b16 %v5154
        %v5336 = vunpack.c.l.b16 %v5155
        %v5337 = vunpack.c.h.b16 %v5155
        %v5338 = vunpack.c.l.b16 %v5156
        %v5339 = vunpack.c.h.b16 %v5156
        %v5340 = vunpack.c.l.b16 %v5157
        %v5341 = vunpack.c.h.b16 %v5157
        %v5342 = vunpack.c.l.b16 %v5158
        %v5343 = vunpack.c.h.b16 %v5158
        %v5344 = vunpack.c.l.b16 %v5159
        %v5345 = vunpack.c.h.b16 %v5159
        %v5346 = vunpack.c.l.b16 %v5160
        %v5347 = vunpack.c.h.b16 %v5160
        %v5348 = vunpack.c.l.b16 %v5161
        %v5349 = vunpack.c.h.b16 %v5161
        %v5350 = vunpack.c.l.b16 %v5162
        %v5351 = vunpack.c.h.b16 %v5162
        %v5352 = vunpack.c.l.b16 %v5163
        %v5353 = vunpack.c.h.b16 %v5163
        %v5354 = vunpack.c.l.b16 %v5164
        %v5355 = vunpack.c.h.b16 %v5164
        %v5356 = vunpack.c.l.b16 %v5165
        %v5357 = vunpack.c.h.b16 %v5165
        %v5358 = vpack.c.b16 %v5230, %v5230
        %v5359 = vpack.c.b16 %v5231, %v5231
        %v5360 = vpack.c.b16 %v5232, %v5232
        %v5361 = vpack.c.b16 %v5233, %v5233
        %v5362 = vpack.c.b16 %v5234, %v5234
        %v5363 = vpack.c.b16 %v5235, %v5235
        %v5364 = vpack.c.b16 %v5236, %v5236
        %v5365 = vpack.c.b16 %v5237, %v5237
        %v5366 = vpack.c.b16 %v5238, %v5238
        %v5367 = vpack.c.b16 %v5239, %v5239
        %v5368 = vpack.c.b16 %v5240, %v5240
        %v5369 = vpack.c.b16 %v5241, %v5241
        %v5370 = vpack.c.b16 %v5242, %v5242
        %v5371 = vpack.c.b16 %v5243, %v5243
        %v5372 = vpack.c.b16 %v5244, %v5244
        %v5373 = vpack.c.b16 %v5245, %v5245
        %v5374 = vpack.c.b16 %v5246, %v5246
        %v5375 = vpack.c.b16 %v5247, %v5247
        %v5376 = vpack.c.b16 %v5248, %v5248
        %v5377 = vpack.c.b16 %v5249, %v5249
        %v5378 = vpack.c.b16 %v5250, %v5250
        %v5379 = vpack.c.b16 %v5251, %v5251
        %v5380 = vpack.c.b16 %v5252, %v5252
        %v5381 = vpack.c.b16 %v5253, %v5253
        %v5382 = vpack.c.b16 %v5254, %v5254
        %v5383 = vpack.c.b16 %v5255, %v5255
        %v5384 = vpack.c.b16 %v5256, %v5256
        %v5385 = vpack.c.b16 %v5257, %v5257
        %v5386 = vpack.c.b16 %v5258, %v5258
        %v5387 = vpack.c.b16 %v5259, %v5259
        %v5388 = vpack.c.b16 %v5260, %v5260
        %v5389 = vpack.c.b16 %v5261, %v5261
        %v5390 = vpack.c.b16 %v5262, %v5262
        %v5391 = vpack.c.b16 %v5263, %v5263
        %v5392 = vpack.c.b16 %v5264, %v5264
        %v5393 = vpack.c.b16 %v5265, %v5265
        %v5394 = vpack.c.b16 %v5266, %v5266
        %v5395 = vpack.c.b16 %v5267, %v5267
        %v5396 = vpack.c.b16 %v5268, %v5268
        %v5397 = vpack.c.b16 %v5269, %v5269
        %v5398 = vpack.c.b16 %v5270, %v5270
        %v5399 = vpack.c.b16 %v5271, %v5271
        %v5400 = vpack.c.b16 %v5272, %v5272
        %v5401 = vpack.c.b16 %v5273, %v5273
        %v5402 = vpack.c.b16 %v5274, %v5274
        %v5403 = vpack.c.b16 %v5275, %v5275
        %v5404 = vpack.c.b16 %v5276, %v5276
        %v5405 = vpack.c.b16 %v5277, %v5277
        %v5406 = vpack.c.b16 %v5278, %v5278
        %v5407 = vpack.c.b16 %v5279, %v5279
        %v5408 = vpack.c.b16 %v5280, %v5280
        %v5409 = vpack.c.b16 %v5281, %v5281
        %v5410 = vpack.c.b16 %v5282, %v5282
        %v5411 = vpack.c.b16 %v5283, %v5283
        %v5412 = vpack.c.b16 %v5284, %v5284
        %v5413 = vpack.c.b16 %v5285, %v5285
        %v5414 = vpack.c.b16 %v5286, %v5286
        %v5415 = vpack.c.b16 %v5287, %v5287
        %v5416 = vpack.c.b16 %v5288, %v5288
        %v5417 = vpack.c.b16 %v5289, %v5289
        %v5418 = vpack.c.b16 %v5290, %v5290
        %v5419 = vpack.c.b16 %v5291, %v5291
        %v5420 = vpack.c.b16 %v5292, %v5292
        %v5421 = vpack.c.b16 %v5293, %v5293
        %v5422 = vpack.c.b16 %v5294, %v5294
        %v5423 = vpack.c.b16 %v5295, %v5295
        %v5424 = vpack.c.b16 %v5296, %v5296
        %v5425 = vpack.c.b16 %v5297, %v5297
        %v5426 = vpack.c.b16 %v5298, %v5298
        %v5427 = vpack.c.b16 %v5299, %v5299
        %v5428 = vpack.c.b16 %v5300, %v5300
        %v5429 = vpack.c.b16 %v5301, %v5301
        %v5430 = vpack.c.b16 %v5302, %v5302
        %v5431 = vpack.c.b16 %v5303, %v5303
        %v5432 = vpack.c.b16 %v5304, %v5304
        %v5433 = vpack.c.b16 %v5305, %v5305
        %v5434 = vpack.c.b16 %v5306, %v5306
        %v5435 = vpack.c.b16 %v5307, %v5307
        %v5436 = vpack.c.b16 %v5308, %v5308
        %v5437 = vpack.c.b16 %v5309, %v5309
        %v5438 = vpack.c.b16 %v5310, %v5310
        %v5439 = vpack.c.b16 %v5311, %v5311
        %v5440 = vpack.c.b16 %v5312, %v5312
        %v5441 = vpack.c.b16 %v5313, %v5313
        %v5442 = vpack.c.b16 %v5314, %v5314
        %v5443 = vpack.c.b16 %v5315, %v5315
        %v5444 = vpack.c.b16 %v5316, %v5316
        %v5445 = vpack.c.b16 %v5317, %v5317
        %v5446 = vpack.c.b16 %v5318, %v5318
        %v5447 = vpack.c.b16 %v5319, %v5319
        %v5448 = vpack.c.b16 %v5320, %v5320
        %v5449 = vpack.c.b16 %v5321, %v5321
        %v5450 = vpack.c.b16 %v5322, %v5322
        %v5451 = vpack.c.b16 %v5323, %v5323
        %v5452 = vpack.c.b16 %v5324, %v5324
        %v5453 = vpack.c.b16 %v5325, %v5325
        %v5454 = vpack.c.b16 %v5326, %v5326
        %v5455 = vpack.c.b16 %v5327, %v5327
        %v5456 = vpack.c.b16 %v5328, %v5328
        %v5457 = vpack.c.b16 %v5329, %v5329
        %v5458 = vpack.c.b16 %v5330, %v5330
        %v5459 = vpack.c.b16 %v5331, %v5331
        %v5460 = vpack.c.b16 %v5332, %v5332
        %v5461 = vpack.c.b16 %v5333, %v5333
        %v5462 = vpack.c.b16 %v5334, %v5334
        %v5463 = vpack.c.b16 %v5335, %v5335
        %v5464 = vpack.c.b16 %v5336, %v5336
        %v5465 = vpack.c.b16 %v5337, %v5337
        %v5466 = vpack.c.b16 %v5338, %v5338
        %v5467 = vpack.c.b16 %v5339, %v5339
        %v5468 = vpack.c.b16 %v5340, %v5340
        %v5469 = vpack.c.b16 %v5341, %v5341
        %v5470 = vpack.c.b16 %v5342, %v5342
        %v5471 = vpack.c.b16 %v5343, %v5343
        %v5472 = vpack.c.b16 %v5344, %v5344
        %v5473 = vpack.c.b16 %v5345, %v5345
        %v5474 = vpack.c.b16 %v5346, %v5346
        %v5475 = vpack.c.b16 %v5347, %v5347
        %v5476 = vpack.c.b16 %v5348, %v5348
        %v5477 = vpack.c.b16 %v5349, %v5349
        %v5478 = vpack.c.b16 %v5350, %v5350
        %v5479 = vpack.c.b16 %v5351, %v5351
        %v5480 = vpack.c.b16 %v5352, %v5352
        %v5481 = vpack.c.b16 %v5353, %v5353
        %v5482 = vpack.c.b16 %v5354, %v5354
        %v5483 = vpack.c.b16 %v5355, %v5355
        %v5484 = vpack.c.b16 %v5356, %v5356
        %v5485 = vpack.c.b16 %v5357, %v5357
        %5614 = vst [vmem:[%s575] sm:$0xf] %v5358
        %5615 = vst [vmem:[%s575 + $0x4] sm:$0xf] %v5359
        %5616 = vst [vmem:[%s575 + $0x8] sm:$0xf] %v5360
        %5617 = vst [vmem:[%s575 + $0xc] sm:$0xf] %v5361
        %5618 = vst [vmem:[%s575 + $0x10] sm:$0xf] %v5362
        %5619 = vst [vmem:[%s575 + $0x14] sm:$0xf] %v5363
        %5620 = vst [vmem:[%s575 + $0x18] sm:$0xf] %v5364
        %5621 = vst [vmem:[%s575 + $0x1c] sm:$0xf] %v5365
        %5622 = vst [vmem:[%s575 + $0x20] sm:$0xf] %v5366
        %5623 = vst [vmem:[%s575 + $0x24] sm:$0xf] %v5367
        %5624 = vst [vmem:[%s575 + $0x28] sm:$0xf] %v5368
        %5625 = vst [vmem:[%s575 + $0x2c] sm:$0xf] %v5369
        %5626 = vst [vmem:[%s575 + $0x30] sm:$0xf] %v5370
        %5627 = vst [vmem:[%s575 + $0x34] sm:$0xf] %v5371
        %5628 = vst [vmem:[%s575 + $0x38] sm:$0xf] %v5372
        %5629 = vst [vmem:[%s575 + $0x3c] sm:$0xf] %v5373
        %5630 = vst [vmem:[%s575 + $0x40] sm:$0xf] %v5374
        %5631 = vst [vmem:[%s575 + $0x44] sm:$0xf] %v5375
        %5632 = vst [vmem:[%s575 + $0x48] sm:$0xf] %v5376
        %5633 = vst [vmem:[%s575 + $0x4c] sm:$0xf] %v5377
        %5634 = vst [vmem:[%s575 + $0x50] sm:$0xf] %v5378
        %5635 = vst [vmem:[%s575 + $0x54] sm:$0xf] %v5379
        %5636 = vst [vmem:[%s575 + $0x58] sm:$0xf] %v5380
        %5637 = vst [vmem:[%s575 + $0x5c] sm:$0xf] %v5381
        %5638 = vst [vmem:[%s575 + $0x60] sm:$0xf] %v5382
        %5639 = vst [vmem:[%s575 + $0x64] sm:$0xf] %v5383
        %5640 = vst [vmem:[%s575 + $0x68] sm:$0xf] %v5384
        %5641 = vst [vmem:[%s575 + $0x6c] sm:$0xf] %v5385
        %5642 = vst [vmem:[%s575 + $0x70] sm:$0xf] %v5386
        %5643 = vst [vmem:[%s575 + $0x74] sm:$0xf] %v5387
        %5644 = vst [vmem:[%s575 + $0x78] sm:$0xf] %v5388
        %5645 = vst [vmem:[%s575 + $0x7c] sm:$0xf] %v5389
        %5646 = vst [vmem:[%s575 + $0x80] sm:$0xf] %v5390
        %5647 = vst [vmem:[%s575 + $0x84] sm:$0xf] %v5391
        %5648 = vst [vmem:[%s575 + $0x88] sm:$0xf] %v5392
        %5649 = vst [vmem:[%s575 + $0x8c] sm:$0xf] %v5393
        %5650 = vst [vmem:[%s575 + $0x90] sm:$0xf] %v5394
        %5651 = vst [vmem:[%s575 + $0x94] sm:$0xf] %v5395
        %5652 = vst [vmem:[%s575 + $0x98] sm:$0xf] %v5396
        %5653 = vst [vmem:[%s575 + $0x9c] sm:$0xf] %v5397
        %5654 = vst [vmem:[%s575 + $0xa0] sm:$0xf] %v5398
        %5655 = vst [vmem:[%s575 + $0xa4] sm:$0xf] %v5399
        %5656 = vst [vmem:[%s575 + $0xa8] sm:$0xf] %v5400
        %5657 = vst [vmem:[%s575 + $0xac] sm:$0xf] %v5401
        %5658 = vst [vmem:[%s575 + $0xb0] sm:$0xf] %v5402
        %5659 = vst [vmem:[%s575 + $0xb4] sm:$0xf] %v5403
        %5660 = vst [vmem:[%s575 + $0xb8] sm:$0xf] %v5404
        %5661 = vst [vmem:[%s575 + $0xbc] sm:$0xf] %v5405
        %5662 = vst [vmem:[%s575 + $0xc0] sm:$0xf] %v5406
        %5663 = vst [vmem:[%s575 + $0xc4] sm:$0xf] %v5407
        %5664 = vst [vmem:[%s575 + $0xc8] sm:$0xf] %v5408
        %5665 = vst [vmem:[%s575 + $0xcc] sm:$0xf] %v5409
        %5666 = vst [vmem:[%s575 + $0xd0] sm:$0xf] %v5410
        %5667 = vst [vmem:[%s575 + $0xd4] sm:$0xf] %v5411
        %5668 = vst [vmem:[%s575 + $0xd8] sm:$0xf] %v5412
        %5669 = vst [vmem:[%s575 + $0xdc] sm:$0xf] %v5413
        %5670 = vst [vmem:[%s575 + $0xe0] sm:$0xf] %v5414
        %5671 = vst [vmem:[%s575 + $0xe4] sm:$0xf] %v5415
        %5672 = vst [vmem:[%s575 + $0xe8] sm:$0xf] %v5416
        %5673 = vst [vmem:[%s575 + $0xec] sm:$0xf] %v5417
        %5674 = vst [vmem:[%s575 + $0xf0] sm:$0xf] %v5418
        %5675 = vst [vmem:[%s575 + $0xf4] sm:$0xf] %v5419
        %5676 = vst [vmem:[%s575 + $0xf8] sm:$0xf] %v5420
        %5677 = vst [vmem:[%s575 + $0xfc] sm:$0xf] %v5421
        %5678 = vst [vmem:[%s575 + $0x100] sm:$0xf] %v5422
        %5679 = vst [vmem:[%s575 + $0x104] sm:$0xf] %v5423
        %5680 = vst [vmem:[%s575 + $0x108] sm:$0xf] %v5424
        %5681 = vst [vmem:[%s575 + $0x10c] sm:$0xf] %v5425
        %5682 = vst [vmem:[%s575 + $0x110] sm:$0xf] %v5426
        %5683 = vst [vmem:[%s575 + $0x114] sm:$0xf] %v5427
        %5684 = vst [vmem:[%s575 + $0x118] sm:$0xf] %v5428
        %5685 = vst [vmem:[%s575 + $0x11c] sm:$0xf] %v5429
        %5686 = vst [vmem:[%s575 + $0x120] sm:$0xf] %v5430
        %5687 = vst [vmem:[%s575 + $0x124] sm:$0xf] %v5431
        %5688 = vst [vmem:[%s575 + $0x128] sm:$0xf] %v5432
        %5689 = vst [vmem:[%s575 + $0x12c] sm:$0xf] %v5433
        %5690 = vst [vmem:[%s575 + $0x130] sm:$0xf] %v5434
        %5691 = vst [vmem:[%s575 + $0x134] sm:$0xf] %v5435
        %5692 = vst [vmem:[%s575 + $0x138] sm:$0xf] %v5436
        %5693 = vst [vmem:[%s575 + $0x13c] sm:$0xf] %v5437
        %5694 = vst [vmem:[%s575 + $0x140] sm:$0xf] %v5438
        %5695 = vst [vmem:[%s575 + $0x144] sm:$0xf] %v5439
        %5696 = vst [vmem:[%s575 + $0x148] sm:$0xf] %v5440
        %5697 = vst [vmem:[%s575 + $0x14c] sm:$0xf] %v5441
        %5698 = vst [vmem:[%s575 + $0x150] sm:$0xf] %v5442
        %5699 = vst [vmem:[%s575 + $0x154] sm:$0xf] %v5443
        %5700 = vst [vmem:[%s575 + $0x158] sm:$0xf] %v5444
        %5701 = vst [vmem:[%s575 + $0x15c] sm:$0xf] %v5445
        %5702 = vst [vmem:[%s575 + $0x160] sm:$0xf] %v5446
        %5703 = vst [vmem:[%s575 + $0x164] sm:$0xf] %v5447
        %5704 = vst [vmem:[%s575 + $0x168] sm:$0xf] %v5448
        %5705 = vst [vmem:[%s575 + $0x16c] sm:$0xf] %v5449
        %5706 = vst [vmem:[%s575 + $0x170] sm:$0xf] %v5450
        %5707 = vst [vmem:[%s575 + $0x174] sm:$0xf] %v5451
        %5708 = vst [vmem:[%s575 + $0x178] sm:$0xf] %v5452
        %5709 = vst [vmem:[%s575 + $0x17c] sm:$0xf] %v5453
        %5710 = vst [vmem:[%s575 + $0x180] sm:$0xf] %v5454
        %5711 = vst [vmem:[%s575 + $0x184] sm:$0xf] %v5455
        %5712 = vst [vmem:[%s575 + $0x188] sm:$0xf] %v5456
        %5713 = vst [vmem:[%s575 + $0x18c] sm:$0xf] %v5457
        %5714 = vst [vmem:[%s575 + $0x190] sm:$0xf] %v5458
        %5715 = vst [vmem:[%s575 + $0x194] sm:$0xf] %v5459
        %5716 = vst [vmem:[%s575 + $0x198] sm:$0xf] %v5460
        %5717 = vst [vmem:[%s575 + $0x19c] sm:$0xf] %v5461
        %5718 = vst [vmem:[%s575 + $0x1a0] sm:$0xf] %v5462
        %5719 = vst [vmem:[%s575 + $0x1a4] sm:$0xf] %v5463
        %5720 = vst [vmem:[%s575 + $0x1a8] sm:$0xf] %v5464
        %5721 = vst [vmem:[%s575 + $0x1ac] sm:$0xf] %v5465
        %5722 = vst [vmem:[%s575 + $0x1b0] sm:$0xf] %v5466
        %5723 = vst [vmem:[%s575 + $0x1b4] sm:$0xf] %v5467
        %5724 = vst [vmem:[%s575 + $0x1b8] sm:$0xf] %v5468
        %5725 = vst [vmem:[%s575 + $0x1bc] sm:$0xf] %v5469
        %5726 = vst [vmem:[%s575 + $0x1c0] sm:$0xf] %v5470
        %5727 = vst [vmem:[%s575 + $0x1c4] sm:$0xf] %v5471
        %5728 = vst [vmem:[%s575 + $0x1c8] sm:$0xf] %v5472
        %5729 = vst [vmem:[%s575 + $0x1cc] sm:$0xf] %v5473
        %5730 = vst [vmem:[%s575 + $0x1d0] sm:$0xf] %v5474
        %5731 = vst [vmem:[%s575 + $0x1d4] sm:$0xf] %v5475
        %5732 = vst [vmem:[%s575 + $0x1d8] sm:$0xf] %v5476
        %5733 = vst [vmem:[%s575 + $0x1dc] sm:$0xf] %v5477
        %5734 = vst [vmem:[%s575 + $0x1e0] sm:$0xf] %v5478
        %5735 = vst [vmem:[%s575 + $0x1e4] sm:$0xf] %v5479
        %5736 = vst [vmem:[%s575 + $0x1e8] sm:$0xf] %v5480
        %5737 = vst [vmem:[%s575 + $0x1ec] sm:$0xf] %v5481
        %5738 = vst [vmem:[%s575 + $0x1f0] sm:$0xf] %v5482
        %5739 = vst [vmem:[%s575 + $0x1f4] sm:$0xf] %v5483
        %5740 = vst [vmem:[%s575 + $0x1f8] sm:$0xf] %v5484
        %5741 = vst [vmem:[%s575 + $0x1fc] sm:$0xf] %v5485
        %s5742 = sand.u32 %s299, 1
        %s5743 = scalar_lea.sflag [#allocation6], %s5742
        %s5744 = sand.u32 %s299, 1
        %s5745 = smul.addr %s5744, 8
        %s5746 = scalar_lea.vmem [#allocation12], %s5745
        %s5747 = sand.u32 %s40, 1
        %s5748 = scalar_lea.sflag [#allocation14], %s5747
        %s5749 = sand.u32 %s325, 1
        %s5750 = smul.addr %s5749, 512
        %s5751 = scalar_lea.vmem [#allocation13], %s5750
        %s5752 = sand.u32 %s40, 1
        %s5753 = scalar_lea.sflag [#allocation14], %s5752
        %s5754 = sand.u32 %s351, 1
        %s5755 = smul.addr %s5754, 512
        %s5756 = scalar_lea.vmem [#allocation15], %s5755
        // Predicated region
        $region81: #{tpu_custom_call.1} parent=63 // pred_check
          %p5757 = pneg %p309
        $region82: #{tpu_custom_call.1} parent=63 // pred_check_branch
          %5759 = sbr.rel (%p5757) target = $region84
        $region83: #{tpu_custom_call.1} parent=63 // pred_region
          %s5761 = ssub.s32 128, 128
          %5762 = vsyncadd %s5743, %s5761
          %s5763 = smul.addr %s40, 128
          %s5764 = scalar_lea.hbm %s11, %s5763
          %s5766 = sshll.u32 %s5746, 4
          %s5767 = int_to_ptr.vmem [resolvable:$true] %s5766
          %5769 = dma.vmem_to_hbm [thread:$0]  %s5767, 128, %s5764, %s5743
        $region84: #{tpu_custom_call.1} parent=63 // pred_fallthru
          _
        // Predicated region
        $region85: #{tpu_custom_call.1} parent=63 // pred_check
          %p5770 = pneg %p335
        $region86: #{tpu_custom_call.1} parent=63 // pred_check_branch
          %5772 = sbr.rel (%p5770) target = $region88
        $region87: #{tpu_custom_call.1} parent=63 // pred_region
          %s5773 = smul.u32 8, %s40
          %s5775 = ssub.s32 8192, 8192
          %5776 = vsyncadd %s5748, %s5775
          %s5777 = smul.addr %s5773, 16
          %s5778 = smul.addr %s5777, 64
          %s5779 = scalar_lea.hbm %s12, %s5778
          %s5780 = sshll.u32 %s5751, 4
          %s5781 = int_to_ptr.vmem [resolvable:$true] %s5780
          %5786 = dma.vmem_to_hbm [thread:$0]  %s5781, 8192, %s5779, %s5748, 64, 64, 4
        $region88: #{tpu_custom_call.1} parent=63 // pred_fallthru
          _
        // Predicated region
        $region89: #{tpu_custom_call.1} parent=63 // pred_check
          %p5787 = pneg %p361
        $region90: #{tpu_custom_call.1} parent=63 // pred_check_branch
          %5789 = sbr.rel (%p5787) target = $region92
        $region91: #{tpu_custom_call.1} parent=63 // pred_region
          %s5790 = smul.u32 8, %s40
          %s5792 = ssub.s32 8192, 8192
          %5793 = vsyncadd %s5753, %s5792
          %s5794 = smul.addr %s5790, 16
          %s5795 = smul.addr %s5794, 64
          %s5796 = scalar_lea.hbm %s13, %s5795
          %s5797 = sshll.u32 %s5756, 4
          %s5798 = int_to_ptr.vmem [resolvable:$true] %s5797
          %5803 = dma.vmem_to_hbm [thread:$0]  %s5798, 8192, %s5796, %s5753, 64, 64, 4
        $region92: #{tpu_custom_call.1} parent=63 // pred_fallthru
          _
      $region64: #{tpu_custom_call.1} parent=5 // pred_fallthru
        _
      %p5804 = scmp.le.s32.totalorder 2, %s35
      // Predicated region
      $region93: #{tpu_custom_call.1} parent=5 // pred_check
        %p5805 = pneg %p5804
      $region94: #{tpu_custom_call.1} parent=5 // pred_check_branch
        %5807 = sbr.rel (%p5805) target = $region96
      $region95: #{tpu_custom_call.1} parent=5 // pred_region
        %s5808 = ssub.s32 %s35, 2
        // Predicated region
        $region97: #{tpu_custom_call.1} parent=95 // pred_check
          %p5809 = pneg %p315
        $region98: #{tpu_custom_call.1} parent=95 // pred_check_branch
          %5811 = sbr.rel (%p5809) target = $region100
        $region99: #{tpu_custom_call.1} parent=95 // pred_region
          %s5812 = sand.u32 %s300, 1
          %s5813 = scalar_lea.sflag [#allocation6], %s5812
          %s5814 = sand.u32 %s300, 1
          %s5815 = smul.addr %s5814, 8
          %s5816 = scalar_lea.vmem [#allocation12], %s5815
          %5817 = dma.done %s5813, 128
        $region100: #{tpu_custom_call.1} parent=95 // pred_fallthru
          _
        // Predicated region
        $region101: #{tpu_custom_call.1} parent=95 // pred_check
          %p5818 = pneg %p341
        $region102: #{tpu_custom_call.1} parent=95 // pred_check_branch
          %5820 = sbr.rel (%p5818) target = $region104
        $region103: #{tpu_custom_call.1} parent=95 // pred_region
          %s5821 = sand.u32 %s41, 1
          %s5822 = scalar_lea.sflag [#allocation14], %s5821
          %s5823 = sand.u32 %s326, 1
          %s5824 = smul.addr %s5823, 512
          %s5825 = scalar_lea.vmem [#allocation13], %s5824
          %5826 = dma.done %s5822, 8192
        $region104: #{tpu_custom_call.1} parent=95 // pred_fallthru
          _
        // Predicated region
        $region105: #{tpu_custom_call.1} parent=95 // pred_check
          %p5827 = pneg %p367
        $region106: #{tpu_custom_call.1} parent=95 // pred_check_branch
          %5829 = sbr.rel (%p5827) target = $region108
        $region107: #{tpu_custom_call.1} parent=95 // pred_region
          %s5830 = sand.u32 %s41, 1
          %s5831 = scalar_lea.sflag [#allocation14], %s5830
          %s5832 = sand.u32 %s352, 1
          %s5833 = smul.addr %s5832, 512
          %s5834 = scalar_lea.vmem [#allocation15], %s5833
          %5835 = dma.done %s5831, 8192
        $region108: #{tpu_custom_call.1} parent=95 // pred_fallthru
          _
      $region96: #{tpu_custom_call.1} parent=5 // pred_fallthru
        _
    $region6: #{tpu_custom_call.1} parent=1 // loop_footer
      %s39 = sadd.s32 1, %s35
    $region7: #{tpu_custom_call.1} parent=1 // loop_footer_branch
      %34 = sbr.rel target = $region3
    $region8: #{tpu_custom_call.1} parent=1 // loop_exit
      _
    %5836 = vsyncpa [#allocation5], 1
    %s5837 = scalar_lea.sflag [#allocation5], 1
    %5838 = vsyncpa %s5837, 1
    %5839 = vsyncpa [#allocation8], 1
    %s5840 = scalar_lea.sflag [#allocation8], 1
    %5841 = vsyncpa %s5840, 1
    %5842 = vsyncpa [#allocation11], 1
    %5843 = vsyncpa [#allocation6], 1
    %s5844 = scalar_lea.sflag [#allocation6], 1
    %5845 = vsyncpa %s5844, 1
    %5846 = vsyncpa [#allocation14], 1
    %s5847 = scalar_lea.sflag [#allocation14], 1
    %5848 = vsyncpa %s5847, 1

</llo_original>
